<compile_context>
chip_gen: v5e
topology: v5e:2x2
jax: 0.10.0
libtpu: 0.0.40
codegen_flags: <defaults>
</compile_context>

<pallas_src>
import functools

import jax
import jax.numpy as jnp
from jax import lax
from jax.experimental import pallas as pl
from jax.experimental.pallas import tpu as pltpu


def _lrelu(x, slope=0.1):
    return jnp.where(x > 0, x, slope * x)


def res_layer_kernel(x_ref, w1_ref, s1_ref, b1_ref, w2_ref, s2_ref, b2_ref,
                     o_ref, y1_pad_ref, *, H, W, k):
    """One grid step: k images of (H, W) with Cin channels.

    x_ref:      (k*H*W, Cin)  f32    input slab (channels minor)
    w1_ref:     (Cin, Cmid)   bf16   1x1 conv weight
    w2_ref:     (9, Cmid, Cin) bf16  3x3 conv weight, tap-major (ky*3+kx)
    s*/b*_ref:  (1, C)        f32    folded BN scale / bias
    o_ref:      (k*H*W, Cin)  f32    output slab
    y1_pad_ref: (k, H+2, W+2, Cmid) bf16 scratch (zero-bordered y1)
    """
    Cin, Cmid = w1_ref.shape
    HW = H * W
    rows = k * HW

    # Zero only the 1-wide border of the padded scratch; the interior is fully
    # overwritten below.  Done every grid step (scratch persists across steps and with
    # 'parallel' sharding a core may never execute program_id == 0).  bf16 -> half the
    # store bytes of the previous f32 version.
    zrow = jnp.zeros((k, 1, W + 2, Cmid), jnp.bfloat16)
    zcol = jnp.zeros((k, H + 2, 1, Cmid), jnp.bfloat16)
    y1_pad_ref[:, 0:1, :, :] = zrow
    y1_pad_ref[:, H + 1:H + 2, :, :] = zrow
    y1_pad_ref[:, :, 0:1, :] = zcol
    y1_pad_ref[:, :, W + 1:W + 2, :] = zcol

    x = x_ref[...]                                            # (rows, Cin) f32

    # ---- layer1: 1x1 conv == channel matmul (bf16 MXU operands, f32 accumulate)
    #      + folded BN + LeakyReLU(0.1) in f32 on the VPU.
    y1 = jnp.dot(x.astype(jnp.bfloat16), w1_ref[...],
                 preferred_element_type=jnp.float32)          # (rows, Cmid)
    y1 = _lrelu(y1 * s1_ref[...] + b1_ref[...])

    # ---- scatter y1 (as bf16) into the interior of the zero-bordered scratch (pad=1).
    y1_pad_ref[:, 1:H + 1, 1:W + 1, :] = (
        y1.astype(jnp.bfloat16).reshape(k, H, W, Cmid))

    # ---- layer2: 3x3 conv as 9 accumulating MXU dots (no im2col slab, no col
    #      round-trip).  One W-shifted band is read per kx (only kx=1,2 need a
    #      sublane-offset relayout); ky slices are along a non-tiled dim -> free.
    # TODO(synk): if the kx=1,2 relayout loads show up in the bundle, generate the
    #             shifted bands with pltpu.roll on the (idle) XLU instead.
    acc = jnp.zeros((rows, Cin), jnp.float32)
    for kx in range(3):
        band = y1_pad_ref[:, :, kx:kx + W, :]                 # (k, H+2, W, Cmid) bf16
        for ky in range(3):
            patch = band[:, ky:ky + H, :, :].reshape(rows, Cmid)
            acc = acc + jnp.dot(patch, w2_ref[ky * 3 + kx],
                                preferred_element_type=jnp.float32)

    # ---- folded BN + LeakyReLU(0.1), residual add (f32), store.
    y2 = _lrelu(acc * s2_ref[...] + b2_ref[...])
    o_ref[...] = x + y2


def _pick_imgs_per_step(N, HW, target_rows=1024):
    """Pack several images per grid step at small spatial sizes (amortize step
    overhead, keep matmul M >= ~256)."""
    k = max(1, min(N, target_rows // max(HW, 1)))
    while N % k:
        k -= 1
    return k


def res_layer_pallas(x_nhwc, w1, s1, b1, w2_hwio, s2, b2, imgs_per_step=None):
    N, H, W, Cin = x_nhwc.shape
    Cmid = w1.shape[1]
    HW = H * W

    k = imgs_per_step if imgs_per_step is not None else _pick_imgs_per_step(N, HW)
    assert N % k == 0, (N, k)
    # Block sublane constraint flagged in review: second-to-last block dim must be a
    # multiple of 8 (or the full extent).
    assert (k * HW) % 8 == 0 or k * HW == N * HW, (k, HW)

    x2d = x_nhwc.reshape(N * HW, Cin)                         # channels-minor slab
    w1b = w1.astype(jnp.bfloat16)                             # (Cin, Cmid)
    w2b = w2_hwio.reshape(9, Cmid, Cin).astype(jnp.bfloat16)  # tap-major (ky*3+kx)
    s1 = s1.reshape(1, Cmid).astype(jnp.float32)
    b1 = b1.reshape(1, Cmid).astype(jnp.float32)
    s2 = s2.reshape(1, Cin).astype(jnp.float32)
    b2 = b2.reshape(1, Cin).astype(jnp.float32)

    kernel = functools.partial(res_layer_kernel, H=H, W=W, k=k)
    bcast = lambda a: pl.BlockSpec(a.shape, lambda n, nd=a.ndim: (0,) * nd)

    out2d = pl.pallas_call(
        kernel,
        out_shape=jax.ShapeDtypeStruct((N * HW, Cin), jnp.float32),
        grid=(N // k,),
        in_specs=[
            pl.BlockSpec((k * HW, Cin), lambda n: (n, 0)),    # k images per grid step
            bcast(w1b), bcast(s1), bcast(b1),
            bcast(w2b), bcast(s2), bcast(b2),
        ],
        out_specs=pl.BlockSpec((k * HW, Cin), lambda n: (n, 0)),
        scratch_shapes=[
            pltpu.VMEM((k, H + 2, W + 2, Cmid), jnp.bfloat16),  # zero-bordered y1 (bf16)
        ],
        compiler_params=pltpu.CompilerParams(
            dimension_semantics=("parallel",)),
    )(x2d, w1b, s1, b1, w2b, s2, b2)
    return out2d.reshape(N, H, W, Cin)


def fold_bn(gamma, beta, mean, var, eps=1e-5):
    scale = gamma / jnp.sqrt(var + eps)
    bias = beta - mean * scale
    return scale, bias


def ref_forward(x, w1_mat, s1, b1, w2_hwio, s2, b2):
    """Pure-JAX reference (NHWC), mirroring the kernel's bf16 MXU operands."""
    Cin = x.shape[-1]
    Cmid = w1_mat.shape[1]
    dn = ('NHWC', 'HWIO', 'NHWC')
    w1_hwio = w1_mat.reshape(1, 1, Cin, Cmid)
    y1 = lax.conv_general_dilated(
        x.astype(jnp.bfloat16), w1_hwio.astype(jnp.bfloat16), (1, 1), 'SAME',
        dimension_numbers=dn, preferred_element_type=jnp.float32)
    y1 = _lrelu(y1 * s1 + b1)
    y2 = lax.conv_general_dilated(
        y1.astype(jnp.bfloat16), w2_hwio.astype(jnp.bfloat16), (1, 1), 'SAME',
        dimension_numbers=dn, preferred_element_type=jnp.float32)
    y2 = _lrelu(y2 * s2 + b2)
    return x + y2


if __name__ == "__main__":
    key = jax.random.PRNGKey(0)
    N, H, W = 2, 16, 16
    Cin = 32                      # in_channels
    Cmid = Cin // 2               # mid_channels

    ks = jax.random.split(key, 11)
    x = jax.random.normal(ks[0], (N, H, W, Cin), jnp.float32)

    # layer1: 1x1 conv weight as (Cin, Cmid) matrix + BN params
    w1 = jax.random.normal(ks[1], (Cin, Cmid), jnp.float32) * 0.1
    g1 = 1.0 + 0.1 * jax.random.normal(ks[2], (Cmid,), jnp.float32)
    be1 = 0.1 * jax.random.normal(ks[3], (Cmid,), jnp.float32)
    m1 = 0.1 * jax.random.normal(ks[4], (Cmid,), jnp.float32)
    v1 = jnp.abs(jax.random.normal(ks[5], (Cmid,), jnp.float32)) + 0.5
    s1, b1 = fold_bn(g1, be1, m1, v1)

    # layer2: 3x3 conv weight in HWIO = (3, 3, Cmid, Cin) + BN params
    w2 = jax.random.normal(ks[6], (3, 3, Cmid, Cin), jnp.float32) * 0.1
    g2 = 1.0 + 0.1 * jax.random.normal(ks[7], (Cin,), jnp.float32)
    be2 = 0.1 * jax.random.normal(ks[8], (Cin,), jnp.float32)
    m2 = 0.1 * jax.random.normal(ks[9], (Cin,), jnp.float32)
    v2 = jnp.abs(jax.random.normal(ks[10], (Cin,), jnp.float32)) + 0.5
    s2, b2 = fold_bn(g2, be2, m2, v2)

    out = res_layer_pallas(x, w1, s1, b1, w2, s2, b2)
    out = jax.block_until_ready(out)

    ref = ref_forward(x, w1, s1, b1, w2, s2, b2)
    assert out.shape == (N, H, W, Cin)
    max_err = float(jnp.max(jnp.abs(out - ref)))
    assert jnp.allclose(out, ref, atol=2e-2, rtol=2e-2), max_err

    print("KERNEL_OK")
</pallas_src>

<mosaic_0001>
module attributes {stable_mosaic.version = 11 : i64} {
  func.func @res_layer_kernel(%arg0: i32, %arg1: memref<512x32xf32, #tpu.memory_space<vmem>>, %arg2: memref<32x16xbf16, #tpu.memory_space<vmem>>, %arg3: memref<1x16xf32, #tpu.memory_space<vmem>>, %arg4: memref<1x16xf32, #tpu.memory_space<vmem>>, %arg5: memref<9x16x32xbf16, #tpu.memory_space<vmem>>, %arg6: memref<1x32xf32, #tpu.memory_space<vmem>>, %arg7: memref<1x32xf32, #tpu.memory_space<vmem>>, %arg8: memref<512x32xf32, #tpu.memory_space<vmem>>, %arg9: memref<2x18x18x16xbf16, #tpu.memory_space<vmem>>) attributes {dimension_semantics = [#tpu.dimension_semantics<parallel>], iteration_bounds = array<i64: 1>, scalar_prefetch = 0 : i64, scratch_operands = 1 : i64, tpu.core_type = #tpu.core_type<tc>, window_params = [{transform_indices = @transform_0, window_bounds = array<i64: 512, 32>}, {pipeline_mode = #tpu.pipeline_mode<synchronous>, transform_indices = @transform_1, window_bounds = array<i64: 32, 16>}, {pipeline_mode = #tpu.pipeline_mode<synchronous>, transform_indices = @transform_2, window_bounds = array<i64: 1, 16>}, {pipeline_mode = #tpu.pipeline_mode<synchronous>, transform_indices = @transform_3, window_bounds = array<i64: 1, 16>}, {pipeline_mode = #tpu.pipeline_mode<synchronous>, transform_indices = @transform_4, window_bounds = array<i64: 9, 16, 32>}, {pipeline_mode = #tpu.pipeline_mode<synchronous>, transform_indices = @transform_5, window_bounds = array<i64: 1, 32>}, {pipeline_mode = #tpu.pipeline_mode<synchronous>, transform_indices = @transform_6, window_bounds = array<i64: 1, 32>}, {transform_indices = @transform_7, window_bounds = array<i64: 512, 32>}]} {
    %cst = arith.constant 0.000000e+00 : bf16
    %0 = vector.broadcast %cst : bf16 to vector<2x1x18x16xbf16>
    %cst_0 = arith.constant 0.000000e+00 : bf16
    %1 = vector.broadcast %cst_0 : bf16 to vector<2x18x1x16xbf16>
    %c0 = arith.constant 0 : index
    %c0_1 = arith.constant 0 : index
    %c0_2 = arith.constant 0 : index
    %c0_3 = arith.constant 0 : index
    %2 = vector.load %arg9[%c0, %c0_1, %c0_2, %c0_3] : memref<2x18x18x16xbf16, #tpu.memory_space<vmem>>, vector<2x1x18x16xbf16>
    tpu.vector_store %arg9[%c0, %c0_1, %c0_2, %c0_3], %0 {strides = array<i32>} : memref<2x18x18x16xbf16, #tpu.memory_space<vmem>>, vector<2x1x18x16xbf16>,
    %c0_4 = arith.constant 0 : index
    %c17 = arith.constant 17 : index
    %c0_5 = arith.constant 0 : index
    %c0_6 = arith.constant 0 : index
    %3 = vector.load %arg9[%c0_4, %c17, %c0_5, %c0_6] : memref<2x18x18x16xbf16, #tpu.memory_space<vmem>>, vector<2x1x18x16xbf16>
    tpu.vector_store %arg9[%c0_4, %c17, %c0_5, %c0_6], %0 {strides = array<i32>} : memref<2x18x18x16xbf16, #tpu.memory_space<vmem>>, vector<2x1x18x16xbf16>,
    %c0_7 = arith.constant 0 : index
    %c0_8 = arith.constant 0 : index
    %c0_9 = arith.constant 0 : index
    %c0_10 = arith.constant 0 : index
    %4 = vector.load %arg9[%c0_7, %c0_8, %c0_9, %c0_10] : memref<2x18x18x16xbf16, #tpu.memory_space<vmem>>, vector<2x18x1x16xbf16>
    tpu.vector_store %arg9[%c0_7, %c0_8, %c0_9, %c0_10], %1 {strides = array<i32>} : memref<2x18x18x16xbf16, #tpu.memory_space<vmem>>, vector<2x18x1x16xbf16>,
    %c0_11 = arith.constant 0 : index
    %c0_12 = arith.constant 0 : index
    %c17_13 = arith.constant 17 : index
    %c0_14 = arith.constant 0 : index
    %5 = vector.load %arg9[%c0_11, %c0_12, %c17_13, %c0_14] : memref<2x18x18x16xbf16, #tpu.memory_space<vmem>>, vector<2x18x1x16xbf16>
    tpu.vector_store %arg9[%c0_11, %c0_12, %c17_13, %c0_14], %1 {strides = array<i32>} : memref<2x18x18x16xbf16, #tpu.memory_space<vmem>>, vector<2x18x1x16xbf16>,
    %c0_15 = arith.constant 0 : index
    %c0_16 = arith.constant 0 : index
    %6 = vector.load %arg1[%c0_15, %c0_16] : memref<512x32xf32, #tpu.memory_space<vmem>>, vector<512x32xf32>
    %7 = arith.truncf %6 : vector<512x32xf32> to vector<512x32xbf16>
    %c0_17 = arith.constant 0 : index
    %c0_18 = arith.constant 0 : index
    %8 = vector.load %arg2[%c0_17, %c0_18] : memref<32x16xbf16, #tpu.memory_space<vmem>>, vector<32x16xbf16>
    %cst_19 = arith.constant dense<0.000000e+00> : vector<512x16xf32>
    %9 = tpu.matmul %7, %8, %cst_19 {dimension_numbers = #tpu.dot_dimension_numbers<[1], [0], [0], [1], [0, 0, 1, 1], [], []>} : vector<512x32xbf16>, vector<32x16xbf16>, vector<512x16xf32> -> vector<512x16xf32>
    %c0_20 = arith.constant 0 : index
    %c0_21 = arith.constant 0 : index
    %10 = vector.load %arg3[%c0_20, %c0_21] : memref<1x16xf32, #tpu.memory_space<vmem>>, vector<1x16xf32>
    %11 = vector.broadcast %10 : vector<1x16xf32> to vector<512x16xf32>
    %12 = arith.mulf %9, %11 : vector<512x16xf32>
    %c0_22 = arith.constant 0 : index
    %c0_23 = arith.constant 0 : index
    %13 = vector.load %arg4[%c0_22, %c0_23] : memref<1x16xf32, #tpu.memory_space<vmem>>, vector<1x16xf32>
    %14 = vector.broadcast %13 : vector<1x16xf32> to vector<512x16xf32>
    %15 = arith.addf %12, %14 : vector<512x16xf32>
    %cst_24 = arith.constant 0.000000e+00 : f32
    %16 = vector.broadcast %cst_24 : f32 to vector<512x16xf32>
    %17 = arith.cmpf ogt, %15, %16 : vector<512x16xf32>
    %cst_25 = arith.constant 1.000000e-01 : f32
    %18 = vector.broadcast %cst_25 : f32 to vector<512x16xf32>
    %19 = arith.mulf %18, %15 : vector<512x16xf32>
    %20 = arith.select %17, %15, %19 : vector<512x16xi1>, vector<512x16xf32>
    %21 = arith.truncf %20 : vector<512x16xf32> to vector<512x16xbf16>
    %22 = vector.shape_cast %21 : vector<512x16xbf16> to vector<2x16x16x16xbf16>
    %c0_26 = arith.constant 0 : index
    %c1 = arith.constant 1 : index
    %c1_27 = arith.constant 1 : index
    %c0_28 = arith.constant 0 : index
    %23 = vector.load %arg9[%c0_26, %c1, %c1_27, %c0_28] : memref<2x18x18x16xbf16, #tpu.memory_space<vmem>>, vector<2x16x16x16xbf16>
    tpu.vector_store %arg9[%c0_26, %c1, %c1_27, %c0_28], %22 {strides = array<i32>} : memref<2x18x18x16xbf16, #tpu.memory_space<vmem>>, vector<2x16x16x16xbf16>,
    %cst_29 = arith.constant 0.000000e+00 : f32
    %24 = vector.broadcast %cst_29 : f32 to vector<512x32xf32>
    %c0_30 = arith.constant 0 : index
    %c0_31 = arith.constant 0 : index
    %c0_32 = arith.constant 0 : index
    %c0_33 = arith.constant 0 : index
    %25 = vector.load %arg9[%c0_30, %c0_31, %c0_32, %c0_33] : memref<2x18x18x16xbf16, #tpu.memory_space<vmem>>, vector<2x18x16x16xbf16>
    %26 = vector.extract_strided_slice %25 {offsets = [0, 0, 0, 0], sizes = [2, 16, 16, 16], strides = [1, 1, 1, 1]} : vector<2x18x16x16xbf16> to vector<2x16x16x16xbf16>
    %27 = vector.shape_cast %26 : vector<2x16x16x16xbf16> to vector<512x16xbf16>
    %c0_34 = arith.constant 0 : index
    %c0_35 = arith.constant 0 : index
    %c0_36 = arith.constant 0 : index
    %28 = vector.load %arg5[%c0_34, %c0_35, %c0_36] : memref<9x16x32xbf16, #tpu.memory_space<vmem>>, vector<1x16x32xbf16>
    %29 = vector.shape_cast %28 : vector<1x16x32xbf16> to vector<16x32xbf16>
    %cst_37 = arith.constant dense<0.000000e+00> : vector<512x32xf32>
    %30 = tpu.matmul %27, %29, %cst_37 {dimension_numbers = #tpu.dot_dimension_numbers<[1], [0], [0], [1], [0, 0, 1, 1], [], []>} : vector<512x16xbf16>, vector<16x32xbf16>, vector<512x32xf32> -> vector<512x32xf32>
    %31 = arith.addf %24, %30 : vector<512x32xf32>
    %32 = vector.extract_strided_slice %25 {offsets = [0, 1, 0, 0], sizes = [2, 16, 16, 16], strides = [1, 1, 1, 1]} : vector<2x18x16x16xbf16> to vector<2x16x16x16xbf16>
    %33 = vector.shape_cast %32 : vector<2x16x16x16xbf16> to vector<512x16xbf16>
    %c3 = arith.constant 3 : index
    %c0_38 = arith.constant 0 : index
    %c0_39 = arith.constant 0 : index
    %34 = vector.load %arg5[%c3, %c0_38, %c0_39] : memref<9x16x32xbf16, #tpu.memory_space<vmem>>, vector<1x16x32xbf16>
    %35 = vector.shape_cast %34 : vector<1x16x32xbf16> to vector<16x32xbf16>
    %cst_40 = arith.constant dense<0.000000e+00> : vector<512x32xf32>
    %36 = tpu.matmul %33, %35, %cst_40 {dimension_numbers = #tpu.dot_dimension_numbers<[1], [0], [0], [1], [0, 0, 1, 1], [], []>} : vector<512x16xbf16>, vector<16x32xbf16>, vector<512x32xf32> -> vector<512x32xf32>
    %37 = arith.addf %31, %36 : vector<512x32xf32>
    %38 = vector.extract_strided_slice %25 {offsets = [0, 2, 0, 0], sizes = [2, 16, 16, 16], strides = [1, 1, 1, 1]} : vector<2x18x16x16xbf16> to vector<2x16x16x16xbf16>
    %39 = vector.shape_cast %38 : vector<2x16x16x16xbf16> to vector<512x16xbf16>
    %c6 = arith.constant 6 : index
    %c0_41 = arith.constant 0 : index
    %c0_42 = arith.constant 0 : index
    %40 = vector.load %arg5[%c6, %c0_41, %c0_42] : memref<9x16x32xbf16, #tpu.memory_space<vmem>>, vector<1x16x32xbf16>
    %41 = vector.shape_cast %40 : vector<1x16x32xbf16> to vector<16x32xbf16>
    %cst_43 = arith.constant dense<0.000000e+00> : vector<512x32xf32>
    %42 = tpu.matmul %39, %41, %cst_43 {dimension_numbers = #tpu.dot_dimension_numbers<[1], [0], [0], [1], [0, 0, 1, 1], [], []>} : vector<512x16xbf16>, vector<16x32xbf16>, vector<512x32xf32> -> vector<512x32xf32>
    %43 = arith.addf %37, %42 : vector<512x32xf32>
    %c0_44 = arith.constant 0 : index
    %c0_45 = arith.constant 0 : index
    %c1_46 = arith.constant 1 : index
    %c0_47 = arith.constant 0 : index
    %44 = vector.load %arg9[%c0_44, %c0_45, %c1_46, %c0_47] : memref<2x18x18x16xbf16, #tpu.memory_space<vmem>>, vector<2x18x16x16xbf16>
    %45 = vector.extract_strided_slice %44 {offsets = [0, 0, 0, 0], sizes = [2, 16, 16, 16], strides = [1, 1, 1, 1]} : vector<2x18x16x16xbf16> to vector<2x16x16x16xbf16>
    %46 = vector.shape_cast %45 : vector<2x16x16x16xbf16> to vector<512x16xbf16>
    %c1_48 = arith.constant 1 : index
    %c0_49 = arith.constant 0 : index
    %c0_50 = arith.constant 0 : index
    %47 = vector.load %arg5[%c1_48, %c0_49, %c0_50] : memref<9x16x32xbf16, #tpu.memory_space<vmem>>, vector<1x16x32xbf16>
    %48 = vector.shape_cast %47 : vector<1x16x32xbf16> to vector<16x32xbf16>
    %cst_51 = arith.constant dense<0.000000e+00> : vector<512x32xf32>
    %49 = tpu.matmul %46, %48, %cst_51 {dimension_numbers = #tpu.dot_dimension_numbers<[1], [0], [0], [1], [0, 0, 1, 1], [], []>} : vector<512x16xbf16>, vector<16x32xbf16>, vector<512x32xf32> -> vector<512x32xf32>
    %50 = arith.addf %43, %49 : vector<512x32xf32>
    %51 = vector.extract_strided_slice %44 {offsets = [0, 1, 0, 0], sizes = [2, 16, 16, 16], strides = [1, 1, 1, 1]} : vector<2x18x16x16xbf16> to vector<2x16x16x16xbf16>
    %52 = vector.shape_cast %51 : vector<2x16x16x16xbf16> to vector<512x16xbf16>
    %c4 = arith.constant 4 : index
    %c0_52 = arith.constant 0 : index
    %c0_53 = arith.constant 0 : index
    %53 = vector.load %arg5[%c4, %c0_52, %c0_53] : memref<9x16x32xbf16, #tpu.memory_space<vmem>>, vector<1x16x32xbf16>
    %54 = vector.shape_cast %53 : vector<1x16x32xbf16> to vector<16x32xbf16>
    %cst_54 = arith.constant dense<0.000000e+00> : vector<512x32xf32>
    %55 = tpu.matmul %52, %54, %cst_54 {dimension_numbers = #tpu.dot_dimension_numbers<[1], [0], [0], [1], [0, 0, 1, 1], [], []>} : vector<512x16xbf16>, vector<16x32xbf16>, vector<512x32xf32> -> vector<512x32xf32>
    %56 = arith.addf %50, %55 : vector<512x32xf32>
    %57 = vector.extract_strided_slice %44 {offsets = [0, 2, 0, 0], sizes = [2, 16, 16, 16], strides = [1, 1, 1, 1]} : vector<2x18x16x16xbf16> to vector<2x16x16x16xbf16>
    %58 = vector.shape_cast %57 : vector<2x16x16x16xbf16> to vector<512x16xbf16>
    %c7 = arith.constant 7 : index
    %c0_55 = arith.constant 0 : index
    %c0_56 = arith.constant 0 : index
    %59 = vector.load %arg5[%c7, %c0_55, %c0_56] : memref<9x16x32xbf16, #tpu.memory_space<vmem>>, vector<1x16x32xbf16>
    %60 = vector.shape_cast %59 : vector<1x16x32xbf16> to vector<16x32xbf16>
    %cst_57 = arith.constant dense<0.000000e+00> : vector<512x32xf32>
    %61 = tpu.matmul %58, %60, %cst_57 {dimension_numbers = #tpu.dot_dimension_numbers<[1], [0], [0], [1], [0, 0, 1, 1], [], []>} : vector<512x16xbf16>, vector<16x32xbf16>, vector<512x32xf32> -> vector<512x32xf32>
    %62 = arith.addf %56, %61 : vector<512x32xf32>
    %c0_58 = arith.constant 0 : index
    %c0_59 = arith.constant 0 : index
    %c2 = arith.constant 2 : index
    %c0_60 = arith.constant 0 : index
    %63 = vector.load %arg9[%c0_58, %c0_59, %c2, %c0_60] : memref<2x18x18x16xbf16, #tpu.memory_space<vmem>>, vector<2x18x16x16xbf16>
    %64 = vector.extract_strided_slice %63 {offsets = [0, 0, 0, 0], sizes = [2, 16, 16, 16], strides = [1, 1, 1, 1]} : vector<2x18x16x16xbf16> to vector<2x16x16x16xbf16>
    %65 = vector.shape_cast %64 : vector<2x16x16x16xbf16> to vector<512x16xbf16>
    %c2_61 = arith.constant 2 : index
    %c0_62 = arith.constant 0 : index
    %c0_63 = arith.constant 0 : index
    %66 = vector.load %arg5[%c2_61, %c0_62, %c0_63] : memref<9x16x32xbf16, #tpu.memory_space<vmem>>, vector<1x16x32xbf16>
    %67 = vector.shape_cast %66 : vector<1x16x32xbf16> to vector<16x32xbf16>
    %cst_64 = arith.constant dense<0.000000e+00> : vector<512x32xf32>
    %68 = tpu.matmul %65, %67, %cst_64 {dimension_numbers = #tpu.dot_dimension_numbers<[1], [0], [0], [1], [0, 0, 1, 1], [], []>} : vector<512x16xbf16>, vector<16x32xbf16>, vector<512x32xf32> -> vector<512x32xf32>
    %69 = arith.addf %62, %68 : vector<512x32xf32>
    %70 = vector.extract_strided_slice %63 {offsets = [0, 1, 0, 0], sizes = [2, 16, 16, 16], strides = [1, 1, 1, 1]} : vector<2x18x16x16xbf16> to vector<2x16x16x16xbf16>
    %71 = vector.shape_cast %70 : vector<2x16x16x16xbf16> to vector<512x16xbf16>
    %c5 = arith.constant 5 : index
    %c0_65 = arith.constant 0 : index
    %c0_66 = arith.constant 0 : index
    %72 = vector.load %arg5[%c5, %c0_65, %c0_66] : memref<9x16x32xbf16, #tpu.memory_space<vmem>>, vector<1x16x32xbf16>
    %73 = vector.shape_cast %72 : vector<1x16x32xbf16> to vector<16x32xbf16>
    %cst_67 = arith.constant dense<0.000000e+00> : vector<512x32xf32>
    %74 = tpu.matmul %71, %73, %cst_67 {dimension_numbers = #tpu.dot_dimension_numbers<[1], [0], [0], [1], [0, 0, 1, 1], [], []>} : vector<512x16xbf16>, vector<16x32xbf16>, vector<512x32xf32> -> vector<512x32xf32>
    %75 = arith.addf %69, %74 : vector<512x32xf32>
    %76 = vector.extract_strided_slice %63 {offsets = [0, 2, 0, 0], sizes = [2, 16, 16, 16], strides = [1, 1, 1, 1]} : vector<2x18x16x16xbf16> to vector<2x16x16x16xbf16>
    %77 = vector.shape_cast %76 : vector<2x16x16x16xbf16> to vector<512x16xbf16>
    %c8 = arith.constant 8 : index
    %c0_68 = arith.constant 0 : index
    %c0_69 = arith.constant 0 : index
    %78 = vector.load %arg5[%c8, %c0_68, %c0_69] : memref<9x16x32xbf16, #tpu.memory_space<vmem>>, vector<1x16x32xbf16>
    %79 = vector.shape_cast %78 : vector<1x16x32xbf16> to vector<16x32xbf16>
    %cst_70 = arith.constant dense<0.000000e+00> : vector<512x32xf32>
    %80 = tpu.matmul %77, %79, %cst_70 {dimension_numbers = #tpu.dot_dimension_numbers<[1], [0], [0], [1], [0, 0, 1, 1], [], []>} : vector<512x16xbf16>, vector<16x32xbf16>, vector<512x32xf32> -> vector<512x32xf32>
    %81 = arith.addf %75, %80 : vector<512x32xf32>
    %c0_71 = arith.constant 0 : index
    %c0_72 = arith.constant 0 : index
    %82 = vector.load %arg6[%c0_71, %c0_72] : memref<1x32xf32, #tpu.memory_space<vmem>>, vector<1x32xf32>
    %83 = vector.broadcast %82 : vector<1x32xf32> to vector<512x32xf32>
    %84 = arith.mulf %81, %83 : vector<512x32xf32>
    %c0_73 = arith.constant 0 : index
    %c0_74 = arith.constant 0 : index
    %85 = vector.load %arg7[%c0_73, %c0_74] : memref<1x32xf32, #tpu.memory_space<vmem>>, vector<1x32xf32>
    %86 = vector.broadcast %85 : vector<1x32xf32> to vector<512x32xf32>
    %87 = arith.addf %84, %86 : vector<512x32xf32>
    %cst_75 = arith.constant 0.000000e+00 : f32
    %88 = vector.broadcast %cst_75 : f32 to vector<512x32xf32>
    %89 = arith.cmpf ogt, %87, %88 : vector<512x32xf32>
    %cst_76 = arith.constant 1.000000e-01 : f32
    %90 = vector.broadcast %cst_76 : f32 to vector<512x32xf32>
    %91 = arith.mulf %90, %87 : vector<512x32xf32>
    %92 = arith.select %89, %87, %91 : vector<512x32xi1>, vector<512x32xf32>
    %93 = arith.addf %6, %92 : vector<512x32xf32>
    %c0_77 = arith.constant 0 : index
    %c0_78 = arith.constant 0 : index
    %94 = vector.load %arg8[%c0_77, %c0_78] : memref<512x32xf32, #tpu.memory_space<vmem>>, vector<512x32xf32>
    tpu.vector_store %arg8[%c0_77, %c0_78], %93 {strides = array<i32>} : memref<512x32xf32, #tpu.memory_space<vmem>>, vector<512x32xf32>,
    return
  }
  func.func @transform_0(%arg0: i32) -> (i32, i32) {
    %c0_i32 = arith.constant 0 : i32
    %c0_i32_0 = arith.constant 0 : i32
    return %arg0, %c0_i32 : i32, i32
  }
  func.func @transform_1(%arg0: i32) -> (i32, i32) {
    %c0_i32 = arith.constant 0 : i32
    %c0_i32_0 = arith.constant 0 : i32
    %c0_i32_1 = arith.constant 0 : i32
    return %c0_i32, %c0_i32_0 : i32, i32
  }
  func.func @transform_2(%arg0: i32) -> (i32, i32) {
    %c0_i32 = arith.constant 0 : i32
    %c0_i32_0 = arith.constant 0 : i32
    %c0_i32_1 = arith.constant 0 : i32
    return %c0_i32, %c0_i32_0 : i32, i32
  }
  func.func @transform_3(%arg0: i32) -> (i32, i32) {
    %c0_i32 = arith.constant 0 : i32
    %c0_i32_0 = arith.constant 0 : i32
    %c0_i32_1 = arith.constant 0 : i32
    return %c0_i32, %c0_i32_0 : i32, i32
  }
  func.func @transform_4(%arg0: i32) -> (i32, i32, i32) {
    %c0_i32 = arith.constant 0 : i32
    %c0_i32_0 = arith.constant 0 : i32
    %c0_i32_1 = arith.constant 0 : i32
    %c0_i32_2 = arith.constant 0 : i32
    return %c0_i32, %c0_i32_0, %c0_i32_1 : i32, i32, i32
  }
  func.func @transform_5(%arg0: i32) -> (i32, i32) {
    %c0_i32 = arith.constant 0 : i32
    %c0_i32_0 = arith.constant 0 : i32
    %c0_i32_1 = arith.constant 0 : i32
    return %c0_i32, %c0_i32_0 : i32, i32
  }
  func.func @transform_6(%arg0: i32) -> (i32, i32) {
    %c0_i32 = arith.constant 0 : i32
    %c0_i32_0 = arith.constant 0 : i32
    %c0_i32_1 = arith.constant 0 : i32
    return %c0_i32, %c0_i32_0 : i32, i32
  }
  func.func @transform_7(%arg0: i32) -> (i32, i32) {
    %c0_i32 = arith.constant 0 : i32
    %c0_i32_0 = arith.constant 0 : i32
    return %arg0, %c0_i32 : i32, i32
  }
}

</mosaic_0001>

<llo_original>
// kernel: tpu_custom_call.1
$region0: #{tpu_custom_call.1}
  #allocation0 [shape = 'u32[]', space=smem, size = 0x4, offset = 0x4, fixed_abs, tag = 'smem constant byte address 0x4 - core index']
  #allocation1 [shape = 'u32[72,128]{1,0:T(1,128)}', space=vmem, size = 0x9000, scoped, tag = 'internal scratch']
  #allocation2 [shape = 'bf16[2,18,18,16]{3,2,1,0:T(8,128)(2,1)}', space=vmem, size = 0x36000, scoped, tag = 'scratch operand']
  %s0 = inlined_call_operand.vmem [shape: f32[512,32], index: 0, kind: input, shape index: {}]
  %s1 = inlined_call_operand.vmem [shape: bf16[32,16], index: 1, kind: input, shape index: {}]
  %s2 = inlined_call_operand.vmem [shape: f32[1,16], index: 2, kind: input, shape index: {}]
  %s3 = inlined_call_operand.vmem [shape: f32[1,16], index: 3, kind: input, shape index: {}]
  %s4 = inlined_call_operand.vmem [shape: bf16[9,16,32], index: 4, kind: input, shape index: {}]
  %s5 = inlined_call_operand.vmem [shape: f32[1,32], index: 5, kind: input, shape index: {}]
  %s6 = inlined_call_operand.vmem [shape: f32[1,32], index: 6, kind: input, shape index: {}]
  %s7 = inlined_call_operand.vmem [shape: f32[512,32], index: 7, kind: output, shape index: {}]
  %s8 = sld [smem:[#allocation0]]
  $region38: #{tpu_custom_call.1} parent=0
    _
  %s10 = ssub.s32 1, %s8
  %s11 = scalar_select 0, %s10, %s8
  // Predicated region
  $region2: #{tpu_custom_call.1} parent=0 // pred_check
    _
  $region3: #{tpu_custom_call.1} parent=0 // pred_check_branch
    %13 = sbr.rel (0) target = $region5
  $region4: #{tpu_custom_call.1} parent=0 // pred_region
    _
  $region5: #{tpu_custom_call.1} parent=0 // pred_fallthru
    _
  // Predicated region
  $region6: #{tpu_custom_call.1} parent=0 // pred_check
    _
  $region7: #{tpu_custom_call.1} parent=0 // pred_check_branch
    %15 = sbr.rel (0) target = $region9
  $region8: #{tpu_custom_call.1} parent=0 // pred_region
    _
  $region9: #{tpu_custom_call.1} parent=0 // pred_fallthru
    _
  // Predicated region
  $region10: #{tpu_custom_call.1} parent=0 // pred_check
    _
  $region11: #{tpu_custom_call.1} parent=0 // pred_check_branch
    %17 = sbr.rel (0) target = $region13
  $region12: #{tpu_custom_call.1} parent=0 // pred_region
    _
  $region13: #{tpu_custom_call.1} parent=0 // pred_fallthru
    _
  // Predicated region
  $region14: #{tpu_custom_call.1} parent=0 // pred_check
    _
  $region15: #{tpu_custom_call.1} parent=0 // pred_check_branch
    %19 = sbr.rel (0) target = $region17
  $region16: #{tpu_custom_call.1} parent=0 // pred_region
    _
  $region17: #{tpu_custom_call.1} parent=0 // pred_fallthru
    _
  // Predicated region
  $region18: #{tpu_custom_call.1} parent=0 // pred_check
    _
  $region19: #{tpu_custom_call.1} parent=0 // pred_check_branch
    %21 = sbr.rel (0) target = $region21
  $region20: #{tpu_custom_call.1} parent=0 // pred_region
    _
  $region21: #{tpu_custom_call.1} parent=0 // pred_fallthru
    _
  // Predicated region
  $region22: #{tpu_custom_call.1} parent=0 // pred_check
    _
  $region23: #{tpu_custom_call.1} parent=0 // pred_check_branch
    %23 = sbr.rel (0) target = $region25
  $region24: #{tpu_custom_call.1} parent=0 // pred_region
    _
  $region25: #{tpu_custom_call.1} parent=0 // pred_fallthru
    _
  // Predicated region
  $region26: #{tpu_custom_call.1} parent=0 // pred_check
    _
  $region27: #{tpu_custom_call.1} parent=0 // pred_check_branch
    %25 = sbr.rel (0) target = $region29
  $region28: #{tpu_custom_call.1} parent=0 // pred_region
    _
  $region29: #{tpu_custom_call.1} parent=0 // pred_fallthru
    _
  %vm27 = vcmask 125952
  %28 = vst.msk [vmem:[#allocation2] sm:$0xf] %vm27, 0
  %29 = vst.msk [vmem:[#allocation2 + $0x4] sm:$0xf] %vm27, 0
  %vm30 = vcmask 122880
  %31 = vst.msk [vmem:[#allocation2 + $0x8] sm:$0x1] %vm30, 0
  %32 = vst.msk [vmem:[#allocation2 + $0xd8] sm:$0xf] %vm27, 0
  %33 = vst.msk [vmem:[#allocation2 + $0xdc] sm:$0xf] %vm27, 0
  %34 = vst.msk [vmem:[#allocation2 + $0xe0] sm:$0x1] %vm30, 0
  %s35 = scalar_lea.vmem [#allocation2], 204
  %36 = vst.msk [vmem:[%s35] sm:$0xf] %vm27, 0
  %37 = vst.msk [vmem:[%s35 + $0x4] sm:$0xf] %vm27, 0
  %38 = vst.msk [vmem:[%s35 + $0x8] sm:$0x1] %vm30, 0
  %39 = vst.msk [vmem:[%s35 + $0xd8] sm:$0xf] %vm27, 0
  %40 = vst.msk [vmem:[%s35 + $0xdc] sm:$0xf] %vm27, 0
  %41 = vst.msk [vmem:[%s35 + $0xe0] sm:$0x1] %vm30, 0
  %vm42 = vcmask 122880
  %vm43 = vsmask.f32 256
  %vm44 = vmand %vm42, %vm43
  %v45 = vld [vmem:[#allocation2] sm:$0x1]
  %v46 = vsel %vm44, 0, %v45
  %47 = vst [vmem:[#allocation2] sm:$0x1] %v46
  %v48 = vld [vmem:[#allocation2 + $0xc] sm:$0x1]
  %v49 = vsel %vm44, 0, %v48
  %50 = vst [vmem:[#allocation2 + $0xc] sm:$0x1] %v49
  %v51 = vld [vmem:[#allocation2 + $0x18] sm:$0x1]
  %v52 = vsel %vm44, 0, %v51
  %53 = vst [vmem:[#allocation2 + $0x18] sm:$0x1] %v52
  %v54 = vld [vmem:[#allocation2 + $0x24] sm:$0x1]
  %v55 = vsel %vm44, 0, %v54
  %56 = vst [vmem:[#allocation2 + $0x24] sm:$0x1] %v55
  %v57 = vld [vmem:[#allocation2 + $0x30] sm:$0x1]
  %v58 = vsel %vm44, 0, %v57
  %59 = vst [vmem:[#allocation2 + $0x30] sm:$0x1] %v58
  %v60 = vld [vmem:[#allocation2 + $0x3c] sm:$0x1]
  %v61 = vsel %vm44, 0, %v60
  %62 = vst [vmem:[#allocation2 + $0x3c] sm:$0x1] %v61
  %v63 = vld [vmem:[#allocation2 + $0x48] sm:$0x1]
  %v64 = vsel %vm44, 0, %v63
  %65 = vst [vmem:[#allocation2 + $0x48] sm:$0x1] %v64
  %v66 = vld [vmem:[#allocation2 + $0x54] sm:$0x1]
  %v67 = vsel %vm44, 0, %v66
  %68 = vst [vmem:[#allocation2 + $0x54] sm:$0x1] %v67
  %v69 = vld [vmem:[#allocation2 + $0x60] sm:$0x1]
  %v70 = vsel %vm44, 0, %v69
  %71 = vst [vmem:[#allocation2 + $0x60] sm:$0x1] %v70
  %v72 = vld [vmem:[#allocation2 + $0x6c] sm:$0x1]
  %v73 = vsel %vm44, 0, %v72
  %74 = vst [vmem:[#allocation2 + $0x6c] sm:$0x1] %v73
  %v75 = vld [vmem:[#allocation2 + $0x78] sm:$0x1]
  %v76 = vsel %vm44, 0, %v75
  %77 = vst [vmem:[#allocation2 + $0x78] sm:$0x1] %v76
  %v78 = vld [vmem:[#allocation2 + $0x84] sm:$0x1]
  %v79 = vsel %vm44, 0, %v78
  %80 = vst [vmem:[#allocation2 + $0x84] sm:$0x1] %v79
  %v81 = vld [vmem:[#allocation2 + $0x90] sm:$0x1]
  %v82 = vsel %vm44, 0, %v81
  %83 = vst [vmem:[#allocation2 + $0x90] sm:$0x1] %v82
  %v84 = vld [vmem:[#allocation2 + $0x9c] sm:$0x1]
  %v85 = vsel %vm44, 0, %v84
  %86 = vst [vmem:[#allocation2 + $0x9c] sm:$0x1] %v85
  %v87 = vld [vmem:[#allocation2 + $0xa8] sm:$0x1]
  %v88 = vsel %vm44, 0, %v87
  %89 = vst [vmem:[#allocation2 + $0xa8] sm:$0x1] %v88
  %v90 = vld [vmem:[#allocation2 + $0xb4] sm:$0x1]
  %v91 = vsel %vm44, 0, %v90
  %92 = vst [vmem:[#allocation2 + $0xb4] sm:$0x1] %v91
  %v93 = vld [vmem:[#allocation2 + $0xc0] sm:$0x1]
  %v94 = vsel %vm44, 0, %v93
  %95 = vst [vmem:[#allocation2 + $0xc0] sm:$0x1] %v94
  %v96 = vld [vmem:[#allocation2 + $0xcc] sm:$0x1]
  %v97 = vsel %vm44, 0, %v96
  %98 = vst [vmem:[#allocation2 + $0xcc] sm:$0x1] %v97
  %v99 = vld [vmem:[#allocation2 + $0xd8] sm:$0x1]
  %v100 = vsel %vm44, 0, %v99
  %101 = vst [vmem:[#allocation2 + $0xd8] sm:$0x1] %v100
  %v102 = vld [vmem:[#allocation2 + $0xe4] sm:$0x1]
  %v103 = vsel %vm44, 0, %v102
  %104 = vst [vmem:[#allocation2 + $0xe4] sm:$0x1] %v103
  %v105 = vld [vmem:[#allocation2 + $0xf0] sm:$0x1]
  %v106 = vsel %vm44, 0, %v105
  %107 = vst [vmem:[#allocation2 + $0xf0] sm:$0x1] %v106
  %v108 = vld [vmem:[#allocation2 + $0xfc] sm:$0x1]
  %v109 = vsel %vm44, 0, %v108
  %110 = vst [vmem:[#allocation2 + $0xfc] sm:$0x1] %v109
  %v111 = vld [vmem:[#allocation2 + $0x108] sm:$0x1]
  %v112 = vsel %vm44, 0, %v111
  %113 = vst [vmem:[#allocation2 + $0x108] sm:$0x1] %v112
  %v114 = vld [vmem:[#allocation2 + $0x114] sm:$0x1]
  %v115 = vsel %vm44, 0, %v114
  %116 = vst [vmem:[#allocation2 + $0x114] sm:$0x1] %v115
  %v117 = vld [vmem:[#allocation2 + $0x120] sm:$0x1]
  %v118 = vsel %vm44, 0, %v117
  %119 = vst [vmem:[#allocation2 + $0x120] sm:$0x1] %v118
  %v120 = vld [vmem:[#allocation2 + $0x12c] sm:$0x1]
  %v121 = vsel %vm44, 0, %v120
  %122 = vst [vmem:[#allocation2 + $0x12c] sm:$0x1] %v121
  %v123 = vld [vmem:[#allocation2 + $0x138] sm:$0x1]
  %v124 = vsel %vm44, 0, %v123
  %125 = vst [vmem:[#allocation2 + $0x138] sm:$0x1] %v124
  %v126 = vld [vmem:[#allocation2 + $0x144] sm:$0x1]
  %v127 = vsel %vm44, 0, %v126
  %128 = vst [vmem:[#allocation2 + $0x144] sm:$0x1] %v127
  %v129 = vld [vmem:[#allocation2 + $0x150] sm:$0x1]
  %v130 = vsel %vm44, 0, %v129
  %131 = vst [vmem:[#allocation2 + $0x150] sm:$0x1] %v130
  %v132 = vld [vmem:[#allocation2 + $0x15c] sm:$0x1]
  %v133 = vsel %vm44, 0, %v132
  %134 = vst [vmem:[#allocation2 + $0x15c] sm:$0x1] %v133
  %v135 = vld [vmem:[#allocation2 + $0x168] sm:$0x1]
  %v136 = vsel %vm44, 0, %v135
  %137 = vst [vmem:[#allocation2 + $0x168] sm:$0x1] %v136
  %v138 = vld [vmem:[#allocation2 + $0x174] sm:$0x1]
  %v139 = vsel %vm44, 0, %v138
  %140 = vst [vmem:[#allocation2 + $0x174] sm:$0x1] %v139
  %v141 = vld [vmem:[#allocation2 + $0x180] sm:$0x1]
  %v142 = vsel %vm44, 0, %v141
  %143 = vst [vmem:[#allocation2 + $0x180] sm:$0x1] %v142
  %v144 = vld [vmem:[#allocation2 + $0x18c] sm:$0x1]
  %v145 = vsel %vm44, 0, %v144
  %146 = vst [vmem:[#allocation2 + $0x18c] sm:$0x1] %v145
  %v147 = vld [vmem:[#allocation2 + $0x198] sm:$0x1]
  %v148 = vsel %vm44, 0, %v147
  %149 = vst [vmem:[#allocation2 + $0x198] sm:$0x1] %v148
  %v150 = vld [vmem:[#allocation2 + $0x1a4] sm:$0x1]
  %v151 = vsel %vm44, 0, %v150
  %152 = vst [vmem:[#allocation2 + $0x1a4] sm:$0x1] %v151
  %vm153 = vsmask.f32 7938
  %vm154 = vmand %vm42, %vm153
  %v155 = vld [vmem:[#allocation2 + $0x8] sm:$0x1]
  %v156 = vsel %vm154, 0, %v155
  %157 = vst [vmem:[#allocation2 + $0x8] sm:$0x1] %v156
  %v158 = vld [vmem:[#allocation2 + $0x14] sm:$0x1]
  %v159 = vsel %vm154, 0, %v158
  %160 = vst [vmem:[#allocation2 + $0x14] sm:$0x1] %v159
  %v161 = vld [vmem:[#allocation2 + $0x20] sm:$0x1]
  %v162 = vsel %vm154, 0, %v161
  %163 = vst [vmem:[#allocation2 + $0x20] sm:$0x1] %v162
  %v164 = vld [vmem:[#allocation2 + $0x2c] sm:$0x1]
  %v165 = vsel %vm154, 0, %v164
  %166 = vst [vmem:[#allocation2 + $0x2c] sm:$0x1] %v165
  %v167 = vld [vmem:[#allocation2 + $0x38] sm:$0x1]
  %v168 = vsel %vm154, 0, %v167
  %169 = vst [vmem:[#allocation2 + $0x38] sm:$0x1] %v168
  %v170 = vld [vmem:[#allocation2 + $0x44] sm:$0x1]
  %v171 = vsel %vm154, 0, %v170
  %172 = vst [vmem:[#allocation2 + $0x44] sm:$0x1] %v171
  %v173 = vld [vmem:[#allocation2 + $0x50] sm:$0x1]
  %v174 = vsel %vm154, 0, %v173
  %175 = vst [vmem:[#allocation2 + $0x50] sm:$0x1] %v174
  %v176 = vld [vmem:[#allocation2 + $0x5c] sm:$0x1]
  %v177 = vsel %vm154, 0, %v176
  %178 = vst [vmem:[#allocation2 + $0x5c] sm:$0x1] %v177
  %v179 = vld [vmem:[#allocation2 + $0x68] sm:$0x1]
  %v180 = vsel %vm154, 0, %v179
  %181 = vst [vmem:[#allocation2 + $0x68] sm:$0x1] %v180
  %v182 = vld [vmem:[#allocation2 + $0x74] sm:$0x1]
  %v183 = vsel %vm154, 0, %v182
  %184 = vst [vmem:[#allocation2 + $0x74] sm:$0x1] %v183
  %v185 = vld [vmem:[#allocation2 + $0x80] sm:$0x1]
  %v186 = vsel %vm154, 0, %v185
  %187 = vst [vmem:[#allocation2 + $0x80] sm:$0x1] %v186
  %v188 = vld [vmem:[#allocation2 + $0x8c] sm:$0x1]
  %v189 = vsel %vm154, 0, %v188
  %190 = vst [vmem:[#allocation2 + $0x8c] sm:$0x1] %v189
  %v191 = vld [vmem:[#allocation2 + $0x98] sm:$0x1]
  %v192 = vsel %vm154, 0, %v191
  %193 = vst [vmem:[#allocation2 + $0x98] sm:$0x1] %v192
  %v194 = vld [vmem:[#allocation2 + $0xa4] sm:$0x1]
  %v195 = vsel %vm154, 0, %v194
  %196 = vst [vmem:[#allocation2 + $0xa4] sm:$0x1] %v195
  %v197 = vld [vmem:[#allocation2 + $0xb0] sm:$0x1]
  %v198 = vsel %vm154, 0, %v197
  %199 = vst [vmem:[#allocation2 + $0xb0] sm:$0x1] %v198
  %v200 = vld [vmem:[#allocation2 + $0xbc] sm:$0x1]
  %v201 = vsel %vm154, 0, %v200
  %202 = vst [vmem:[#allocation2 + $0xbc] sm:$0x1] %v201
  %v203 = vld [vmem:[#allocation2 + $0xc8] sm:$0x1]
  %v204 = vsel %vm154, 0, %v203
  %205 = vst [vmem:[#allocation2 + $0xc8] sm:$0x1] %v204
  %v206 = vld [vmem:[#allocation2 + $0xd4] sm:$0x1]
  %v207 = vsel %vm154, 0, %v206
  %208 = vst [vmem:[#allocation2 + $0xd4] sm:$0x1] %v207
  %v209 = vld [vmem:[#allocation2 + $0xe0] sm:$0x1]
  %v210 = vsel %vm154, 0, %v209
  %211 = vst [vmem:[#allocation2 + $0xe0] sm:$0x1] %v210
  %v212 = vld [vmem:[#allocation2 + $0xec] sm:$0x1]
  %v213 = vsel %vm154, 0, %v212
  %214 = vst [vmem:[#allocation2 + $0xec] sm:$0x1] %v213
  %v215 = vld [vmem:[#allocation2 + $0xf8] sm:$0x1]
  %v216 = vsel %vm154, 0, %v215
  %217 = vst [vmem:[#allocation2 + $0xf8] sm:$0x1] %v216
  %v218 = vld [vmem:[#allocation2 + $0x104] sm:$0x1]
  %v219 = vsel %vm154, 0, %v218
  %220 = vst [vmem:[#allocation2 + $0x104] sm:$0x1] %v219
  %v221 = vld [vmem:[#allocation2 + $0x110] sm:$0x1]
  %v222 = vsel %vm154, 0, %v221
  %223 = vst [vmem:[#allocation2 + $0x110] sm:$0x1] %v222
  %v224 = vld [vmem:[#allocation2 + $0x11c] sm:$0x1]
  %v225 = vsel %vm154, 0, %v224
  %226 = vst [vmem:[#allocation2 + $0x11c] sm:$0x1] %v225
  %v227 = vld [vmem:[#allocation2 + $0x128] sm:$0x1]
  %v228 = vsel %vm154, 0, %v227
  %229 = vst [vmem:[#allocation2 + $0x128] sm:$0x1] %v228
  %v230 = vld [vmem:[#allocation2 + $0x134] sm:$0x1]
  %v231 = vsel %vm154, 0, %v230
  %232 = vst [vmem:[#allocation2 + $0x134] sm:$0x1] %v231
  %v233 = vld [vmem:[#allocation2 + $0x140] sm:$0x1]
  %v234 = vsel %vm154, 0, %v233
  %235 = vst [vmem:[#allocation2 + $0x140] sm:$0x1] %v234
  %v236 = vld [vmem:[#allocation2 + $0x14c] sm:$0x1]
  %v237 = vsel %vm154, 0, %v236
  %238 = vst [vmem:[#allocation2 + $0x14c] sm:$0x1] %v237
  %v239 = vld [vmem:[#allocation2 + $0x158] sm:$0x1]
  %v240 = vsel %vm154, 0, %v239
  %241 = vst [vmem:[#allocation2 + $0x158] sm:$0x1] %v240
  %v242 = vld [vmem:[#allocation2 + $0x164] sm:$0x1]
  %v243 = vsel %vm154, 0, %v242
  %244 = vst [vmem:[#allocation2 + $0x164] sm:$0x1] %v243
  %v245 = vld [vmem:[#allocation2 + $0x170] sm:$0x1]
  %v246 = vsel %vm154, 0, %v245
  %247 = vst [vmem:[#allocation2 + $0x170] sm:$0x1] %v246
  %v248 = vld [vmem:[#allocation2 + $0x17c] sm:$0x1]
  %v249 = vsel %vm154, 0, %v248
  %250 = vst [vmem:[#allocation2 + $0x17c] sm:$0x1] %v249
  %v251 = vld [vmem:[#allocation2 + $0x188] sm:$0x1]
  %v252 = vsel %vm154, 0, %v251
  %253 = vst [vmem:[#allocation2 + $0x188] sm:$0x1] %v252
  %v254 = vld [vmem:[#allocation2 + $0x194] sm:$0x1]
  %v255 = vsel %vm154, 0, %v254
  %256 = vst [vmem:[#allocation2 + $0x194] sm:$0x1] %v255
  %v257 = vld [vmem:[#allocation2 + $0x1a0] sm:$0x1]
  %v258 = vsel %vm154, 0, %v257
  %259 = vst [vmem:[#allocation2 + $0x1a0] sm:$0x1] %v258
  %v260 = vld [vmem:[#allocation2 + $0x1ac] sm:$0x1]
  %v261 = vsel %vm154, 0, %v260
  %262 = vst [vmem:[#allocation2 + $0x1ac] sm:$0x1] %v261
  %v263 = vld [vmem:[%s0] sm:$0xff]
  %v264 = vld [vmem:[%s0 + $0x8] sm:$0xff]
  %v265 = vld [vmem:[%s0 + $0x10] sm:$0xff]
  %v266 = vld [vmem:[%s0 + $0x18] sm:$0xff]
  %v267 = vld [vmem:[%s0 + $0x20] sm:$0xff]
  %v268 = vld [vmem:[%s0 + $0x28] sm:$0xff]
  %v269 = vld [vmem:[%s0 + $0x30] sm:$0xff]
  %v270 = vld [vmem:[%s0 + $0x38] sm:$0xff]
  %v271 = vld [vmem:[%s0 + $0x40] sm:$0xff]
  %v272 = vld [vmem:[%s0 + $0x48] sm:$0xff]
  %v273 = vld [vmem:[%s0 + $0x50] sm:$0xff]
  %v274 = vld [vmem:[%s0 + $0x58] sm:$0xff]
  %v275 = vld [vmem:[%s0 + $0x60] sm:$0xff]
  %v276 = vld [vmem:[%s0 + $0x68] sm:$0xff]
  %v277 = vld [vmem:[%s0 + $0x70] sm:$0xff]
  %v278 = vld [vmem:[%s0 + $0x78] sm:$0xff]
  %v279 = vld [vmem:[%s0 + $0x80] sm:$0xff]
  %v280 = vld [vmem:[%s0 + $0x88] sm:$0xff]
  %v281 = vld [vmem:[%s0 + $0x90] sm:$0xff]
  %v282 = vld [vmem:[%s0 + $0x98] sm:$0xff]
  %v283 = vld [vmem:[%s0 + $0xa0] sm:$0xff]
  %v284 = vld [vmem:[%s0 + $0xa8] sm:$0xff]
  %v285 = vld [vmem:[%s0 + $0xb0] sm:$0xff]
  %v286 = vld [vmem:[%s0 + $0xb8] sm:$0xff]
  %v287 = vld [vmem:[%s0 + $0xc0] sm:$0xff]
  %v288 = vld [vmem:[%s0 + $0xc8] sm:$0xff]
  %v289 = vld [vmem:[%s0 + $0xd0] sm:$0xff]
  %v290 = vld [vmem:[%s0 + $0xd8] sm:$0xff]
  %v291 = vld [vmem:[%s0 + $0xe0] sm:$0xff]
  %v292 = vld [vmem:[%s0 + $0xe8] sm:$0xff]
  %v293 = vld [vmem:[%s0 + $0xf0] sm:$0xff]
  %v294 = vld [vmem:[%s0 + $0xf8] sm:$0xff]
  %v295 = vld [vmem:[%s0 + $0x100] sm:$0xff]
  %v296 = vld [vmem:[%s0 + $0x108] sm:$0xff]
  %v297 = vld [vmem:[%s0 + $0x110] sm:$0xff]
  %v298 = vld [vmem:[%s0 + $0x118] sm:$0xff]
  %v299 = vld [vmem:[%s0 + $0x120] sm:$0xff]
  %v300 = vld [vmem:[%s0 + $0x128] sm:$0xff]
  %v301 = vld [vmem:[%s0 + $0x130] sm:$0xff]
  %v302 = vld [vmem:[%s0 + $0x138] sm:$0xff]
  %v303 = vld [vmem:[%s0 + $0x140] sm:$0xff]
  %v304 = vld [vmem:[%s0 + $0x148] sm:$0xff]
  %v305 = vld [vmem:[%s0 + $0x150] sm:$0xff]
  %v306 = vld [vmem:[%s0 + $0x158] sm:$0xff]
  %v307 = vld [vmem:[%s0 + $0x160] sm:$0xff]
  %v308 = vld [vmem:[%s0 + $0x168] sm:$0xff]
  %v309 = vld [vmem:[%s0 + $0x170] sm:$0xff]
  %v310 = vld [vmem:[%s0 + $0x178] sm:$0xff]
  %v311 = vld [vmem:[%s0 + $0x180] sm:$0xff]
  %v312 = vld [vmem:[%s0 + $0x188] sm:$0xff]
  %v313 = vld [vmem:[%s0 + $0x190] sm:$0xff]
  %v314 = vld [vmem:[%s0 + $0x198] sm:$0xff]
  %v315 = vld [vmem:[%s0 + $0x1a0] sm:$0xff]
  %v316 = vld [vmem:[%s0 + $0x1a8] sm:$0xff]
  %v317 = vld [vmem:[%s0 + $0x1b0] sm:$0xff]
  %v318 = vld [vmem:[%s0 + $0x1b8] sm:$0xff]
  %v319 = vld [vmem:[%s0 + $0x1c0] sm:$0xff]
  %v320 = vld [vmem:[%s0 + $0x1c8] sm:$0xff]
  %v321 = vld [vmem:[%s0 + $0x1d0] sm:$0xff]
  %v322 = vld [vmem:[%s0 + $0x1d8] sm:$0xff]
  %v323 = vld [vmem:[%s0 + $0x1e0] sm:$0xff]
  %v324 = vld [vmem:[%s0 + $0x1e8] sm:$0xff]
  %v325 = vld [vmem:[%s0 + $0x1f0] sm:$0xff]
  %v326 = vld [vmem:[%s0 + $0x1f8] sm:$0xff]
  %v327 = vpack.c.bf16 %v264, %v263
  %v328 = vpack.c.bf16 %v266, %v265
  %v329 = vpack.c.bf16 %v268, %v267
  %v330 = vpack.c.bf16 %v270, %v269
  %v331 = vpack.c.bf16 %v272, %v271
  %v332 = vpack.c.bf16 %v274, %v273
  %v333 = vpack.c.bf16 %v276, %v275
  %v334 = vpack.c.bf16 %v278, %v277
  %v335 = vpack.c.bf16 %v280, %v279
  %v336 = vpack.c.bf16 %v282, %v281
  %v337 = vpack.c.bf16 %v284, %v283
  %v338 = vpack.c.bf16 %v286, %v285
  %v339 = vpack.c.bf16 %v288, %v287
  %v340 = vpack.c.bf16 %v290, %v289
  %v341 = vpack.c.bf16 %v292, %v291
  %v342 = vpack.c.bf16 %v294, %v293
  %v343 = vpack.c.bf16 %v296, %v295
  %v344 = vpack.c.bf16 %v298, %v297
  %v345 = vpack.c.bf16 %v300, %v299
  %v346 = vpack.c.bf16 %v302, %v301
  %v347 = vpack.c.bf16 %v304, %v303
  %v348 = vpack.c.bf16 %v306, %v305
  %v349 = vpack.c.bf16 %v308, %v307
  %v350 = vpack.c.bf16 %v310, %v309
  %v351 = vpack.c.bf16 %v312, %v311
  %v352 = vpack.c.bf16 %v314, %v313
  %v353 = vpack.c.bf16 %v316, %v315
  %v354 = vpack.c.bf16 %v318, %v317
  %v355 = vpack.c.bf16 %v320, %v319
  %v356 = vpack.c.bf16 %v322, %v321
  %v357 = vpack.c.bf16 %v324, %v323
  %v358 = vpack.c.bf16 %v326, %v325
  %v359 = vld [vmem:[%s1] sm:$0xf]
  %v360 = vld [vmem:[%s1 + $0x4] sm:$0xf]
  %v361 = vld [vmem:[%s1 + $0x8] sm:$0xf]
  %v362 = vld [vmem:[%s1 + $0xc] sm:$0xf]
  %v367 = vunpack.c.l.b16 %v359
  %v368 = vunpack.c.l.b16 %v360
  %v369 = vunpack.c.l.b16 %v361
  %v370 = vunpack.c.l.b16 %v362
  %v371 = vpack.c.b16 %v368, %v367
  %v372 = vpack.c.b16 %v370, %v369
  %vm375 = vcmask 261120
  %v377 = vsel %vm375, %v327, 0
  %v380 = vsel %vm375, %v328, 0
  %v383 = vsel %vm375, %v329, 0
  %v386 = vsel %vm375, %v330, 0
  %v389 = vsel %vm375, %v331, 0
  %v392 = vsel %vm375, %v332, 0
  %v395 = vsel %vm375, %v333, 0
  %v398 = vsel %vm375, %v334, 0
  %v401 = vsel %vm375, %v335, 0
  %v404 = vsel %vm375, %v336, 0
  %v407 = vsel %vm375, %v337, 0
  %v410 = vsel %vm375, %v338, 0
  %v413 = vsel %vm375, %v339, 0
  %v416 = vsel %vm375, %v340, 0
  %v419 = vsel %vm375, %v341, 0
  %v422 = vsel %vm375, %v342, 0
  %v425 = vsel %vm375, %v343, 0
  %v428 = vsel %vm375, %v344, 0
  %v431 = vsel %vm375, %v345, 0
  %v434 = vsel %vm375, %v346, 0
  %v437 = vsel %vm375, %v347, 0
  %v440 = vsel %vm375, %v348, 0
  %v443 = vsel %vm375, %v349, 0
  %v446 = vsel %vm375, %v350, 0
  %v449 = vsel %vm375, %v351, 0
  %v452 = vsel %vm375, %v352, 0
  %v455 = vsel %vm375, %v353, 0
  %v458 = vsel %vm375, %v354, 0
  %v461 = vsel %vm375, %v355, 0
  %v464 = vsel %vm375, %v356, 0
  %v467 = vsel %vm375, %v357, 0
  %v470 = vsel %vm375, %v358, 0
  %472 = vmatpush.bf16.msra.mxu0 0
  %473 = vmatpush.bf16.msra.mxu0 0
  %474 = vmatpush.bf16.msra.mxu0 0
  %475 = vmatpush.bf16.msra.mxu0 0
  %476 = vmatpush.bf16.msra.mxu0 0
  %477 = vmatpush.bf16.msra.mxu0 0
  %478 = vmatpush.bf16.msra.mxu0 %v372
  %479 = vmatpush.bf16.msra.mxu0 %v371
  %480 = vmatmul.bf16.gmra.mxu0 %v377
  %v481 = vpop.f32.mrf.mxu0
  %v482 = vadd.f32 0.0, %v481
  %v483 = vpop.f32.mrf.mxu0
  %v484 = vadd.f32 0.0, %v483
  %485 = vmatmul.bf16.gmra.mxu0 %v380
  %v486 = vpop.f32.mrf.mxu0
  %v487 = vadd.f32 0.0, %v486
  %v488 = vpop.f32.mrf.mxu0
  %v489 = vadd.f32 0.0, %v488
  %490 = vmatmul.bf16.gmra.mxu0 %v383
  %v491 = vpop.f32.mrf.mxu0
  %v492 = vadd.f32 0.0, %v491
  %v493 = vpop.f32.mrf.mxu0
  %v494 = vadd.f32 0.0, %v493
  %495 = vmatmul.bf16.gmra.mxu0 %v386
  %v496 = vpop.f32.mrf.mxu0
  %v497 = vadd.f32 0.0, %v496
  %v498 = vpop.f32.mrf.mxu0
  %v499 = vadd.f32 0.0, %v498
  %500 = vmatmul.bf16.gmra.mxu0 %v389
  %v501 = vpop.f32.mrf.mxu0
  %v502 = vadd.f32 0.0, %v501
  %v503 = vpop.f32.mrf.mxu0
  %v504 = vadd.f32 0.0, %v503
  %505 = vmatmul.bf16.gmra.mxu0 %v392
  %v506 = vpop.f32.mrf.mxu0
  %v507 = vadd.f32 0.0, %v506
  %v508 = vpop.f32.mrf.mxu0
  %v509 = vadd.f32 0.0, %v508
  %510 = vmatmul.bf16.gmra.mxu0 %v395
  %v511 = vpop.f32.mrf.mxu0
  %v512 = vadd.f32 0.0, %v511
  %v513 = vpop.f32.mrf.mxu0
  %v514 = vadd.f32 0.0, %v513
  %515 = vmatmul.bf16.gmra.mxu0 %v398
  %v516 = vpop.f32.mrf.mxu0
  %v517 = vadd.f32 0.0, %v516
  %v518 = vpop.f32.mrf.mxu0
  %v519 = vadd.f32 0.0, %v518
  %520 = vmatmul.bf16.gmra.mxu0 %v401
  %v521 = vpop.f32.mrf.mxu0
  %v522 = vadd.f32 0.0, %v521
  %v523 = vpop.f32.mrf.mxu0
  %v524 = vadd.f32 0.0, %v523
  %525 = vmatmul.bf16.gmra.mxu0 %v404
  %v526 = vpop.f32.mrf.mxu0
  %v527 = vadd.f32 0.0, %v526
  %v528 = vpop.f32.mrf.mxu0
  %v529 = vadd.f32 0.0, %v528
  %530 = vmatmul.bf16.gmra.mxu0 %v407
  %v531 = vpop.f32.mrf.mxu0
  %v532 = vadd.f32 0.0, %v531
  %v533 = vpop.f32.mrf.mxu0
  %v534 = vadd.f32 0.0, %v533
  %535 = vmatmul.bf16.gmra.mxu0 %v410
  %v536 = vpop.f32.mrf.mxu0
  %v537 = vadd.f32 0.0, %v536
  %v538 = vpop.f32.mrf.mxu0
  %v539 = vadd.f32 0.0, %v538
  %540 = vmatmul.bf16.gmra.mxu0 %v413
  %v541 = vpop.f32.mrf.mxu0
  %v542 = vadd.f32 0.0, %v541
  %v543 = vpop.f32.mrf.mxu0
  %v544 = vadd.f32 0.0, %v543
  %545 = vmatmul.bf16.gmra.mxu0 %v416
  %v546 = vpop.f32.mrf.mxu0
  %v547 = vadd.f32 0.0, %v546
  %v548 = vpop.f32.mrf.mxu0
  %v549 = vadd.f32 0.0, %v548
  %550 = vmatmul.bf16.gmra.mxu0 %v419
  %v551 = vpop.f32.mrf.mxu0
  %v552 = vadd.f32 0.0, %v551
  %v553 = vpop.f32.mrf.mxu0
  %v554 = vadd.f32 0.0, %v553
  %555 = vmatmul.bf16.gmra.mxu0 %v422
  %v556 = vpop.f32.mrf.mxu0
  %v557 = vadd.f32 0.0, %v556
  %v558 = vpop.f32.mrf.mxu0
  %v559 = vadd.f32 0.0, %v558
  %560 = vmatmul.bf16.gmra.mxu0 %v425
  %v561 = vpop.f32.mrf.mxu0
  %v562 = vadd.f32 0.0, %v561
  %v563 = vpop.f32.mrf.mxu0
  %v564 = vadd.f32 0.0, %v563
  %565 = vmatmul.bf16.gmra.mxu0 %v428
  %v566 = vpop.f32.mrf.mxu0
  %v567 = vadd.f32 0.0, %v566
  %v568 = vpop.f32.mrf.mxu0
  %v569 = vadd.f32 0.0, %v568
  %570 = vmatmul.bf16.gmra.mxu0 %v431
  %v571 = vpop.f32.mrf.mxu0
  %v572 = vadd.f32 0.0, %v571
  %v573 = vpop.f32.mrf.mxu0
  %v574 = vadd.f32 0.0, %v573
  %575 = vmatmul.bf16.gmra.mxu0 %v434
  %v576 = vpop.f32.mrf.mxu0
  %v577 = vadd.f32 0.0, %v576
  %v578 = vpop.f32.mrf.mxu0
  %v579 = vadd.f32 0.0, %v578
  %580 = vmatmul.bf16.gmra.mxu0 %v437
  %v581 = vpop.f32.mrf.mxu0
  %v582 = vadd.f32 0.0, %v581
  %v583 = vpop.f32.mrf.mxu0
  %v584 = vadd.f32 0.0, %v583
  %585 = vmatmul.bf16.gmra.mxu0 %v440
  %v586 = vpop.f32.mrf.mxu0
  %v587 = vadd.f32 0.0, %v586
  %v588 = vpop.f32.mrf.mxu0
  %v589 = vadd.f32 0.0, %v588
  %590 = vmatmul.bf16.gmra.mxu0 %v443
  %v591 = vpop.f32.mrf.mxu0
  %v592 = vadd.f32 0.0, %v591
  %v593 = vpop.f32.mrf.mxu0
  %v594 = vadd.f32 0.0, %v593
  %595 = vmatmul.bf16.gmra.mxu0 %v446
  %v596 = vpop.f32.mrf.mxu0
  %v597 = vadd.f32 0.0, %v596
  %v598 = vpop.f32.mrf.mxu0
  %v599 = vadd.f32 0.0, %v598
  %600 = vmatmul.bf16.gmra.mxu0 %v449
  %v601 = vpop.f32.mrf.mxu0
  %v602 = vadd.f32 0.0, %v601
  %v603 = vpop.f32.mrf.mxu0
  %v604 = vadd.f32 0.0, %v603
  %605 = vmatmul.bf16.gmra.mxu0 %v452
  %v606 = vpop.f32.mrf.mxu0
  %v607 = vadd.f32 0.0, %v606
  %v608 = vpop.f32.mrf.mxu0
  %v609 = vadd.f32 0.0, %v608
  %610 = vmatmul.bf16.gmra.mxu0 %v455
  %v611 = vpop.f32.mrf.mxu0
  %v612 = vadd.f32 0.0, %v611
  %v613 = vpop.f32.mrf.mxu0
  %v614 = vadd.f32 0.0, %v613
  %615 = vmatmul.bf16.gmra.mxu0 %v458
  %v616 = vpop.f32.mrf.mxu0
  %v617 = vadd.f32 0.0, %v616
  %v618 = vpop.f32.mrf.mxu0
  %v619 = vadd.f32 0.0, %v618
  %620 = vmatmul.bf16.gmra.mxu0 %v461
  %v621 = vpop.f32.mrf.mxu0
  %v622 = vadd.f32 0.0, %v621
  %v623 = vpop.f32.mrf.mxu0
  %v624 = vadd.f32 0.0, %v623
  %625 = vmatmul.bf16.gmra.mxu0 %v464
  %v626 = vpop.f32.mrf.mxu0
  %v627 = vadd.f32 0.0, %v626
  %v628 = vpop.f32.mrf.mxu0
  %v629 = vadd.f32 0.0, %v628
  %630 = vmatmul.bf16.gmra.mxu0 %v467
  %v631 = vpop.f32.mrf.mxu0
  %v632 = vadd.f32 0.0, %v631
  %v633 = vpop.f32.mrf.mxu0
  %v634 = vadd.f32 0.0, %v633
  %635 = vmatmul.bf16.gmra.mxu0 %v470
  %v636 = vpop.f32.mrf.mxu0
  %v637 = vadd.f32 0.0, %v636
  %v638 = vpop.f32.mrf.mxu0
  %v639 = vadd.f32 0.0, %v638
  %640 = vdwg.mxu0
  %v641 = vld [vmem:[%s2] sm:$0x1]
  %v643 = vperm.slane %v641, 0
  %v645 = vmul.f32 %v482, %v643
  %v646 = vmul.f32 %v484, %v643
  %v647 = vmul.f32 %v487, %v643
  %v648 = vmul.f32 %v489, %v643
  %v649 = vmul.f32 %v492, %v643
  %v650 = vmul.f32 %v494, %v643
  %v651 = vmul.f32 %v497, %v643
  %v652 = vmul.f32 %v499, %v643
  %v653 = vmul.f32 %v502, %v643
  %v654 = vmul.f32 %v504, %v643
  %v655 = vmul.f32 %v507, %v643
  %v656 = vmul.f32 %v509, %v643
  %v657 = vmul.f32 %v512, %v643
  %v658 = vmul.f32 %v514, %v643
  %v659 = vmul.f32 %v517, %v643
  %v660 = vmul.f32 %v519, %v643
  %v661 = vmul.f32 %v522, %v643
  %v662 = vmul.f32 %v524, %v643
  %v663 = vmul.f32 %v527, %v643
  %v664 = vmul.f32 %v529, %v643
  %v665 = vmul.f32 %v532, %v643
  %v666 = vmul.f32 %v534, %v643
  %v667 = vmul.f32 %v537, %v643
  %v668 = vmul.f32 %v539, %v643
  %v669 = vmul.f32 %v542, %v643
  %v670 = vmul.f32 %v544, %v643
  %v671 = vmul.f32 %v547, %v643
  %v672 = vmul.f32 %v549, %v643
  %v673 = vmul.f32 %v552, %v643
  %v674 = vmul.f32 %v554, %v643
  %v675 = vmul.f32 %v557, %v643
  %v676 = vmul.f32 %v559, %v643
  %v677 = vmul.f32 %v562, %v643
  %v678 = vmul.f32 %v564, %v643
  %v679 = vmul.f32 %v567, %v643
  %v680 = vmul.f32 %v569, %v643
  %v681 = vmul.f32 %v572, %v643
  %v682 = vmul.f32 %v574, %v643
  %v683 = vmul.f32 %v577, %v643
  %v684 = vmul.f32 %v579, %v643
  %v685 = vmul.f32 %v582, %v643
  %v686 = vmul.f32 %v584, %v643
  %v687 = vmul.f32 %v587, %v643
  %v688 = vmul.f32 %v589, %v643
  %v689 = vmul.f32 %v592, %v643
  %v690 = vmul.f32 %v594, %v643
  %v691 = vmul.f32 %v597, %v643
  %v692 = vmul.f32 %v599, %v643
  %v693 = vmul.f32 %v602, %v643
  %v694 = vmul.f32 %v604, %v643
  %v695 = vmul.f32 %v607, %v643
  %v696 = vmul.f32 %v609, %v643
  %v697 = vmul.f32 %v612, %v643
  %v698 = vmul.f32 %v614, %v643
  %v699 = vmul.f32 %v617, %v643
  %v700 = vmul.f32 %v619, %v643
  %v701 = vmul.f32 %v622, %v643
  %v702 = vmul.f32 %v624, %v643
  %v703 = vmul.f32 %v627, %v643
  %v704 = vmul.f32 %v629, %v643
  %v705 = vmul.f32 %v632, %v643
  %v706 = vmul.f32 %v634, %v643
  %v707 = vmul.f32 %v637, %v643
  %v708 = vmul.f32 %v639, %v643
  %v709 = vld [vmem:[%s3] sm:$0x1]
  %v711 = vperm.slane %v709, 0
  %v713 = vadd.f32 %v645, %v711
  %v714 = vadd.f32 %v646, %v711
  %v715 = vadd.f32 %v647, %v711
  %v716 = vadd.f32 %v648, %v711
  %v717 = vadd.f32 %v649, %v711
  %v718 = vadd.f32 %v650, %v711
  %v719 = vadd.f32 %v651, %v711
  %v720 = vadd.f32 %v652, %v711
  %v721 = vadd.f32 %v653, %v711
  %v722 = vadd.f32 %v654, %v711
  %v723 = vadd.f32 %v655, %v711
  %v724 = vadd.f32 %v656, %v711
  %v725 = vadd.f32 %v657, %v711
  %v726 = vadd.f32 %v658, %v711
  %v727 = vadd.f32 %v659, %v711
  %v728 = vadd.f32 %v660, %v711
  %v729 = vadd.f32 %v661, %v711
  %v730 = vadd.f32 %v662, %v711
  %v731 = vadd.f32 %v663, %v711
  %v732 = vadd.f32 %v664, %v711
  %v733 = vadd.f32 %v665, %v711
  %v734 = vadd.f32 %v666, %v711
  %v735 = vadd.f32 %v667, %v711
  %v736 = vadd.f32 %v668, %v711
  %v737 = vadd.f32 %v669, %v711
  %v738 = vadd.f32 %v670, %v711
  %v739 = vadd.f32 %v671, %v711
  %v740 = vadd.f32 %v672, %v711
  %v741 = vadd.f32 %v673, %v711
  %v742 = vadd.f32 %v674, %v711
  %v743 = vadd.f32 %v675, %v711
  %v744 = vadd.f32 %v676, %v711
  %v745 = vadd.f32 %v677, %v711
  %v746 = vadd.f32 %v678, %v711
  %v747 = vadd.f32 %v679, %v711
  %v748 = vadd.f32 %v680, %v711
  %v749 = vadd.f32 %v681, %v711
  %v750 = vadd.f32 %v682, %v711
  %v751 = vadd.f32 %v683, %v711
  %v752 = vadd.f32 %v684, %v711
  %v753 = vadd.f32 %v685, %v711
  %v754 = vadd.f32 %v686, %v711
  %v755 = vadd.f32 %v687, %v711
  %v756 = vadd.f32 %v688, %v711
  %v757 = vadd.f32 %v689, %v711
  %v758 = vadd.f32 %v690, %v711
  %v759 = vadd.f32 %v691, %v711
  %v760 = vadd.f32 %v692, %v711
  %v761 = vadd.f32 %v693, %v711
  %v762 = vadd.f32 %v694, %v711
  %v763 = vadd.f32 %v695, %v711
  %v764 = vadd.f32 %v696, %v711
  %v765 = vadd.f32 %v697, %v711
  %v766 = vadd.f32 %v698, %v711
  %v767 = vadd.f32 %v699, %v711
  %v768 = vadd.f32 %v700, %v711
  %v769 = vadd.f32 %v701, %v711
  %v770 = vadd.f32 %v702, %v711
  %v771 = vadd.f32 %v703, %v711
  %v772 = vadd.f32 %v704, %v711
  %v773 = vadd.f32 %v705, %v711
  %v774 = vadd.f32 %v706, %v711
  %v775 = vadd.f32 %v707, %v711
  %v776 = vadd.f32 %v708, %v711
  %vm777 = vcmp.gt.f32.partialorder %v713, 0.0
  %vm778 = vcmp.gt.f32.partialorder %v714, 0.0
  %vm779 = vcmp.gt.f32.partialorder %v715, 0.0
  %vm780 = vcmp.gt.f32.partialorder %v716, 0.0
  %vm781 = vcmp.gt.f32.partialorder %v717, 0.0
  %vm782 = vcmp.gt.f32.partialorder %v718, 0.0
  %vm783 = vcmp.gt.f32.partialorder %v719, 0.0
  %vm784 = vcmp.gt.f32.partialorder %v720, 0.0
  %vm785 = vcmp.gt.f32.partialorder %v721, 0.0
  %vm786 = vcmp.gt.f32.partialorder %v722, 0.0
  %vm787 = vcmp.gt.f32.partialorder %v723, 0.0
  %vm788 = vcmp.gt.f32.partialorder %v724, 0.0
  %vm789 = vcmp.gt.f32.partialorder %v725, 0.0
  %vm790 = vcmp.gt.f32.partialorder %v726, 0.0
  %vm791 = vcmp.gt.f32.partialorder %v727, 0.0
  %vm792 = vcmp.gt.f32.partialorder %v728, 0.0
  %vm793 = vcmp.gt.f32.partialorder %v729, 0.0
  %vm794 = vcmp.gt.f32.partialorder %v730, 0.0
  %vm795 = vcmp.gt.f32.partialorder %v731, 0.0
  %vm796 = vcmp.gt.f32.partialorder %v732, 0.0
  %vm797 = vcmp.gt.f32.partialorder %v733, 0.0
  %vm798 = vcmp.gt.f32.partialorder %v734, 0.0
  %vm799 = vcmp.gt.f32.partialorder %v735, 0.0
  %vm800 = vcmp.gt.f32.partialorder %v736, 0.0
  %vm801 = vcmp.gt.f32.partialorder %v737, 0.0
  %vm802 = vcmp.gt.f32.partialorder %v738, 0.0
  %vm803 = vcmp.gt.f32.partialorder %v739, 0.0
  %vm804 = vcmp.gt.f32.partialorder %v740, 0.0
  %vm805 = vcmp.gt.f32.partialorder %v741, 0.0
  %vm806 = vcmp.gt.f32.partialorder %v742, 0.0
  %vm807 = vcmp.gt.f32.partialorder %v743, 0.0
  %vm808 = vcmp.gt.f32.partialorder %v744, 0.0
  %vm809 = vcmp.gt.f32.partialorder %v745, 0.0
  %vm810 = vcmp.gt.f32.partialorder %v746, 0.0
  %vm811 = vcmp.gt.f32.partialorder %v747, 0.0
  %vm812 = vcmp.gt.f32.partialorder %v748, 0.0
  %vm813 = vcmp.gt.f32.partialorder %v749, 0.0
  %vm814 = vcmp.gt.f32.partialorder %v750, 0.0
  %vm815 = vcmp.gt.f32.partialorder %v751, 0.0
  %vm816 = vcmp.gt.f32.partialorder %v752, 0.0
  %vm817 = vcmp.gt.f32.partialorder %v753, 0.0
  %vm818 = vcmp.gt.f32.partialorder %v754, 0.0
  %vm819 = vcmp.gt.f32.partialorder %v755, 0.0
  %vm820 = vcmp.gt.f32.partialorder %v756, 0.0
  %vm821 = vcmp.gt.f32.partialorder %v757, 0.0
  %vm822 = vcmp.gt.f32.partialorder %v758, 0.0
  %vm823 = vcmp.gt.f32.partialorder %v759, 0.0
  %vm824 = vcmp.gt.f32.partialorder %v760, 0.0
  %vm825 = vcmp.gt.f32.partialorder %v761, 0.0
  %vm826 = vcmp.gt.f32.partialorder %v762, 0.0
  %vm827 = vcmp.gt.f32.partialorder %v763, 0.0
  %vm828 = vcmp.gt.f32.partialorder %v764, 0.0
  %vm829 = vcmp.gt.f32.partialorder %v765, 0.0
  %vm830 = vcmp.gt.f32.partialorder %v766, 0.0
  %vm831 = vcmp.gt.f32.partialorder %v767, 0.0
  %vm832 = vcmp.gt.f32.partialorder %v768, 0.0
  %vm833 = vcmp.gt.f32.partialorder %v769, 0.0
  %vm834 = vcmp.gt.f32.partialorder %v770, 0.0
  %vm835 = vcmp.gt.f32.partialorder %v771, 0.0
  %vm836 = vcmp.gt.f32.partialorder %v772, 0.0
  %vm837 = vcmp.gt.f32.partialorder %v773, 0.0
  %vm838 = vcmp.gt.f32.partialorder %v774, 0.0
  %vm839 = vcmp.gt.f32.partialorder %v775, 0.0
  %vm840 = vcmp.gt.f32.partialorder %v776, 0.0
  %v841 = vmul.f32 %v713, 0.1
  %v842 = vmul.f32 %v714, 0.1
  %v843 = vmul.f32 %v715, 0.1
  %v844 = vmul.f32 %v716, 0.1
  %v845 = vmul.f32 %v717, 0.1
  %v846 = vmul.f32 %v718, 0.1
  %v847 = vmul.f32 %v719, 0.1
  %v848 = vmul.f32 %v720, 0.1
  %v849 = vmul.f32 %v721, 0.1
  %v850 = vmul.f32 %v722, 0.1
  %v851 = vmul.f32 %v723, 0.1
  %v852 = vmul.f32 %v724, 0.1
  %v853 = vmul.f32 %v725, 0.1
  %v854 = vmul.f32 %v726, 0.1
  %v855 = vmul.f32 %v727, 0.1
  %v856 = vmul.f32 %v728, 0.1
  %v857 = vmul.f32 %v729, 0.1
  %v858 = vmul.f32 %v730, 0.1
  %v859 = vmul.f32 %v731, 0.1
  %v860 = vmul.f32 %v732, 0.1
  %v861 = vmul.f32 %v733, 0.1
  %v862 = vmul.f32 %v734, 0.1
  %v863 = vmul.f32 %v735, 0.1
  %v864 = vmul.f32 %v736, 0.1
  %v865 = vmul.f32 %v737, 0.1
  %v866 = vmul.f32 %v738, 0.1
  %v867 = vmul.f32 %v739, 0.1
  %v868 = vmul.f32 %v740, 0.1
  %v869 = vmul.f32 %v741, 0.1
  %v870 = vmul.f32 %v742, 0.1
  %v871 = vmul.f32 %v743, 0.1
  %v872 = vmul.f32 %v744, 0.1
  %v873 = vmul.f32 %v745, 0.1
  %v874 = vmul.f32 %v746, 0.1
  %v875 = vmul.f32 %v747, 0.1
  %v876 = vmul.f32 %v748, 0.1
  %v877 = vmul.f32 %v749, 0.1
  %v878 = vmul.f32 %v750, 0.1
  %v879 = vmul.f32 %v751, 0.1
  %v880 = vmul.f32 %v752, 0.1
  %v881 = vmul.f32 %v753, 0.1
  %v882 = vmul.f32 %v754, 0.1
  %v883 = vmul.f32 %v755, 0.1
  %v884 = vmul.f32 %v756, 0.1
  %v885 = vmul.f32 %v757, 0.1
  %v886 = vmul.f32 %v758, 0.1
  %v887 = vmul.f32 %v759, 0.1
  %v888 = vmul.f32 %v760, 0.1
  %v889 = vmul.f32 %v761, 0.1
  %v890 = vmul.f32 %v762, 0.1
  %v891 = vmul.f32 %v763, 0.1
  %v892 = vmul.f32 %v764, 0.1
  %v893 = vmul.f32 %v765, 0.1
  %v894 = vmul.f32 %v766, 0.1
  %v895 = vmul.f32 %v767, 0.1
  %v896 = vmul.f32 %v768, 0.1
  %v897 = vmul.f32 %v769, 0.1
  %v898 = vmul.f32 %v770, 0.1
  %v899 = vmul.f32 %v771, 0.1
  %v900 = vmul.f32 %v772, 0.1
  %v901 = vmul.f32 %v773, 0.1
  %v902 = vmul.f32 %v774, 0.1
  %v903 = vmul.f32 %v775, 0.1
  %v904 = vmul.f32 %v776, 0.1
  %v905 = vsel %vm777, %v713, %v841
  %v906 = vsel %vm778, %v714, %v842
  %v907 = vsel %vm779, %v715, %v843
  %v908 = vsel %vm780, %v716, %v844
  %v909 = vsel %vm781, %v717, %v845
  %v910 = vsel %vm782, %v718, %v846
  %v911 = vsel %vm783, %v719, %v847
  %v912 = vsel %vm784, %v720, %v848
  %v913 = vsel %vm785, %v721, %v849
  %v914 = vsel %vm786, %v722, %v850
  %v915 = vsel %vm787, %v723, %v851
  %v916 = vsel %vm788, %v724, %v852
  %v917 = vsel %vm789, %v725, %v853
  %v918 = vsel %vm790, %v726, %v854
  %v919 = vsel %vm791, %v727, %v855
  %v920 = vsel %vm792, %v728, %v856
  %v921 = vsel %vm793, %v729, %v857
  %v922 = vsel %vm794, %v730, %v858
  %v923 = vsel %vm795, %v731, %v859
  %v924 = vsel %vm796, %v732, %v860
  %v925 = vsel %vm797, %v733, %v861
  %v926 = vsel %vm798, %v734, %v862
  %v927 = vsel %vm799, %v735, %v863
  %v928 = vsel %vm800, %v736, %v864
  %v929 = vsel %vm801, %v737, %v865
  %v930 = vsel %vm802, %v738, %v866
  %v931 = vsel %vm803, %v739, %v867
  %v932 = vsel %vm804, %v740, %v868
  %v933 = vsel %vm805, %v741, %v869
  %v934 = vsel %vm806, %v742, %v870
  %v935 = vsel %vm807, %v743, %v871
  %v936 = vsel %vm808, %v744, %v872
  %v937 = vsel %vm809, %v745, %v873
  %v938 = vsel %vm810, %v746, %v874
  %v939 = vsel %vm811, %v747, %v875
  %v940 = vsel %vm812, %v748, %v876
  %v941 = vsel %vm813, %v749, %v877
  %v942 = vsel %vm814, %v750, %v878
  %v943 = vsel %vm815, %v751, %v879
  %v944 = vsel %vm816, %v752, %v880
  %v945 = vsel %vm817, %v753, %v881
  %v946 = vsel %vm818, %v754, %v882
  %v947 = vsel %vm819, %v755, %v883
  %v948 = vsel %vm820, %v756, %v884
  %v949 = vsel %vm821, %v757, %v885
  %v950 = vsel %vm822, %v758, %v886
  %v951 = vsel %vm823, %v759, %v887
  %v952 = vsel %vm824, %v760, %v888
  %v953 = vsel %vm825, %v761, %v889
  %v954 = vsel %vm826, %v762, %v890
  %v955 = vsel %vm827, %v763, %v891
  %v956 = vsel %vm828, %v764, %v892
  %v957 = vsel %vm829, %v765, %v893
  %v958 = vsel %vm830, %v766, %v894
  %v959 = vsel %vm831, %v767, %v895
  %v960 = vsel %vm832, %v768, %v896
  %v961 = vsel %vm833, %v769, %v897
  %v962 = vsel %vm834, %v770, %v898
  %v963 = vsel %vm835, %v771, %v899
  %v964 = vsel %vm836, %v772, %v900
  %v965 = vsel %vm837, %v773, %v901
  %v966 = vsel %vm838, %v774, %v902
  %v967 = vsel %vm839, %v775, %v903
  %v968 = vsel %vm840, %v776, %v904
  %v969 = vpack.c.bf16 %v905, %v905
  %v970 = vpack.c.bf16 %v906, %v906
  %v971 = vpack.c.bf16 %v907, %v907
  %v972 = vpack.c.bf16 %v908, %v908
  %v973 = vpack.c.bf16 %v909, %v909
  %v974 = vpack.c.bf16 %v910, %v910
  %v975 = vpack.c.bf16 %v911, %v911
  %v976 = vpack.c.bf16 %v912, %v912
  %v977 = vpack.c.bf16 %v913, %v913
  %v978 = vpack.c.bf16 %v914, %v914
  %v979 = vpack.c.bf16 %v915, %v915
  %v980 = vpack.c.bf16 %v916, %v916
  %v981 = vpack.c.bf16 %v917, %v917
  %v982 = vpack.c.bf16 %v918, %v918
  %v983 = vpack.c.bf16 %v919, %v919
  %v984 = vpack.c.bf16 %v920, %v920
  %v985 = vpack.c.bf16 %v921, %v921
  %v986 = vpack.c.bf16 %v922, %v922
  %v987 = vpack.c.bf16 %v923, %v923
  %v988 = vpack.c.bf16 %v924, %v924
  %v989 = vpack.c.bf16 %v925, %v925
  %v990 = vpack.c.bf16 %v926, %v926
  %v991 = vpack.c.bf16 %v927, %v927
  %v992 = vpack.c.bf16 %v928, %v928
  %v993 = vpack.c.bf16 %v929, %v929
  %v994 = vpack.c.bf16 %v930, %v930
  %v995 = vpack.c.bf16 %v931, %v931
  %v996 = vpack.c.bf16 %v932, %v932
  %v997 = vpack.c.bf16 %v933, %v933
  %v998 = vpack.c.bf16 %v934, %v934
  %v999 = vpack.c.bf16 %v935, %v935
  %v1000 = vpack.c.bf16 %v936, %v936
  %v1001 = vpack.c.bf16 %v937, %v937
  %v1002 = vpack.c.bf16 %v938, %v938
  %v1003 = vpack.c.bf16 %v939, %v939
  %v1004 = vpack.c.bf16 %v940, %v940
  %v1005 = vpack.c.bf16 %v941, %v941
  %v1006 = vpack.c.bf16 %v942, %v942
  %v1007 = vpack.c.bf16 %v943, %v943
  %v1008 = vpack.c.bf16 %v944, %v944
  %v1009 = vpack.c.bf16 %v945, %v945
  %v1010 = vpack.c.bf16 %v946, %v946
  %v1011 = vpack.c.bf16 %v947, %v947
  %v1012 = vpack.c.bf16 %v948, %v948
  %v1013 = vpack.c.bf16 %v949, %v949
  %v1014 = vpack.c.bf16 %v950, %v950
  %v1015 = vpack.c.bf16 %v951, %v951
  %v1016 = vpack.c.bf16 %v952, %v952
  %v1017 = vpack.c.bf16 %v953, %v953
  %v1018 = vpack.c.bf16 %v954, %v954
  %v1019 = vpack.c.bf16 %v955, %v955
  %v1020 = vpack.c.bf16 %v956, %v956
  %v1021 = vpack.c.bf16 %v957, %v957
  %v1022 = vpack.c.bf16 %v958, %v958
  %v1023 = vpack.c.bf16 %v959, %v959
  %v1024 = vpack.c.bf16 %v960, %v960
  %v1025 = vpack.c.bf16 %v961, %v961
  %v1026 = vpack.c.bf16 %v962, %v962
  %v1027 = vpack.c.bf16 %v963, %v963
  %v1028 = vpack.c.bf16 %v964, %v964
  %v1029 = vpack.c.bf16 %v965, %v965
  %v1030 = vpack.c.bf16 %v966, %v966
  %v1031 = vpack.c.bf16 %v967, %v967
  %v1032 = vpack.c.bf16 %v968, %v968
  %vm1033 = vsmask.f32 4368
  %vm1034 = vmor %vm43, %vm1033
  %v1036 = vshrl.u32 %v969, 16
  %v1038 = vrot.slane %v1036, 7
  %v1039 = vshll.u32 %v969, 16
  %v1041 = vor.u32 %v1038, %v1039
  %v1042 = vrot.slane %v1038, 4
  %v1044 = vshrl.u32 %v970, 16
  %v1046 = vrot.slane %v1044, 7
  %v1047 = vshll.u32 %v970, 16
  %v1049 = vor.u32 %v1046, %v1047
  %v1050 = vsel %vm1034, %v1042, %v1049
  %v1051 = vrot.slane %v1046, 4
  %v1053 = vshrl.u32 %v971, 16
  %v1055 = vrot.slane %v1053, 7
  %v1056 = vshll.u32 %v971, 16
  %v1058 = vor.u32 %v1055, %v1056
  %v1059 = vrot.slane %v1055, 4
  %v1061 = vshrl.u32 %v972, 16
  %v1063 = vrot.slane %v1061, 7
  %v1064 = vshll.u32 %v972, 16
  %v1066 = vor.u32 %v1063, %v1064
  %v1067 = vsel %vm1034, %v1059, %v1066
  %v1068 = vrot.slane %v1063, 4
  %v1070 = vshrl.u32 %v973, 16
  %v1072 = vrot.slane %v1070, 7
  %v1073 = vshll.u32 %v973, 16
  %v1075 = vor.u32 %v1072, %v1073
  %v1076 = vrot.slane %v1072, 4
  %v1078 = vshrl.u32 %v974, 16
  %v1080 = vrot.slane %v1078, 7
  %v1081 = vshll.u32 %v974, 16
  %v1083 = vor.u32 %v1080, %v1081
  %v1084 = vsel %vm1034, %v1076, %v1083
  %v1085 = vrot.slane %v1080, 4
  %v1087 = vshrl.u32 %v975, 16
  %v1089 = vrot.slane %v1087, 7
  %v1090 = vshll.u32 %v975, 16
  %v1092 = vor.u32 %v1089, %v1090
  %v1093 = vrot.slane %v1089, 4
  %v1095 = vshrl.u32 %v976, 16
  %v1097 = vrot.slane %v1095, 7
  %v1098 = vshll.u32 %v976, 16
  %v1100 = vor.u32 %v1097, %v1098
  %v1101 = vsel %vm1034, %v1093, %v1100
  %v1102 = vrot.slane %v1097, 4
  %v1104 = vshrl.u32 %v977, 16
  %v1106 = vrot.slane %v1104, 7
  %v1107 = vshll.u32 %v977, 16
  %v1109 = vor.u32 %v1106, %v1107
  %v1110 = vrot.slane %v1106, 4
  %v1112 = vshrl.u32 %v978, 16
  %v1114 = vrot.slane %v1112, 7
  %v1115 = vshll.u32 %v978, 16
  %v1117 = vor.u32 %v1114, %v1115
  %v1118 = vsel %vm1034, %v1110, %v1117
  %v1119 = vrot.slane %v1114, 4
  %v1121 = vshrl.u32 %v979, 16
  %v1123 = vrot.slane %v1121, 7
  %v1124 = vshll.u32 %v979, 16
  %v1126 = vor.u32 %v1123, %v1124
  %v1127 = vrot.slane %v1123, 4
  %v1129 = vshrl.u32 %v980, 16
  %v1131 = vrot.slane %v1129, 7
  %v1132 = vshll.u32 %v980, 16
  %v1134 = vor.u32 %v1131, %v1132
  %v1135 = vsel %vm1034, %v1127, %v1134
  %v1136 = vrot.slane %v1131, 4
  %v1138 = vshrl.u32 %v981, 16
  %v1140 = vrot.slane %v1138, 7
  %v1141 = vshll.u32 %v981, 16
  %v1143 = vor.u32 %v1140, %v1141
  %v1144 = vrot.slane %v1140, 4
  %v1146 = vshrl.u32 %v982, 16
  %v1148 = vrot.slane %v1146, 7
  %v1149 = vshll.u32 %v982, 16
  %v1151 = vor.u32 %v1148, %v1149
  %v1152 = vsel %vm1034, %v1144, %v1151
  %v1153 = vrot.slane %v1148, 4
  %v1155 = vshrl.u32 %v983, 16
  %v1157 = vrot.slane %v1155, 7
  %v1158 = vshll.u32 %v983, 16
  %v1160 = vor.u32 %v1157, %v1158
  %v1161 = vrot.slane %v1157, 4
  %v1163 = vshrl.u32 %v984, 16
  %v1165 = vrot.slane %v1163, 7
  %v1166 = vshll.u32 %v984, 16
  %v1168 = vor.u32 %v1165, %v1166
  %v1169 = vsel %vm1034, %v1161, %v1168
  %v1170 = vrot.slane %v1165, 4
  %v1172 = vshrl.u32 %v985, 16
  %v1174 = vrot.slane %v1172, 7
  %v1175 = vshll.u32 %v985, 16
  %v1177 = vor.u32 %v1174, %v1175
  %v1178 = vrot.slane %v1174, 4
  %v1180 = vshrl.u32 %v986, 16
  %v1182 = vrot.slane %v1180, 7
  %v1183 = vshll.u32 %v986, 16
  %v1185 = vor.u32 %v1182, %v1183
  %v1186 = vsel %vm1034, %v1178, %v1185
  %v1187 = vrot.slane %v1182, 4
  %v1189 = vshrl.u32 %v987, 16
  %v1191 = vrot.slane %v1189, 7
  %v1192 = vshll.u32 %v987, 16
  %v1194 = vor.u32 %v1191, %v1192
  %v1195 = vrot.slane %v1191, 4
  %v1197 = vshrl.u32 %v988, 16
  %v1199 = vrot.slane %v1197, 7
  %v1200 = vshll.u32 %v988, 16
  %v1202 = vor.u32 %v1199, %v1200
  %v1203 = vsel %vm1034, %v1195, %v1202
  %v1204 = vrot.slane %v1199, 4
  %v1206 = vshrl.u32 %v989, 16
  %v1208 = vrot.slane %v1206, 7
  %v1209 = vshll.u32 %v989, 16
  %v1211 = vor.u32 %v1208, %v1209
  %v1212 = vrot.slane %v1208, 4
  %v1214 = vshrl.u32 %v990, 16
  %v1216 = vrot.slane %v1214, 7
  %v1217 = vshll.u32 %v990, 16
  %v1219 = vor.u32 %v1216, %v1217
  %v1220 = vsel %vm1034, %v1212, %v1219
  %v1221 = vrot.slane %v1216, 4
  %v1223 = vshrl.u32 %v991, 16
  %v1225 = vrot.slane %v1223, 7
  %v1226 = vshll.u32 %v991, 16
  %v1228 = vor.u32 %v1225, %v1226
  %v1229 = vrot.slane %v1225, 4
  %v1231 = vshrl.u32 %v992, 16
  %v1233 = vrot.slane %v1231, 7
  %v1234 = vshll.u32 %v992, 16
  %v1236 = vor.u32 %v1233, %v1234
  %v1237 = vsel %vm1034, %v1229, %v1236
  %v1238 = vrot.slane %v1233, 4
  %v1240 = vshrl.u32 %v993, 16
  %v1242 = vrot.slane %v1240, 7
  %v1243 = vshll.u32 %v993, 16
  %v1245 = vor.u32 %v1242, %v1243
  %v1246 = vrot.slane %v1242, 4
  %v1248 = vshrl.u32 %v994, 16
  %v1250 = vrot.slane %v1248, 7
  %v1251 = vshll.u32 %v994, 16
  %v1253 = vor.u32 %v1250, %v1251
  %v1254 = vsel %vm1034, %v1246, %v1253
  %v1255 = vrot.slane %v1250, 4
  %v1257 = vshrl.u32 %v995, 16
  %v1259 = vrot.slane %v1257, 7
  %v1260 = vshll.u32 %v995, 16
  %v1262 = vor.u32 %v1259, %v1260
  %v1263 = vrot.slane %v1259, 4
  %v1265 = vshrl.u32 %v996, 16
  %v1267 = vrot.slane %v1265, 7
  %v1268 = vshll.u32 %v996, 16
  %v1270 = vor.u32 %v1267, %v1268
  %v1271 = vsel %vm1034, %v1263, %v1270
  %v1272 = vrot.slane %v1267, 4
  %v1274 = vshrl.u32 %v997, 16
  %v1276 = vrot.slane %v1274, 7
  %v1277 = vshll.u32 %v997, 16
  %v1279 = vor.u32 %v1276, %v1277
  %v1280 = vrot.slane %v1276, 4
  %v1282 = vshrl.u32 %v998, 16
  %v1284 = vrot.slane %v1282, 7
  %v1285 = vshll.u32 %v998, 16
  %v1287 = vor.u32 %v1284, %v1285
  %v1288 = vsel %vm1034, %v1280, %v1287
  %v1289 = vrot.slane %v1284, 4
  %v1291 = vshrl.u32 %v999, 16
  %v1293 = vrot.slane %v1291, 7
  %v1294 = vshll.u32 %v999, 16
  %v1296 = vor.u32 %v1293, %v1294
  %v1297 = vrot.slane %v1293, 4
  %v1299 = vshrl.u32 %v1000, 16
  %v1301 = vrot.slane %v1299, 7
  %v1302 = vshll.u32 %v1000, 16
  %v1304 = vor.u32 %v1301, %v1302
  %v1305 = vsel %vm1034, %v1297, %v1304
  %v1306 = vrot.slane %v1301, 4
  %v1308 = vshrl.u32 %v1001, 16
  %v1310 = vrot.slane %v1308, 7
  %v1311 = vshll.u32 %v1001, 16
  %v1313 = vor.u32 %v1310, %v1311
  %v1314 = vrot.slane %v1310, 4
  %v1316 = vshrl.u32 %v1002, 16
  %v1318 = vrot.slane %v1316, 7
  %v1319 = vshll.u32 %v1002, 16
  %v1321 = vor.u32 %v1318, %v1319
  %v1322 = vsel %vm1034, %v1314, %v1321
  %v1323 = vrot.slane %v1318, 4
  %v1325 = vshrl.u32 %v1003, 16
  %v1327 = vrot.slane %v1325, 7
  %v1328 = vshll.u32 %v1003, 16
  %v1330 = vor.u32 %v1327, %v1328
  %v1331 = vrot.slane %v1327, 4
  %v1333 = vshrl.u32 %v1004, 16
  %v1335 = vrot.slane %v1333, 7
  %v1336 = vshll.u32 %v1004, 16
  %v1338 = vor.u32 %v1335, %v1336
  %v1339 = vsel %vm1034, %v1331, %v1338
  %v1340 = vrot.slane %v1335, 4
  %v1342 = vshrl.u32 %v1005, 16
  %v1344 = vrot.slane %v1342, 7
  %v1345 = vshll.u32 %v1005, 16
  %v1347 = vor.u32 %v1344, %v1345
  %v1348 = vrot.slane %v1344, 4
  %v1350 = vshrl.u32 %v1006, 16
  %v1352 = vrot.slane %v1350, 7
  %v1353 = vshll.u32 %v1006, 16
  %v1355 = vor.u32 %v1352, %v1353
  %v1356 = vsel %vm1034, %v1348, %v1355
  %v1357 = vrot.slane %v1352, 4
  %v1359 = vshrl.u32 %v1007, 16
  %v1361 = vrot.slane %v1359, 7
  %v1362 = vshll.u32 %v1007, 16
  %v1364 = vor.u32 %v1361, %v1362
  %v1365 = vrot.slane %v1361, 4
  %v1367 = vshrl.u32 %v1008, 16
  %v1369 = vrot.slane %v1367, 7
  %v1370 = vshll.u32 %v1008, 16
  %v1372 = vor.u32 %v1369, %v1370
  %v1373 = vsel %vm1034, %v1365, %v1372
  %v1374 = vrot.slane %v1369, 4
  %v1376 = vshrl.u32 %v1009, 16
  %v1378 = vrot.slane %v1376, 7
  %v1379 = vshll.u32 %v1009, 16
  %v1381 = vor.u32 %v1378, %v1379
  %v1382 = vrot.slane %v1378, 4
  %v1384 = vshrl.u32 %v1010, 16
  %v1386 = vrot.slane %v1384, 7
  %v1387 = vshll.u32 %v1010, 16
  %v1389 = vor.u32 %v1386, %v1387
  %v1390 = vsel %vm1034, %v1382, %v1389
  %v1391 = vrot.slane %v1386, 4
  %v1393 = vshrl.u32 %v1011, 16
  %v1395 = vrot.slane %v1393, 7
  %v1396 = vshll.u32 %v1011, 16
  %v1398 = vor.u32 %v1395, %v1396
  %v1399 = vrot.slane %v1395, 4
  %v1401 = vshrl.u32 %v1012, 16
  %v1403 = vrot.slane %v1401, 7
  %v1404 = vshll.u32 %v1012, 16
  %v1406 = vor.u32 %v1403, %v1404
  %v1407 = vsel %vm1034, %v1399, %v1406
  %v1408 = vrot.slane %v1403, 4
  %v1410 = vshrl.u32 %v1013, 16
  %v1412 = vrot.slane %v1410, 7
  %v1413 = vshll.u32 %v1013, 16
  %v1415 = vor.u32 %v1412, %v1413
  %v1416 = vrot.slane %v1412, 4
  %v1418 = vshrl.u32 %v1014, 16
  %v1420 = vrot.slane %v1418, 7
  %v1421 = vshll.u32 %v1014, 16
  %v1423 = vor.u32 %v1420, %v1421
  %v1424 = vsel %vm1034, %v1416, %v1423
  %v1425 = vrot.slane %v1420, 4
  %v1427 = vshrl.u32 %v1015, 16
  %v1429 = vrot.slane %v1427, 7
  %v1430 = vshll.u32 %v1015, 16
  %v1432 = vor.u32 %v1429, %v1430
  %v1433 = vrot.slane %v1429, 4
  %v1435 = vshrl.u32 %v1016, 16
  %v1437 = vrot.slane %v1435, 7
  %v1438 = vshll.u32 %v1016, 16
  %v1440 = vor.u32 %v1437, %v1438
  %v1441 = vsel %vm1034, %v1433, %v1440
  %v1442 = vrot.slane %v1437, 4
  %v1444 = vshrl.u32 %v1017, 16
  %v1446 = vrot.slane %v1444, 7
  %v1447 = vshll.u32 %v1017, 16
  %v1449 = vor.u32 %v1446, %v1447
  %v1450 = vrot.slane %v1446, 4
  %v1452 = vshrl.u32 %v1018, 16
  %v1454 = vrot.slane %v1452, 7
  %v1455 = vshll.u32 %v1018, 16
  %v1457 = vor.u32 %v1454, %v1455
  %v1458 = vsel %vm1034, %v1450, %v1457
  %v1459 = vrot.slane %v1454, 4
  %v1461 = vshrl.u32 %v1019, 16
  %v1463 = vrot.slane %v1461, 7
  %v1464 = vshll.u32 %v1019, 16
  %v1466 = vor.u32 %v1463, %v1464
  %v1467 = vrot.slane %v1463, 4
  %v1469 = vshrl.u32 %v1020, 16
  %v1471 = vrot.slane %v1469, 7
  %v1472 = vshll.u32 %v1020, 16
  %v1474 = vor.u32 %v1471, %v1472
  %v1475 = vsel %vm1034, %v1467, %v1474
  %v1476 = vrot.slane %v1471, 4
  %v1478 = vshrl.u32 %v1021, 16
  %v1480 = vrot.slane %v1478, 7
  %v1481 = vshll.u32 %v1021, 16
  %v1483 = vor.u32 %v1480, %v1481
  %v1484 = vrot.slane %v1480, 4
  %v1486 = vshrl.u32 %v1022, 16
  %v1488 = vrot.slane %v1486, 7
  %v1489 = vshll.u32 %v1022, 16
  %v1491 = vor.u32 %v1488, %v1489
  %v1492 = vsel %vm1034, %v1484, %v1491
  %v1493 = vrot.slane %v1488, 4
  %v1495 = vshrl.u32 %v1023, 16
  %v1497 = vrot.slane %v1495, 7
  %v1498 = vshll.u32 %v1023, 16
  %v1500 = vor.u32 %v1497, %v1498
  %v1501 = vrot.slane %v1497, 4
  %v1503 = vshrl.u32 %v1024, 16
  %v1505 = vrot.slane %v1503, 7
  %v1506 = vshll.u32 %v1024, 16
  %v1508 = vor.u32 %v1505, %v1506
  %v1509 = vsel %vm1034, %v1501, %v1508
  %v1510 = vrot.slane %v1505, 4
  %v1512 = vshrl.u32 %v1025, 16
  %v1514 = vrot.slane %v1512, 7
  %v1515 = vshll.u32 %v1025, 16
  %v1517 = vor.u32 %v1514, %v1515
  %v1518 = vrot.slane %v1514, 4
  %v1520 = vshrl.u32 %v1026, 16
  %v1522 = vrot.slane %v1520, 7
  %v1523 = vshll.u32 %v1026, 16
  %v1525 = vor.u32 %v1522, %v1523
  %v1526 = vsel %vm1034, %v1518, %v1525
  %v1527 = vrot.slane %v1522, 4
  %v1529 = vshrl.u32 %v1027, 16
  %v1531 = vrot.slane %v1529, 7
  %v1532 = vshll.u32 %v1027, 16
  %v1534 = vor.u32 %v1531, %v1532
  %v1535 = vrot.slane %v1531, 4
  %v1537 = vshrl.u32 %v1028, 16
  %v1539 = vrot.slane %v1537, 7
  %v1540 = vshll.u32 %v1028, 16
  %v1542 = vor.u32 %v1539, %v1540
  %v1543 = vsel %vm1034, %v1535, %v1542
  %v1544 = vrot.slane %v1539, 4
  %v1546 = vshrl.u32 %v1029, 16
  %v1548 = vrot.slane %v1546, 7
  %v1549 = vshll.u32 %v1029, 16
  %v1551 = vor.u32 %v1548, %v1549
  %v1552 = vrot.slane %v1548, 4
  %v1554 = vshrl.u32 %v1030, 16
  %v1556 = vrot.slane %v1554, 7
  %v1557 = vshll.u32 %v1030, 16
  %v1559 = vor.u32 %v1556, %v1557
  %v1560 = vsel %vm1034, %v1552, %v1559
  %v1561 = vrot.slane %v1556, 4
  %v1563 = vshrl.u32 %v1031, 16
  %v1565 = vrot.slane %v1563, 7
  %v1566 = vshll.u32 %v1031, 16
  %v1568 = vor.u32 %v1565, %v1566
  %v1569 = vrot.slane %v1565, 4
  %v1571 = vshrl.u32 %v1032, 16
  %v1573 = vrot.slane %v1571, 7
  %v1574 = vshll.u32 %v1032, 16
  %v1576 = vor.u32 %v1573, %v1574
  %v1577 = vsel %vm1034, %v1569, %v1576
  %v1578 = vrot.slane %v1573, 4
  %s1675 = scalar_lea.vmem [#allocation2], 12
  %vm1676 = vcmask 125952
  %vm1677 = vmand %vm1676, %vm153
  %v1678 = vld [vmem:[%s1675] sm:$0xf]
  %v1679 = vsel %vm1677, %v1041, %v1678
  %1680 = vst [vmem:[%s1675] sm:$0xf] %v1679
  %1681 = vst.msk [vmem:[%s1675 + $0x4] sm:$0xf] %vm27, %v1050
  %v1682 = vld [vmem:[%s1675 + $0x8] sm:$0x1]
  %v1683 = vsel %vm44, %v1051, %v1682
  %1684 = vst [vmem:[%s1675 + $0x8] sm:$0x1] %v1683
  %v1685 = vld [vmem:[%s1675 + $0xc] sm:$0xf]
  %v1686 = vsel %vm1677, %v1058, %v1685
  %1687 = vst [vmem:[%s1675 + $0xc] sm:$0xf] %v1686
  %1688 = vst.msk [vmem:[%s1675 + $0x10] sm:$0xf] %vm27, %v1067
  %v1689 = vld [vmem:[%s1675 + $0x14] sm:$0x1]
  %v1690 = vsel %vm44, %v1068, %v1689
  %1691 = vst [vmem:[%s1675 + $0x14] sm:$0x1] %v1690
  %v1692 = vld [vmem:[%s1675 + $0x18] sm:$0xf]
  %v1693 = vsel %vm1677, %v1075, %v1692
  %1694 = vst [vmem:[%s1675 + $0x18] sm:$0xf] %v1693
  %1695 = vst.msk [vmem:[%s1675 + $0x1c] sm:$0xf] %vm27, %v1084
  %v1696 = vld [vmem:[%s1675 + $0x20] sm:$0x1]
  %v1697 = vsel %vm44, %v1085, %v1696
  %1698 = vst [vmem:[%s1675 + $0x20] sm:$0x1] %v1697
  %v1699 = vld [vmem:[%s1675 + $0x24] sm:$0xf]
  %v1700 = vsel %vm1677, %v1092, %v1699
  %1701 = vst [vmem:[%s1675 + $0x24] sm:$0xf] %v1700
  %1702 = vst.msk [vmem:[%s1675 + $0x28] sm:$0xf] %vm27, %v1101
  %v1703 = vld [vmem:[%s1675 + $0x2c] sm:$0x1]
  %v1704 = vsel %vm44, %v1102, %v1703
  %1705 = vst [vmem:[%s1675 + $0x2c] sm:$0x1] %v1704
  %v1706 = vld [vmem:[%s1675 + $0x30] sm:$0xf]
  %v1707 = vsel %vm1677, %v1109, %v1706
  %1708 = vst [vmem:[%s1675 + $0x30] sm:$0xf] %v1707
  %1709 = vst.msk [vmem:[%s1675 + $0x34] sm:$0xf] %vm27, %v1118
  %v1710 = vld [vmem:[%s1675 + $0x38] sm:$0x1]
  %v1711 = vsel %vm44, %v1119, %v1710
  %1712 = vst [vmem:[%s1675 + $0x38] sm:$0x1] %v1711
  %v1713 = vld [vmem:[%s1675 + $0x3c] sm:$0xf]
  %v1714 = vsel %vm1677, %v1126, %v1713
  %1715 = vst [vmem:[%s1675 + $0x3c] sm:$0xf] %v1714
  %1716 = vst.msk [vmem:[%s1675 + $0x40] sm:$0xf] %vm27, %v1135
  %v1717 = vld [vmem:[%s1675 + $0x44] sm:$0x1]
  %v1718 = vsel %vm44, %v1136, %v1717
  %1719 = vst [vmem:[%s1675 + $0x44] sm:$0x1] %v1718
  %v1720 = vld [vmem:[%s1675 + $0x48] sm:$0xf]
  %v1721 = vsel %vm1677, %v1143, %v1720
  %1722 = vst [vmem:[%s1675 + $0x48] sm:$0xf] %v1721
  %1723 = vst.msk [vmem:[%s1675 + $0x4c] sm:$0xf] %vm27, %v1152
  %v1724 = vld [vmem:[%s1675 + $0x50] sm:$0x1]
  %v1725 = vsel %vm44, %v1153, %v1724
  %1726 = vst [vmem:[%s1675 + $0x50] sm:$0x1] %v1725
  %v1727 = vld [vmem:[%s1675 + $0x54] sm:$0xf]
  %v1728 = vsel %vm1677, %v1160, %v1727
  %1729 = vst [vmem:[%s1675 + $0x54] sm:$0xf] %v1728
  %1730 = vst.msk [vmem:[%s1675 + $0x58] sm:$0xf] %vm27, %v1169
  %v1731 = vld [vmem:[%s1675 + $0x5c] sm:$0x1]
  %v1732 = vsel %vm44, %v1170, %v1731
  %1733 = vst [vmem:[%s1675 + $0x5c] sm:$0x1] %v1732
  %v1734 = vld [vmem:[%s1675 + $0x60] sm:$0xf]
  %v1735 = vsel %vm1677, %v1177, %v1734
  %1736 = vst [vmem:[%s1675 + $0x60] sm:$0xf] %v1735
  %1737 = vst.msk [vmem:[%s1675 + $0x64] sm:$0xf] %vm27, %v1186
  %v1738 = vld [vmem:[%s1675 + $0x68] sm:$0x1]
  %v1739 = vsel %vm44, %v1187, %v1738
  %1740 = vst [vmem:[%s1675 + $0x68] sm:$0x1] %v1739
  %v1741 = vld [vmem:[%s1675 + $0x6c] sm:$0xf]
  %v1742 = vsel %vm1677, %v1194, %v1741
  %1743 = vst [vmem:[%s1675 + $0x6c] sm:$0xf] %v1742
  %1744 = vst.msk [vmem:[%s1675 + $0x70] sm:$0xf] %vm27, %v1203
  %v1745 = vld [vmem:[%s1675 + $0x74] sm:$0x1]
  %v1746 = vsel %vm44, %v1204, %v1745
  %1747 = vst [vmem:[%s1675 + $0x74] sm:$0x1] %v1746
  %v1748 = vld [vmem:[%s1675 + $0x78] sm:$0xf]
  %v1749 = vsel %vm1677, %v1211, %v1748
  %1750 = vst [vmem:[%s1675 + $0x78] sm:$0xf] %v1749
  %1751 = vst.msk [vmem:[%s1675 + $0x7c] sm:$0xf] %vm27, %v1220
  %v1752 = vld [vmem:[%s1675 + $0x80] sm:$0x1]
  %v1753 = vsel %vm44, %v1221, %v1752
  %1754 = vst [vmem:[%s1675 + $0x80] sm:$0x1] %v1753
  %v1755 = vld [vmem:[%s1675 + $0x84] sm:$0xf]
  %v1756 = vsel %vm1677, %v1228, %v1755
  %1757 = vst [vmem:[%s1675 + $0x84] sm:$0xf] %v1756
  %1758 = vst.msk [vmem:[%s1675 + $0x88] sm:$0xf] %vm27, %v1237
  %v1759 = vld [vmem:[%s1675 + $0x8c] sm:$0x1]
  %v1760 = vsel %vm44, %v1238, %v1759
  %1761 = vst [vmem:[%s1675 + $0x8c] sm:$0x1] %v1760
  %v1762 = vld [vmem:[%s1675 + $0x90] sm:$0xf]
  %v1763 = vsel %vm1677, %v1245, %v1762
  %1764 = vst [vmem:[%s1675 + $0x90] sm:$0xf] %v1763
  %1765 = vst.msk [vmem:[%s1675 + $0x94] sm:$0xf] %vm27, %v1254
  %v1766 = vld [vmem:[%s1675 + $0x98] sm:$0x1]
  %v1767 = vsel %vm44, %v1255, %v1766
  %1768 = vst [vmem:[%s1675 + $0x98] sm:$0x1] %v1767
  %v1769 = vld [vmem:[%s1675 + $0x9c] sm:$0xf]
  %v1770 = vsel %vm1677, %v1262, %v1769
  %1771 = vst [vmem:[%s1675 + $0x9c] sm:$0xf] %v1770
  %1772 = vst.msk [vmem:[%s1675 + $0xa0] sm:$0xf] %vm27, %v1271
  %v1773 = vld [vmem:[%s1675 + $0xa4] sm:$0x1]
  %v1774 = vsel %vm44, %v1272, %v1773
  %1775 = vst [vmem:[%s1675 + $0xa4] sm:$0x1] %v1774
  %v1776 = vld [vmem:[%s1675 + $0xa8] sm:$0xf]
  %v1777 = vsel %vm1677, %v1279, %v1776
  %1778 = vst [vmem:[%s1675 + $0xa8] sm:$0xf] %v1777
  %1779 = vst.msk [vmem:[%s1675 + $0xac] sm:$0xf] %vm27, %v1288
  %v1780 = vld [vmem:[%s1675 + $0xb0] sm:$0x1]
  %v1781 = vsel %vm44, %v1289, %v1780
  %1782 = vst [vmem:[%s1675 + $0xb0] sm:$0x1] %v1781
  %v1783 = vld [vmem:[%s1675 + $0xb4] sm:$0xf]
  %v1784 = vsel %vm1677, %v1296, %v1783
  %1785 = vst [vmem:[%s1675 + $0xb4] sm:$0xf] %v1784
  %1786 = vst.msk [vmem:[%s1675 + $0xb8] sm:$0xf] %vm27, %v1305
  %v1787 = vld [vmem:[%s1675 + $0xbc] sm:$0x1]
  %v1788 = vsel %vm44, %v1306, %v1787
  %1789 = vst [vmem:[%s1675 + $0xbc] sm:$0x1] %v1788
  %v1790 = vld [vmem:[%s1675 + $0xd8] sm:$0xf]
  %v1791 = vsel %vm1677, %v1313, %v1790
  %1792 = vst [vmem:[%s1675 + $0xd8] sm:$0xf] %v1791
  %1793 = vst.msk [vmem:[%s1675 + $0xdc] sm:$0xf] %vm27, %v1322
  %v1794 = vld [vmem:[%s1675 + $0xe0] sm:$0x1]
  %v1795 = vsel %vm44, %v1323, %v1794
  %1796 = vst [vmem:[%s1675 + $0xe0] sm:$0x1] %v1795
  %v1797 = vld [vmem:[%s1675 + $0xe4] sm:$0xf]
  %v1798 = vsel %vm1677, %v1330, %v1797
  %1799 = vst [vmem:[%s1675 + $0xe4] sm:$0xf] %v1798
  %1800 = vst.msk [vmem:[%s1675 + $0xe8] sm:$0xf] %vm27, %v1339
  %v1801 = vld [vmem:[%s1675 + $0xec] sm:$0x1]
  %v1802 = vsel %vm44, %v1340, %v1801
  %1803 = vst [vmem:[%s1675 + $0xec] sm:$0x1] %v1802
  %v1804 = vld [vmem:[%s1675 + $0xf0] sm:$0xf]
  %v1805 = vsel %vm1677, %v1347, %v1804
  %1806 = vst [vmem:[%s1675 + $0xf0] sm:$0xf] %v1805
  %1807 = vst.msk [vmem:[%s1675 + $0xf4] sm:$0xf] %vm27, %v1356
  %v1808 = vld [vmem:[%s1675 + $0xf8] sm:$0x1]
  %v1809 = vsel %vm44, %v1357, %v1808
  %1810 = vst [vmem:[%s1675 + $0xf8] sm:$0x1] %v1809
  %v1811 = vld [vmem:[%s1675 + $0xfc] sm:$0xf]
  %v1812 = vsel %vm1677, %v1364, %v1811
  %1813 = vst [vmem:[%s1675 + $0xfc] sm:$0xf] %v1812
  %1814 = vst.msk [vmem:[%s1675 + $0x100] sm:$0xf] %vm27, %v1373
  %v1815 = vld [vmem:[%s1675 + $0x104] sm:$0x1]
  %v1816 = vsel %vm44, %v1374, %v1815
  %1817 = vst [vmem:[%s1675 + $0x104] sm:$0x1] %v1816
  %v1818 = vld [vmem:[%s1675 + $0x108] sm:$0xf]
  %v1819 = vsel %vm1677, %v1381, %v1818
  %1820 = vst [vmem:[%s1675 + $0x108] sm:$0xf] %v1819
  %1821 = vst.msk [vmem:[%s1675 + $0x10c] sm:$0xf] %vm27, %v1390
  %v1822 = vld [vmem:[%s1675 + $0x110] sm:$0x1]
  %v1823 = vsel %vm44, %v1391, %v1822
  %1824 = vst [vmem:[%s1675 + $0x110] sm:$0x1] %v1823
  %v1825 = vld [vmem:[%s1675 + $0x114] sm:$0xf]
  %v1826 = vsel %vm1677, %v1398, %v1825
  %1827 = vst [vmem:[%s1675 + $0x114] sm:$0xf] %v1826
  %1828 = vst.msk [vmem:[%s1675 + $0x118] sm:$0xf] %vm27, %v1407
  %v1829 = vld [vmem:[%s1675 + $0x11c] sm:$0x1]
  %v1830 = vsel %vm44, %v1408, %v1829
  %1831 = vst [vmem:[%s1675 + $0x11c] sm:$0x1] %v1830
  %v1832 = vld [vmem:[%s1675 + $0x120] sm:$0xf]
  %v1833 = vsel %vm1677, %v1415, %v1832
  %1834 = vst [vmem:[%s1675 + $0x120] sm:$0xf] %v1833
  %1835 = vst.msk [vmem:[%s1675 + $0x124] sm:$0xf] %vm27, %v1424
  %v1836 = vld [vmem:[%s1675 + $0x128] sm:$0x1]
  %v1837 = vsel %vm44, %v1425, %v1836
  %1838 = vst [vmem:[%s1675 + $0x128] sm:$0x1] %v1837
  %v1839 = vld [vmem:[%s1675 + $0x12c] sm:$0xf]
  %v1840 = vsel %vm1677, %v1432, %v1839
  %1841 = vst [vmem:[%s1675 + $0x12c] sm:$0xf] %v1840
  %1842 = vst.msk [vmem:[%s1675 + $0x130] sm:$0xf] %vm27, %v1441
  %v1843 = vld [vmem:[%s1675 + $0x134] sm:$0x1]
  %v1844 = vsel %vm44, %v1442, %v1843
  %1845 = vst [vmem:[%s1675 + $0x134] sm:$0x1] %v1844
  %v1846 = vld [vmem:[%s1675 + $0x138] sm:$0xf]
  %v1847 = vsel %vm1677, %v1449, %v1846
  %1848 = vst [vmem:[%s1675 + $0x138] sm:$0xf] %v1847
  %1849 = vst.msk [vmem:[%s1675 + $0x13c] sm:$0xf] %vm27, %v1458
  %v1850 = vld [vmem:[%s1675 + $0x140] sm:$0x1]
  %v1851 = vsel %vm44, %v1459, %v1850
  %1852 = vst [vmem:[%s1675 + $0x140] sm:$0x1] %v1851
  %v1853 = vld [vmem:[%s1675 + $0x144] sm:$0xf]
  %v1854 = vsel %vm1677, %v1466, %v1853
  %1855 = vst [vmem:[%s1675 + $0x144] sm:$0xf] %v1854
  %1856 = vst.msk [vmem:[%s1675 + $0x148] sm:$0xf] %vm27, %v1475
  %v1857 = vld [vmem:[%s1675 + $0x14c] sm:$0x1]
  %v1858 = vsel %vm44, %v1476, %v1857
  %1859 = vst [vmem:[%s1675 + $0x14c] sm:$0x1] %v1858
  %v1860 = vld [vmem:[%s1675 + $0x150] sm:$0xf]
  %v1861 = vsel %vm1677, %v1483, %v1860
  %1862 = vst [vmem:[%s1675 + $0x150] sm:$0xf] %v1861
  %1863 = vst.msk [vmem:[%s1675 + $0x154] sm:$0xf] %vm27, %v1492
  %v1864 = vld [vmem:[%s1675 + $0x158] sm:$0x1]
  %v1865 = vsel %vm44, %v1493, %v1864
  %1866 = vst [vmem:[%s1675 + $0x158] sm:$0x1] %v1865
  %v1867 = vld [vmem:[%s1675 + $0x15c] sm:$0xf]
  %v1868 = vsel %vm1677, %v1500, %v1867
  %1869 = vst [vmem:[%s1675 + $0x15c] sm:$0xf] %v1868
  %1870 = vst.msk [vmem:[%s1675 + $0x160] sm:$0xf] %vm27, %v1509
  %v1871 = vld [vmem:[%s1675 + $0x164] sm:$0x1]
  %v1872 = vsel %vm44, %v1510, %v1871
  %1873 = vst [vmem:[%s1675 + $0x164] sm:$0x1] %v1872
  %v1874 = vld [vmem:[%s1675 + $0x168] sm:$0xf]
  %v1875 = vsel %vm1677, %v1517, %v1874
  %1876 = vst [vmem:[%s1675 + $0x168] sm:$0xf] %v1875
  %1877 = vst.msk [vmem:[%s1675 + $0x16c] sm:$0xf] %vm27, %v1526
  %v1878 = vld [vmem:[%s1675 + $0x170] sm:$0x1]
  %v1879 = vsel %vm44, %v1527, %v1878
  %1880 = vst [vmem:[%s1675 + $0x170] sm:$0x1] %v1879
  %v1881 = vld [vmem:[%s1675 + $0x174] sm:$0xf]
  %v1882 = vsel %vm1677, %v1534, %v1881
  %1883 = vst [vmem:[%s1675 + $0x174] sm:$0xf] %v1882
  %1884 = vst.msk [vmem:[%s1675 + $0x178] sm:$0xf] %vm27, %v1543
  %v1885 = vld [vmem:[%s1675 + $0x17c] sm:$0x1]
  %v1886 = vsel %vm44, %v1544, %v1885
  %1887 = vst [vmem:[%s1675 + $0x17c] sm:$0x1] %v1886
  %v1888 = vld [vmem:[%s1675 + $0x180] sm:$0xf]
  %v1889 = vsel %vm1677, %v1551, %v1888
  %1890 = vst [vmem:[%s1675 + $0x180] sm:$0xf] %v1889
  %1891 = vst.msk [vmem:[%s1675 + $0x184] sm:$0xf] %vm27, %v1560
  %v1892 = vld [vmem:[%s1675 + $0x188] sm:$0x1]
  %v1893 = vsel %vm44, %v1561, %v1892
  %1894 = vst [vmem:[%s1675 + $0x188] sm:$0x1] %v1893
  %v1895 = vld [vmem:[%s1675 + $0x18c] sm:$0xf]
  %v1896 = vsel %vm1677, %v1568, %v1895
  %1897 = vst [vmem:[%s1675 + $0x18c] sm:$0xf] %v1896
  %1898 = vst.msk [vmem:[%s1675 + $0x190] sm:$0xf] %vm27, %v1577
  %v1899 = vld [vmem:[%s1675 + $0x194] sm:$0x1]
  %v1900 = vsel %vm44, %v1578, %v1899
  %1901 = vst [vmem:[%s1675 + $0x194] sm:$0x1] %v1900
  %v1902 = vld [vmem:[#allocation2] sm:$0xf]
  %v1903 = vld [vmem:[#allocation2 + $0x4] sm:$0xf]
  %v1904 = vld [vmem:[#allocation2 + $0xc] sm:$0xf]
  %v1905 = vld [vmem:[#allocation2 + $0x10] sm:$0xf]
  %v1906 = vld [vmem:[#allocation2 + $0x18] sm:$0xf]
  %v1907 = vld [vmem:[#allocation2 + $0x1c] sm:$0xf]
  %v1908 = vld [vmem:[#allocation2 + $0x24] sm:$0xf]
  %v1909 = vld [vmem:[#allocation2 + $0x28] sm:$0xf]
  %v1910 = vld [vmem:[#allocation2 + $0x30] sm:$0xf]
  %v1911 = vld [vmem:[#allocation2 + $0x34] sm:$0xf]
  %v1912 = vld [vmem:[#allocation2 + $0x3c] sm:$0xf]
  %v1913 = vld [vmem:[#allocation2 + $0x40] sm:$0xf]
  %v1914 = vld [vmem:[#allocation2 + $0x48] sm:$0xf]
  %v1915 = vld [vmem:[#allocation2 + $0x4c] sm:$0xf]
  %v1916 = vld [vmem:[#allocation2 + $0x54] sm:$0xf]
  %v1917 = vld [vmem:[#allocation2 + $0x58] sm:$0xf]
  %v1918 = vld [vmem:[#allocation2 + $0x60] sm:$0xf]
  %v1919 = vld [vmem:[#allocation2 + $0x64] sm:$0xf]
  %v1920 = vld [vmem:[#allocation2 + $0x6c] sm:$0xf]
  %v1921 = vld [vmem:[#allocation2 + $0x70] sm:$0xf]
  %v1922 = vld [vmem:[#allocation2 + $0x78] sm:$0xf]
  %v1923 = vld [vmem:[#allocation2 + $0x7c] sm:$0xf]
  %v1924 = vld [vmem:[#allocation2 + $0x84] sm:$0xf]
  %v1925 = vld [vmem:[#allocation2 + $0x88] sm:$0xf]
  %v1926 = vld [vmem:[#allocation2 + $0x90] sm:$0xf]
  %v1927 = vld [vmem:[#allocation2 + $0x94] sm:$0xf]
  %v1928 = vld [vmem:[#allocation2 + $0x9c] sm:$0xf]
  %v1929 = vld [vmem:[#allocation2 + $0xa0] sm:$0xf]
  %v1930 = vld [vmem:[#allocation2 + $0xa8] sm:$0xf]
  %v1931 = vld [vmem:[#allocation2 + $0xac] sm:$0xf]
  %v1932 = vld [vmem:[#allocation2 + $0xb4] sm:$0xf]
  %v1933 = vld [vmem:[#allocation2 + $0xb8] sm:$0xf]
  %v1934 = vld [vmem:[#allocation2 + $0xc0] sm:$0xf]
  %v1935 = vld [vmem:[#allocation2 + $0xc4] sm:$0xf]
  %v1936 = vld [vmem:[#allocation2 + $0xcc] sm:$0xf]
  %v1937 = vld [vmem:[#allocation2 + $0xd0] sm:$0xf]
  %v1938 = vld [vmem:[#allocation2 + $0xd8] sm:$0xf]
  %v1939 = vld [vmem:[#allocation2 + $0xdc] sm:$0xf]
  %v1940 = vld [vmem:[#allocation2 + $0xe4] sm:$0xf]
  %v1941 = vld [vmem:[#allocation2 + $0xe8] sm:$0xf]
  %v1942 = vld [vmem:[#allocation2 + $0xf0] sm:$0xf]
  %v1943 = vld [vmem:[#allocation2 + $0xf4] sm:$0xf]
  %v1944 = vld [vmem:[#allocation2 + $0xfc] sm:$0xf]
  %v1945 = vld [vmem:[#allocation2 + $0x100] sm:$0xf]
  %v1946 = vld [vmem:[#allocation2 + $0x108] sm:$0xf]
  %v1947 = vld [vmem:[#allocation2 + $0x10c] sm:$0xf]
  %v1948 = vld [vmem:[#allocation2 + $0x114] sm:$0xf]
  %v1949 = vld [vmem:[#allocation2 + $0x118] sm:$0xf]
  %v1950 = vld [vmem:[#allocation2 + $0x120] sm:$0xf]
  %v1951 = vld [vmem:[#allocation2 + $0x124] sm:$0xf]
  %v1952 = vld [vmem:[#allocation2 + $0x12c] sm:$0xf]
  %v1953 = vld [vmem:[#allocation2 + $0x130] sm:$0xf]
  %v1954 = vld [vmem:[#allocation2 + $0x138] sm:$0xf]
  %v1955 = vld [vmem:[#allocation2 + $0x13c] sm:$0xf]
  %v1956 = vld [vmem:[#allocation2 + $0x144] sm:$0xf]
  %v1957 = vld [vmem:[#allocation2 + $0x148] sm:$0xf]
  %v1958 = vld [vmem:[#allocation2 + $0x150] sm:$0xf]
  %v1959 = vld [vmem:[#allocation2 + $0x154] sm:$0xf]
  %v1960 = vld [vmem:[#allocation2 + $0x15c] sm:$0xf]
  %v1961 = vld [vmem:[#allocation2 + $0x160] sm:$0xf]
  %v1962 = vld [vmem:[#allocation2 + $0x168] sm:$0xf]
  %v1963 = vld [vmem:[#allocation2 + $0x16c] sm:$0xf]
  %v1964 = vld [vmem:[#allocation2 + $0x174] sm:$0xf]
  %v1965 = vld [vmem:[#allocation2 + $0x178] sm:$0xf]
  %v1966 = vld [vmem:[#allocation2 + $0x180] sm:$0xf]
  %v1967 = vld [vmem:[#allocation2 + $0x184] sm:$0xf]
  %v1968 = vld [vmem:[#allocation2 + $0x18c] sm:$0xf]
  %v1969 = vld [vmem:[#allocation2 + $0x190] sm:$0xf]
  %v1970 = vld [vmem:[#allocation2 + $0x198] sm:$0xf]
  %v1971 = vld [vmem:[#allocation2 + $0x19c] sm:$0xf]
  %v1972 = vld [vmem:[#allocation2 + $0x1a4] sm:$0xf]
  %v1973 = vld [vmem:[#allocation2 + $0x1a8] sm:$0xf]
  %v1974 = vld [vmem:[%s4] sm:$0xf]
  %v1975 = vld [vmem:[%s4 + $0x4] sm:$0xf]
  %s1976 = scalar_lea.vmem %s4, 24
  %v1977 = vld [vmem:[%s1976] sm:$0xf]
  %v1978 = vld [vmem:[%s1976 + $0x4] sm:$0xf]
  %v2043 = vunpack.c.l.b16 %v1904
  %v2044 = vunpack.c.l.b16 %v1905
  %v2045 = vunpack.c.l.b16 %v1906
  %v2046 = vunpack.c.l.b16 %v1907
  %v2047 = vunpack.c.l.b16 %v1908
  %v2048 = vunpack.c.l.b16 %v1909
  %v2049 = vunpack.c.l.b16 %v1910
  %v2050 = vunpack.c.l.b16 %v1911
  %v2051 = vunpack.c.l.b16 %v1912
  %v2052 = vunpack.c.l.b16 %v1913
  %v2053 = vunpack.c.l.b16 %v1914
  %v2054 = vunpack.c.l.b16 %v1915
  %v2055 = vunpack.c.l.b16 %v1916
  %v2056 = vunpack.c.l.b16 %v1917
  %v2057 = vunpack.c.l.b16 %v1918
  %v2058 = vunpack.c.l.b16 %v1919
  %v2059 = vunpack.c.l.b16 %v1920
  %v2060 = vunpack.c.l.b16 %v1921
  %v2061 = vunpack.c.l.b16 %v1922
  %v2062 = vunpack.c.l.b16 %v1923
  %v2063 = vunpack.c.l.b16 %v1924
  %v2064 = vunpack.c.l.b16 %v1925
  %v2065 = vunpack.c.l.b16 %v1926
  %v2066 = vunpack.c.l.b16 %v1927
  %v2067 = vunpack.c.l.b16 %v1928
  %v2068 = vunpack.c.l.b16 %v1929
  %v2069 = vunpack.c.l.b16 %v1930
  %v2070 = vunpack.c.l.b16 %v1931
  %v2071 = vunpack.c.l.b16 %v1932
  %v2072 = vunpack.c.l.b16 %v1933
  %v2073 = vunpack.c.l.b16 %v1934
  %v2074 = vunpack.c.l.b16 %v1935
  %v2075 = vunpack.c.l.b16 %v1940
  %v2076 = vunpack.c.l.b16 %v1941
  %v2077 = vunpack.c.l.b16 %v1942
  %v2078 = vunpack.c.l.b16 %v1943
  %v2079 = vunpack.c.l.b16 %v1944
  %v2080 = vunpack.c.l.b16 %v1945
  %v2081 = vunpack.c.l.b16 %v1946
  %v2082 = vunpack.c.l.b16 %v1947
  %v2083 = vunpack.c.l.b16 %v1948
  %v2084 = vunpack.c.l.b16 %v1949
  %v2085 = vunpack.c.l.b16 %v1950
  %v2086 = vunpack.c.l.b16 %v1951
  %v2087 = vunpack.c.l.b16 %v1952
  %v2088 = vunpack.c.l.b16 %v1953
  %v2089 = vunpack.c.l.b16 %v1954
  %v2090 = vunpack.c.l.b16 %v1955
  %v2091 = vunpack.c.l.b16 %v1956
  %v2092 = vunpack.c.l.b16 %v1957
  %v2093 = vunpack.c.l.b16 %v1958
  %v2094 = vunpack.c.l.b16 %v1959
  %v2095 = vunpack.c.l.b16 %v1960
  %v2096 = vunpack.c.l.b16 %v1961
  %v2097 = vunpack.c.l.b16 %v1962
  %v2098 = vunpack.c.l.b16 %v1963
  %v2099 = vunpack.c.l.b16 %v1964
  %v2100 = vunpack.c.l.b16 %v1965
  %v2101 = vunpack.c.l.b16 %v1966
  %v2102 = vunpack.c.l.b16 %v1967
  %v2103 = vunpack.c.l.b16 %v1968
  %v2104 = vunpack.c.l.b16 %v1969
  %v2105 = vunpack.c.l.b16 %v1970
  %v2106 = vunpack.c.l.b16 %v1971
  %v2107 = vpack.c.b16 %v2044, %v2043
  %v2108 = vpack.c.b16 %v2046, %v2045
  %v2109 = vpack.c.b16 %v2048, %v2047
  %v2110 = vpack.c.b16 %v2050, %v2049
  %v2111 = vpack.c.b16 %v2052, %v2051
  %v2112 = vpack.c.b16 %v2054, %v2053
  %v2113 = vpack.c.b16 %v2056, %v2055
  %v2114 = vpack.c.b16 %v2058, %v2057
  %v2115 = vpack.c.b16 %v2060, %v2059
  %v2116 = vpack.c.b16 %v2062, %v2061
  %v2117 = vpack.c.b16 %v2064, %v2063
  %v2118 = vpack.c.b16 %v2066, %v2065
  %v2119 = vpack.c.b16 %v2068, %v2067
  %v2120 = vpack.c.b16 %v2070, %v2069
  %v2121 = vpack.c.b16 %v2072, %v2071
  %v2122 = vpack.c.b16 %v2074, %v2073
  %v2123 = vpack.c.b16 %v2076, %v2075
  %v2124 = vpack.c.b16 %v2078, %v2077
  %v2125 = vpack.c.b16 %v2080, %v2079
  %v2126 = vpack.c.b16 %v2082, %v2081
  %v2127 = vpack.c.b16 %v2084, %v2083
  %v2128 = vpack.c.b16 %v2086, %v2085
  %v2129 = vpack.c.b16 %v2088, %v2087
  %v2130 = vpack.c.b16 %v2090, %v2089
  %v2131 = vpack.c.b16 %v2092, %v2091
  %v2132 = vpack.c.b16 %v2094, %v2093
  %v2133 = vpack.c.b16 %v2096, %v2095
  %v2134 = vpack.c.b16 %v2098, %v2097
  %v2135 = vpack.c.b16 %v2100, %v2099
  %v2136 = vpack.c.b16 %v2102, %v2101
  %v2137 = vpack.c.b16 %v2104, %v2103
  %v2138 = vpack.c.b16 %v2106, %v2105
  %v2141 = vunpack.c.l.b16 %v1977
  %v2142 = vunpack.c.l.b16 %v1978
  %v2143 = vpack.c.b16 %v2142, %v2141
  %vm2145 = vcmask 130048
  %v2147 = vsel %vm2145, %v2107, 0
  %v2150 = vsel %vm2145, %v2108, 0
  %v2153 = vsel %vm2145, %v2109, 0
  %v2156 = vsel %vm2145, %v2110, 0
  %v2159 = vsel %vm2145, %v2111, 0
  %v2162 = vsel %vm2145, %v2112, 0
  %v2165 = vsel %vm2145, %v2113, 0
  %v2168 = vsel %vm2145, %v2114, 0
  %v2171 = vsel %vm2145, %v2115, 0
  %v2174 = vsel %vm2145, %v2116, 0
  %v2177 = vsel %vm2145, %v2117, 0
  %v2180 = vsel %vm2145, %v2118, 0
  %v2183 = vsel %vm2145, %v2119, 0
  %v2186 = vsel %vm2145, %v2120, 0
  %v2189 = vsel %vm2145, %v2121, 0
  %v2192 = vsel %vm2145, %v2122, 0
  %v2195 = vsel %vm2145, %v2123, 0
  %v2198 = vsel %vm2145, %v2124, 0
  %v2201 = vsel %vm2145, %v2125, 0
  %v2204 = vsel %vm2145, %v2126, 0
  %v2207 = vsel %vm2145, %v2127, 0
  %v2210 = vsel %vm2145, %v2128, 0
  %v2213 = vsel %vm2145, %v2129, 0
  %v2216 = vsel %vm2145, %v2130, 0
  %v2219 = vsel %vm2145, %v2131, 0
  %v2222 = vsel %vm2145, %v2132, 0
  %v2225 = vsel %vm2145, %v2133, 0
  %v2228 = vsel %vm2145, %v2134, 0
  %v2231 = vsel %vm2145, %v2135, 0
  %v2234 = vsel %vm2145, %v2136, 0
  %v2237 = vsel %vm2145, %v2137, 0
  %v2240 = vsel %vm2145, %v2138, 0
  %2242 = vmatpush.bf16.msra.mxu0 0
  %2243 = vmatpush.bf16.msra.mxu0 0
  %2244 = vmatpush.bf16.msra.mxu0 0
  %2245 = vmatpush.bf16.msra.mxu0 0
  %2246 = vmatpush.bf16.msra.mxu0 0
  %2247 = vmatpush.bf16.msra.mxu0 0
  %2248 = vmatpush.bf16.msra.mxu0 0
  %2249 = vmatpush.bf16.msra.mxu0 %v2143
  %2250 = vmatmul.bf16.gmra.mxu0 %v2147
  %v2251 = vpop.f32.mrf.mxu0
  %v2252 = vadd.f32 0.0, %v2251
  %v2253 = vpop.f32.mrf.mxu0
  %v2254 = vadd.f32 0.0, %v2253
  %2255 = vmatmul.bf16.gmra.mxu0 %v2150
  %v2256 = vpop.f32.mrf.mxu0
  %v2257 = vadd.f32 0.0, %v2256
  %v2258 = vpop.f32.mrf.mxu0
  %v2259 = vadd.f32 0.0, %v2258
  %2260 = vmatmul.bf16.gmra.mxu0 %v2153
  %v2261 = vpop.f32.mrf.mxu0
  %v2262 = vadd.f32 0.0, %v2261
  %v2263 = vpop.f32.mrf.mxu0
  %v2264 = vadd.f32 0.0, %v2263
  %2265 = vmatmul.bf16.gmra.mxu0 %v2156
  %v2266 = vpop.f32.mrf.mxu0
  %v2267 = vadd.f32 0.0, %v2266
  %v2268 = vpop.f32.mrf.mxu0
  %v2269 = vadd.f32 0.0, %v2268
  %2270 = vmatmul.bf16.gmra.mxu0 %v2159
  %v2271 = vpop.f32.mrf.mxu0
  %v2272 = vadd.f32 0.0, %v2271
  %v2273 = vpop.f32.mrf.mxu0
  %v2274 = vadd.f32 0.0, %v2273
  %2275 = vmatmul.bf16.gmra.mxu0 %v2162
  %v2276 = vpop.f32.mrf.mxu0
  %v2277 = vadd.f32 0.0, %v2276
  %v2278 = vpop.f32.mrf.mxu0
  %v2279 = vadd.f32 0.0, %v2278
  %2280 = vmatmul.bf16.gmra.mxu0 %v2165
  %v2281 = vpop.f32.mrf.mxu0
  %v2282 = vadd.f32 0.0, %v2281
  %v2283 = vpop.f32.mrf.mxu0
  %v2284 = vadd.f32 0.0, %v2283
  %2285 = vmatmul.bf16.gmra.mxu0 %v2168
  %v2286 = vpop.f32.mrf.mxu0
  %v2287 = vadd.f32 0.0, %v2286
  %v2288 = vpop.f32.mrf.mxu0
  %v2289 = vadd.f32 0.0, %v2288
  %2290 = vmatmul.bf16.gmra.mxu0 %v2171
  %v2291 = vpop.f32.mrf.mxu0
  %v2292 = vadd.f32 0.0, %v2291
  %v2293 = vpop.f32.mrf.mxu0
  %v2294 = vadd.f32 0.0, %v2293
  %2295 = vmatmul.bf16.gmra.mxu0 %v2174
  %v2296 = vpop.f32.mrf.mxu0
  %v2297 = vadd.f32 0.0, %v2296
  %v2298 = vpop.f32.mrf.mxu0
  %v2299 = vadd.f32 0.0, %v2298
  %2300 = vmatmul.bf16.gmra.mxu0 %v2177
  %v2301 = vpop.f32.mrf.mxu0
  %v2302 = vadd.f32 0.0, %v2301
  %v2303 = vpop.f32.mrf.mxu0
  %v2304 = vadd.f32 0.0, %v2303
  %2305 = vmatmul.bf16.gmra.mxu0 %v2180
  %v2306 = vpop.f32.mrf.mxu0
  %v2307 = vadd.f32 0.0, %v2306
  %v2308 = vpop.f32.mrf.mxu0
  %v2309 = vadd.f32 0.0, %v2308
  %2310 = vmatmul.bf16.gmra.mxu0 %v2183
  %v2311 = vpop.f32.mrf.mxu0
  %v2312 = vadd.f32 0.0, %v2311
  %v2313 = vpop.f32.mrf.mxu0
  %v2314 = vadd.f32 0.0, %v2313
  %2315 = vmatmul.bf16.gmra.mxu0 %v2186
  %v2316 = vpop.f32.mrf.mxu0
  %v2317 = vadd.f32 0.0, %v2316
  %v2318 = vpop.f32.mrf.mxu0
  %v2319 = vadd.f32 0.0, %v2318
  %2320 = vmatmul.bf16.gmra.mxu0 %v2189
  %v2321 = vpop.f32.mrf.mxu0
  %v2322 = vadd.f32 0.0, %v2321
  %v2323 = vpop.f32.mrf.mxu0
  %v2324 = vadd.f32 0.0, %v2323
  %2325 = vmatmul.bf16.gmra.mxu0 %v2192
  %v2326 = vpop.f32.mrf.mxu0
  %v2327 = vadd.f32 0.0, %v2326
  %v2328 = vpop.f32.mrf.mxu0
  %v2329 = vadd.f32 0.0, %v2328
  %2330 = vmatmul.bf16.gmra.mxu0 %v2195
  %v2331 = vpop.f32.mrf.mxu0
  %v2332 = vadd.f32 0.0, %v2331
  %v2333 = vpop.f32.mrf.mxu0
  %v2334 = vadd.f32 0.0, %v2333
  %2335 = vmatmul.bf16.gmra.mxu0 %v2198
  %v2336 = vpop.f32.mrf.mxu0
  %v2337 = vadd.f32 0.0, %v2336
  %v2338 = vpop.f32.mrf.mxu0
  %v2339 = vadd.f32 0.0, %v2338
  %2340 = vmatmul.bf16.gmra.mxu0 %v2201
  %v2341 = vpop.f32.mrf.mxu0
  %v2342 = vadd.f32 0.0, %v2341
  %v2343 = vpop.f32.mrf.mxu0
  %v2344 = vadd.f32 0.0, %v2343
  %2345 = vmatmul.bf16.gmra.mxu0 %v2204
  %v2346 = vpop.f32.mrf.mxu0
  %v2347 = vadd.f32 0.0, %v2346
  %v2348 = vpop.f32.mrf.mxu0
  %v2349 = vadd.f32 0.0, %v2348
  %2350 = vmatmul.bf16.gmra.mxu0 %v2207
  %v2351 = vpop.f32.mrf.mxu0
  %v2352 = vadd.f32 0.0, %v2351
  %v2353 = vpop.f32.mrf.mxu0
  %v2354 = vadd.f32 0.0, %v2353
  %2355 = vmatmul.bf16.gmra.mxu0 %v2210
  %v2356 = vpop.f32.mrf.mxu0
  %v2357 = vadd.f32 0.0, %v2356
  %v2358 = vpop.f32.mrf.mxu0
  %v2359 = vadd.f32 0.0, %v2358
  %2360 = vmatmul.bf16.gmra.mxu0 %v2213
  %v2361 = vpop.f32.mrf.mxu0
  %v2362 = vadd.f32 0.0, %v2361
  %v2363 = vpop.f32.mrf.mxu0
  %v2364 = vadd.f32 0.0, %v2363
  %2365 = vmatmul.bf16.gmra.mxu0 %v2216
  %v2366 = vpop.f32.mrf.mxu0
  %v2367 = vadd.f32 0.0, %v2366
  %v2368 = vpop.f32.mrf.mxu0
  %v2369 = vadd.f32 0.0, %v2368
  %2370 = vmatmul.bf16.gmra.mxu0 %v2219
  %v2371 = vpop.f32.mrf.mxu0
  %v2372 = vadd.f32 0.0, %v2371
  %v2373 = vpop.f32.mrf.mxu0
  %v2374 = vadd.f32 0.0, %v2373
  %2375 = vmatmul.bf16.gmra.mxu0 %v2222
  %v2376 = vpop.f32.mrf.mxu0
  %v2377 = vadd.f32 0.0, %v2376
  %v2378 = vpop.f32.mrf.mxu0
  %v2379 = vadd.f32 0.0, %v2378
  %2380 = vmatmul.bf16.gmra.mxu0 %v2225
  %v2381 = vpop.f32.mrf.mxu0
  %v2382 = vadd.f32 0.0, %v2381
  %v2383 = vpop.f32.mrf.mxu0
  %v2384 = vadd.f32 0.0, %v2383
  %2385 = vmatmul.bf16.gmra.mxu0 %v2228
  %v2386 = vpop.f32.mrf.mxu0
  %v2387 = vadd.f32 0.0, %v2386
  %v2388 = vpop.f32.mrf.mxu0
  %v2389 = vadd.f32 0.0, %v2388
  %2390 = vmatmul.bf16.gmra.mxu0 %v2231
  %v2391 = vpop.f32.mrf.mxu0
  %v2392 = vadd.f32 0.0, %v2391
  %v2393 = vpop.f32.mrf.mxu0
  %v2394 = vadd.f32 0.0, %v2393
  %2395 = vmatmul.bf16.gmra.mxu0 %v2234
  %v2396 = vpop.f32.mrf.mxu0
  %v2397 = vadd.f32 0.0, %v2396
  %v2398 = vpop.f32.mrf.mxu0
  %v2399 = vadd.f32 0.0, %v2398
  %2400 = vmatmul.bf16.gmra.mxu0 %v2237
  %v2401 = vpop.f32.mrf.mxu0
  %v2402 = vadd.f32 0.0, %v2401
  %v2403 = vpop.f32.mrf.mxu0
  %v2404 = vadd.f32 0.0, %v2403
  %2405 = vmatmul.bf16.gmra.mxu0 %v2240
  %v2406 = vpop.f32.mrf.mxu0
  %v2407 = vadd.f32 0.0, %v2406
  %v2408 = vpop.f32.mrf.mxu0
  %v2409 = vadd.f32 0.0, %v2408
  %2410 = vdwg.mxu0
  %v2415 = vunpack.c.l.b16 %v1902
  %v2416 = vunpack.c.l.b16 %v1903
  %v2417 = vunpack.c.l.b16 %v1938
  %v2418 = vunpack.c.l.b16 %v1939
  %v2419 = vpack.c.b16 %v2416, %v2415
  %v2420 = vpack.c.b16 %v2418, %v2417
  %v2423 = vunpack.c.l.b16 %v1974
  %v2424 = vunpack.c.l.b16 %v1975
  %v2425 = vpack.c.b16 %v2424, %v2423
  %v2428 = vsel %vm2145, %v2419, 0
  %v2431 = vsel %vm2145, %v2420, 0
  %2433 = vmatpush.bf16.msra.mxu0 0
  %2434 = vmatpush.bf16.msra.mxu0 0
  %2435 = vmatpush.bf16.msra.mxu0 0
  %2436 = vmatpush.bf16.msra.mxu0 0
  %2437 = vmatpush.bf16.msra.mxu0 0
  %2438 = vmatpush.bf16.msra.mxu0 0
  %2439 = vmatpush.bf16.msra.mxu0 0
  %2440 = vmatpush.bf16.msra.mxu0 %v2425
  %2441 = vmatmul.bf16.gmra.mxu0 %v2428
  %v2442 = vpop.f32.mrf.mxu0
  %v2443 = vadd.f32 %v2252, %v2442
  %v2444 = vpop.f32.mrf.mxu0
  %v2445 = vadd.f32 %v2254, %v2444
  %2446 = vmatmul.bf16.gmra.mxu0 %v2147
  %v2447 = vpop.f32.mrf.mxu0
  %v2448 = vadd.f32 %v2257, %v2447
  %v2449 = vpop.f32.mrf.mxu0
  %v2450 = vadd.f32 %v2259, %v2449
  %2451 = vmatmul.bf16.gmra.mxu0 %v2150
  %v2452 = vpop.f32.mrf.mxu0
  %v2453 = vadd.f32 %v2262, %v2452
  %v2454 = vpop.f32.mrf.mxu0
  %v2455 = vadd.f32 %v2264, %v2454
  %2456 = vmatmul.bf16.gmra.mxu0 %v2153
  %v2457 = vpop.f32.mrf.mxu0
  %v2458 = vadd.f32 %v2267, %v2457
  %v2459 = vpop.f32.mrf.mxu0
  %v2460 = vadd.f32 %v2269, %v2459
  %2461 = vmatmul.bf16.gmra.mxu0 %v2156
  %v2462 = vpop.f32.mrf.mxu0
  %v2463 = vadd.f32 %v2272, %v2462
  %v2464 = vpop.f32.mrf.mxu0
  %v2465 = vadd.f32 %v2274, %v2464
  %2466 = vmatmul.bf16.gmra.mxu0 %v2159
  %v2467 = vpop.f32.mrf.mxu0
  %v2468 = vadd.f32 %v2277, %v2467
  %v2469 = vpop.f32.mrf.mxu0
  %v2470 = vadd.f32 %v2279, %v2469
  %2471 = vmatmul.bf16.gmra.mxu0 %v2162
  %v2472 = vpop.f32.mrf.mxu0
  %v2473 = vadd.f32 %v2282, %v2472
  %v2474 = vpop.f32.mrf.mxu0
  %v2475 = vadd.f32 %v2284, %v2474
  %2476 = vmatmul.bf16.gmra.mxu0 %v2165
  %v2477 = vpop.f32.mrf.mxu0
  %v2478 = vadd.f32 %v2287, %v2477
  %v2479 = vpop.f32.mrf.mxu0
  %v2480 = vadd.f32 %v2289, %v2479
  %2481 = vmatmul.bf16.gmra.mxu0 %v2168
  %v2482 = vpop.f32.mrf.mxu0
  %v2483 = vadd.f32 %v2292, %v2482
  %v2484 = vpop.f32.mrf.mxu0
  %v2485 = vadd.f32 %v2294, %v2484
  %2486 = vmatmul.bf16.gmra.mxu0 %v2171
  %v2487 = vpop.f32.mrf.mxu0
  %v2488 = vadd.f32 %v2297, %v2487
  %v2489 = vpop.f32.mrf.mxu0
  %v2490 = vadd.f32 %v2299, %v2489
  %2491 = vmatmul.bf16.gmra.mxu0 %v2174
  %v2492 = vpop.f32.mrf.mxu0
  %v2493 = vadd.f32 %v2302, %v2492
  %v2494 = vpop.f32.mrf.mxu0
  %v2495 = vadd.f32 %v2304, %v2494
  %2496 = vmatmul.bf16.gmra.mxu0 %v2177
  %v2497 = vpop.f32.mrf.mxu0
  %v2498 = vadd.f32 %v2307, %v2497
  %v2499 = vpop.f32.mrf.mxu0
  %v2500 = vadd.f32 %v2309, %v2499
  %2501 = vmatmul.bf16.gmra.mxu0 %v2180
  %v2502 = vpop.f32.mrf.mxu0
  %v2503 = vadd.f32 %v2312, %v2502
  %v2504 = vpop.f32.mrf.mxu0
  %v2505 = vadd.f32 %v2314, %v2504
  %2506 = vmatmul.bf16.gmra.mxu0 %v2183
  %v2507 = vpop.f32.mrf.mxu0
  %v2508 = vadd.f32 %v2317, %v2507
  %v2509 = vpop.f32.mrf.mxu0
  %v2510 = vadd.f32 %v2319, %v2509
  %2511 = vmatmul.bf16.gmra.mxu0 %v2186
  %v2512 = vpop.f32.mrf.mxu0
  %v2513 = vadd.f32 %v2322, %v2512
  %v2514 = vpop.f32.mrf.mxu0
  %v2515 = vadd.f32 %v2324, %v2514
  %2516 = vmatmul.bf16.gmra.mxu0 %v2189
  %v2517 = vpop.f32.mrf.mxu0
  %v2518 = vadd.f32 %v2327, %v2517
  %v2519 = vpop.f32.mrf.mxu0
  %v2520 = vadd.f32 %v2329, %v2519
  %2521 = vmatmul.bf16.gmra.mxu0 %v2431
  %v2522 = vpop.f32.mrf.mxu0
  %v2523 = vadd.f32 %v2332, %v2522
  %v2524 = vpop.f32.mrf.mxu0
  %v2525 = vadd.f32 %v2334, %v2524
  %2526 = vmatmul.bf16.gmra.mxu0 %v2195
  %v2527 = vpop.f32.mrf.mxu0
  %v2528 = vadd.f32 %v2337, %v2527
  %v2529 = vpop.f32.mrf.mxu0
  %v2530 = vadd.f32 %v2339, %v2529
  %2531 = vmatmul.bf16.gmra.mxu0 %v2198
  %v2532 = vpop.f32.mrf.mxu0
  %v2533 = vadd.f32 %v2342, %v2532
  %v2534 = vpop.f32.mrf.mxu0
  %v2535 = vadd.f32 %v2344, %v2534
  %2536 = vmatmul.bf16.gmra.mxu0 %v2201
  %v2537 = vpop.f32.mrf.mxu0
  %v2538 = vadd.f32 %v2347, %v2537
  %v2539 = vpop.f32.mrf.mxu0
  %v2540 = vadd.f32 %v2349, %v2539
  %2541 = vmatmul.bf16.gmra.mxu0 %v2204
  %v2542 = vpop.f32.mrf.mxu0
  %v2543 = vadd.f32 %v2352, %v2542
  %v2544 = vpop.f32.mrf.mxu0
  %v2545 = vadd.f32 %v2354, %v2544
  %2546 = vmatmul.bf16.gmra.mxu0 %v2207
  %v2547 = vpop.f32.mrf.mxu0
  %v2548 = vadd.f32 %v2357, %v2547
  %v2549 = vpop.f32.mrf.mxu0
  %v2550 = vadd.f32 %v2359, %v2549
  %2551 = vmatmul.bf16.gmra.mxu0 %v2210
  %v2552 = vpop.f32.mrf.mxu0
  %v2553 = vadd.f32 %v2362, %v2552
  %v2554 = vpop.f32.mrf.mxu0
  %v2555 = vadd.f32 %v2364, %v2554
  %2556 = vmatmul.bf16.gmra.mxu0 %v2213
  %v2557 = vpop.f32.mrf.mxu0
  %v2558 = vadd.f32 %v2367, %v2557
  %v2559 = vpop.f32.mrf.mxu0
  %v2560 = vadd.f32 %v2369, %v2559
  %2561 = vmatmul.bf16.gmra.mxu0 %v2216
  %v2562 = vpop.f32.mrf.mxu0
  %v2563 = vadd.f32 %v2372, %v2562
  %v2564 = vpop.f32.mrf.mxu0
  %v2565 = vadd.f32 %v2374, %v2564
  %2566 = vmatmul.bf16.gmra.mxu0 %v2219
  %v2567 = vpop.f32.mrf.mxu0
  %v2568 = vadd.f32 %v2377, %v2567
  %v2569 = vpop.f32.mrf.mxu0
  %v2570 = vadd.f32 %v2379, %v2569
  %2571 = vmatmul.bf16.gmra.mxu0 %v2222
  %v2572 = vpop.f32.mrf.mxu0
  %v2573 = vadd.f32 %v2382, %v2572
  %v2574 = vpop.f32.mrf.mxu0
  %v2575 = vadd.f32 %v2384, %v2574
  %2576 = vmatmul.bf16.gmra.mxu0 %v2225
  %v2577 = vpop.f32.mrf.mxu0
  %v2578 = vadd.f32 %v2387, %v2577
  %v2579 = vpop.f32.mrf.mxu0
  %v2580 = vadd.f32 %v2389, %v2579
  %2581 = vmatmul.bf16.gmra.mxu0 %v2228
  %v2582 = vpop.f32.mrf.mxu0
  %v2583 = vadd.f32 %v2392, %v2582
  %v2584 = vpop.f32.mrf.mxu0
  %v2585 = vadd.f32 %v2394, %v2584
  %2586 = vmatmul.bf16.gmra.mxu0 %v2231
  %v2587 = vpop.f32.mrf.mxu0
  %v2588 = vadd.f32 %v2397, %v2587
  %v2589 = vpop.f32.mrf.mxu0
  %v2590 = vadd.f32 %v2399, %v2589
  %2591 = vmatmul.bf16.gmra.mxu0 %v2234
  %v2592 = vpop.f32.mrf.mxu0
  %v2593 = vadd.f32 %v2402, %v2592
  %v2594 = vpop.f32.mrf.mxu0
  %v2595 = vadd.f32 %v2404, %v2594
  %2596 = vmatmul.bf16.gmra.mxu0 %v2237
  %v2597 = vpop.f32.mrf.mxu0
  %v2598 = vadd.f32 %v2407, %v2597
  %v2599 = vpop.f32.mrf.mxu0
  %v2600 = vadd.f32 %v2409, %v2599
  %2601 = vdwg.mxu0
  %s2602 = scalar_lea.vmem %s4, 48
  %v2603 = vld [vmem:[%s2602] sm:$0xf]
  %v2604 = vld [vmem:[%s2602 + $0x4] sm:$0xf]
  %v2609 = vunpack.c.l.b16 %v1936
  %v2610 = vunpack.c.l.b16 %v1937
  %v2611 = vunpack.c.l.b16 %v1972
  %v2612 = vunpack.c.l.b16 %v1973
  %v2613 = vpack.c.b16 %v2610, %v2609
  %v2614 = vpack.c.b16 %v2612, %v2611
  %v2617 = vunpack.c.l.b16 %v2603
  %v2618 = vunpack.c.l.b16 %v2604
  %v2619 = vpack.c.b16 %v2618, %v2617
  %v2622 = vsel %vm2145, %v2613, 0
  %v2625 = vsel %vm2145, %v2614, 0
  %2627 = vmatpush.bf16.msra.mxu0 0
  %2628 = vmatpush.bf16.msra.mxu0 0
  %2629 = vmatpush.bf16.msra.mxu0 0
  %2630 = vmatpush.bf16.msra.mxu0 0
  %2631 = vmatpush.bf16.msra.mxu0 0
  %2632 = vmatpush.bf16.msra.mxu0 0
  %2633 = vmatpush.bf16.msra.mxu0 0
  %2634 = vmatpush.bf16.msra.mxu0 %v2619
  %2635 = vmatmul.bf16.gmra.mxu0 %v2150
  %v2636 = vpop.f32.mrf.mxu0
  %v2637 = vadd.f32 0.0, %v2636
  %v2638 = vpop.f32.mrf.mxu0
  %v2639 = vadd.f32 0.0, %v2638
  %2640 = vmatmul.bf16.gmra.mxu0 %v2153
  %v2641 = vpop.f32.mrf.mxu0
  %v2642 = vadd.f32 0.0, %v2641
  %v2643 = vpop.f32.mrf.mxu0
  %v2644 = vadd.f32 0.0, %v2643
  %2645 = vmatmul.bf16.gmra.mxu0 %v2156
  %v2646 = vpop.f32.mrf.mxu0
  %v2647 = vadd.f32 0.0, %v2646
  %v2648 = vpop.f32.mrf.mxu0
  %v2649 = vadd.f32 0.0, %v2648
  %2650 = vmatmul.bf16.gmra.mxu0 %v2159
  %v2651 = vpop.f32.mrf.mxu0
  %v2652 = vadd.f32 0.0, %v2651
  %v2653 = vpop.f32.mrf.mxu0
  %v2654 = vadd.f32 0.0, %v2653
  %2655 = vmatmul.bf16.gmra.mxu0 %v2162
  %v2656 = vpop.f32.mrf.mxu0
  %v2657 = vadd.f32 0.0, %v2656
  %v2658 = vpop.f32.mrf.mxu0
  %v2659 = vadd.f32 0.0, %v2658
  %2660 = vmatmul.bf16.gmra.mxu0 %v2165
  %v2661 = vpop.f32.mrf.mxu0
  %v2662 = vadd.f32 0.0, %v2661
  %v2663 = vpop.f32.mrf.mxu0
  %v2664 = vadd.f32 0.0, %v2663
  %2665 = vmatmul.bf16.gmra.mxu0 %v2168
  %v2666 = vpop.f32.mrf.mxu0
  %v2667 = vadd.f32 0.0, %v2666
  %v2668 = vpop.f32.mrf.mxu0
  %v2669 = vadd.f32 0.0, %v2668
  %2670 = vmatmul.bf16.gmra.mxu0 %v2171
  %v2671 = vpop.f32.mrf.mxu0
  %v2672 = vadd.f32 0.0, %v2671
  %v2673 = vpop.f32.mrf.mxu0
  %v2674 = vadd.f32 0.0, %v2673
  %2675 = vmatmul.bf16.gmra.mxu0 %v2174
  %v2676 = vpop.f32.mrf.mxu0
  %v2677 = vadd.f32 0.0, %v2676
  %v2678 = vpop.f32.mrf.mxu0
  %v2679 = vadd.f32 0.0, %v2678
  %2680 = vmatmul.bf16.gmra.mxu0 %v2177
  %v2681 = vpop.f32.mrf.mxu0
  %v2682 = vadd.f32 0.0, %v2681
  %v2683 = vpop.f32.mrf.mxu0
  %v2684 = vadd.f32 0.0, %v2683
  %2685 = vmatmul.bf16.gmra.mxu0 %v2180
  %v2686 = vpop.f32.mrf.mxu0
  %v2687 = vadd.f32 0.0, %v2686
  %v2688 = vpop.f32.mrf.mxu0
  %v2689 = vadd.f32 0.0, %v2688
  %2690 = vmatmul.bf16.gmra.mxu0 %v2183
  %v2691 = vpop.f32.mrf.mxu0
  %v2692 = vadd.f32 0.0, %v2691
  %v2693 = vpop.f32.mrf.mxu0
  %v2694 = vadd.f32 0.0, %v2693
  %2695 = vmatmul.bf16.gmra.mxu0 %v2186
  %v2696 = vpop.f32.mrf.mxu0
  %v2697 = vadd.f32 0.0, %v2696
  %v2698 = vpop.f32.mrf.mxu0
  %v2699 = vadd.f32 0.0, %v2698
  %2700 = vmatmul.bf16.gmra.mxu0 %v2189
  %v2701 = vpop.f32.mrf.mxu0
  %v2702 = vadd.f32 0.0, %v2701
  %v2703 = vpop.f32.mrf.mxu0
  %v2704 = vadd.f32 0.0, %v2703
  %2705 = vmatmul.bf16.gmra.mxu0 %v2192
  %v2706 = vpop.f32.mrf.mxu0
  %v2707 = vadd.f32 0.0, %v2706
  %v2708 = vpop.f32.mrf.mxu0
  %v2709 = vadd.f32 0.0, %v2708
  %2710 = vmatmul.bf16.gmra.mxu0 %v2622
  %v2711 = vpop.f32.mrf.mxu0
  %v2712 = vadd.f32 0.0, %v2711
  %v2713 = vpop.f32.mrf.mxu0
  %v2714 = vadd.f32 0.0, %v2713
  %2715 = vmatmul.bf16.gmra.mxu0 %v2198
  %v2716 = vpop.f32.mrf.mxu0
  %v2717 = vadd.f32 0.0, %v2716
  %v2718 = vpop.f32.mrf.mxu0
  %v2719 = vadd.f32 0.0, %v2718
  %2720 = vmatmul.bf16.gmra.mxu0 %v2201
  %v2721 = vpop.f32.mrf.mxu0
  %v2722 = vadd.f32 0.0, %v2721
  %v2723 = vpop.f32.mrf.mxu0
  %v2724 = vadd.f32 0.0, %v2723
  %2725 = vmatmul.bf16.gmra.mxu0 %v2204
  %v2726 = vpop.f32.mrf.mxu0
  %v2727 = vadd.f32 0.0, %v2726
  %v2728 = vpop.f32.mrf.mxu0
  %v2729 = vadd.f32 0.0, %v2728
  %2730 = vmatmul.bf16.gmra.mxu0 %v2207
  %v2731 = vpop.f32.mrf.mxu0
  %v2732 = vadd.f32 0.0, %v2731
  %v2733 = vpop.f32.mrf.mxu0
  %v2734 = vadd.f32 0.0, %v2733
  %2735 = vmatmul.bf16.gmra.mxu0 %v2210
  %v2736 = vpop.f32.mrf.mxu0
  %v2737 = vadd.f32 0.0, %v2736
  %v2738 = vpop.f32.mrf.mxu0
  %v2739 = vadd.f32 0.0, %v2738
  %2740 = vmatmul.bf16.gmra.mxu0 %v2213
  %v2741 = vpop.f32.mrf.mxu0
  %v2742 = vadd.f32 0.0, %v2741
  %v2743 = vpop.f32.mrf.mxu0
  %v2744 = vadd.f32 0.0, %v2743
  %2745 = vmatmul.bf16.gmra.mxu0 %v2216
  %v2746 = vpop.f32.mrf.mxu0
  %v2747 = vadd.f32 0.0, %v2746
  %v2748 = vpop.f32.mrf.mxu0
  %v2749 = vadd.f32 0.0, %v2748
  %2750 = vmatmul.bf16.gmra.mxu0 %v2219
  %v2751 = vpop.f32.mrf.mxu0
  %v2752 = vadd.f32 0.0, %v2751
  %v2753 = vpop.f32.mrf.mxu0
  %v2754 = vadd.f32 0.0, %v2753
  %2755 = vmatmul.bf16.gmra.mxu0 %v2222
  %v2756 = vpop.f32.mrf.mxu0
  %v2757 = vadd.f32 0.0, %v2756
  %v2758 = vpop.f32.mrf.mxu0
  %v2759 = vadd.f32 0.0, %v2758
  %2760 = vmatmul.bf16.gmra.mxu0 %v2225
  %v2761 = vpop.f32.mrf.mxu0
  %v2762 = vadd.f32 0.0, %v2761
  %v2763 = vpop.f32.mrf.mxu0
  %v2764 = vadd.f32 0.0, %v2763
  %2765 = vmatmul.bf16.gmra.mxu0 %v2228
  %v2766 = vpop.f32.mrf.mxu0
  %v2767 = vadd.f32 0.0, %v2766
  %v2768 = vpop.f32.mrf.mxu0
  %v2769 = vadd.f32 0.0, %v2768
  %2770 = vmatmul.bf16.gmra.mxu0 %v2231
  %v2771 = vpop.f32.mrf.mxu0
  %v2772 = vadd.f32 0.0, %v2771
  %v2773 = vpop.f32.mrf.mxu0
  %v2774 = vadd.f32 0.0, %v2773
  %2775 = vmatmul.bf16.gmra.mxu0 %v2234
  %v2776 = vpop.f32.mrf.mxu0
  %v2777 = vadd.f32 0.0, %v2776
  %v2778 = vpop.f32.mrf.mxu0
  %v2779 = vadd.f32 0.0, %v2778
  %2780 = vmatmul.bf16.gmra.mxu0 %v2237
  %v2781 = vpop.f32.mrf.mxu0
  %v2782 = vadd.f32 0.0, %v2781
  %v2783 = vpop.f32.mrf.mxu0
  %v2784 = vadd.f32 0.0, %v2783
  %2785 = vmatmul.bf16.gmra.mxu0 %v2240
  %v2786 = vpop.f32.mrf.mxu0
  %v2787 = vadd.f32 0.0, %v2786
  %v2788 = vpop.f32.mrf.mxu0
  %v2789 = vadd.f32 0.0, %v2788
  %2790 = vmatmul.bf16.gmra.mxu0 %v2625
  %v2791 = vpop.f32.mrf.mxu0
  %v2792 = vadd.f32 0.0, %v2791
  %v2793 = vpop.f32.mrf.mxu0
  %v2794 = vadd.f32 0.0, %v2793
  %2795 = vdwg.mxu0
  %v2796 = vadd.f32 %v2443, %v2637
  %v2797 = vadd.f32 %v2445, %v2639
  %v2798 = vadd.f32 %v2448, %v2642
  %v2799 = vadd.f32 %v2450, %v2644
  %v2800 = vadd.f32 %v2453, %v2647
  %v2801 = vadd.f32 %v2455, %v2649
  %v2802 = vadd.f32 %v2458, %v2652
  %v2803 = vadd.f32 %v2460, %v2654
  %v2804 = vadd.f32 %v2463, %v2657
  %v2805 = vadd.f32 %v2465, %v2659
  %v2806 = vadd.f32 %v2468, %v2662
  %v2807 = vadd.f32 %v2470, %v2664
  %v2808 = vadd.f32 %v2473, %v2667
  %v2809 = vadd.f32 %v2475, %v2669
  %v2810 = vadd.f32 %v2478, %v2672
  %v2811 = vadd.f32 %v2480, %v2674
  %v2812 = vadd.f32 %v2483, %v2677
  %v2813 = vadd.f32 %v2485, %v2679
  %v2814 = vadd.f32 %v2488, %v2682
  %v2815 = vadd.f32 %v2490, %v2684
  %v2816 = vadd.f32 %v2493, %v2687
  %v2817 = vadd.f32 %v2495, %v2689
  %v2818 = vadd.f32 %v2498, %v2692
  %v2819 = vadd.f32 %v2500, %v2694
  %v2820 = vadd.f32 %v2503, %v2697
  %v2821 = vadd.f32 %v2505, %v2699
  %v2822 = vadd.f32 %v2508, %v2702
  %v2823 = vadd.f32 %v2510, %v2704
  %v2824 = vadd.f32 %v2513, %v2707
  %v2825 = vadd.f32 %v2515, %v2709
  %v2826 = vadd.f32 %v2518, %v2712
  %v2827 = vadd.f32 %v2520, %v2714
  %v2828 = vadd.f32 %v2523, %v2717
  %v2829 = vadd.f32 %v2525, %v2719
  %v2830 = vadd.f32 %v2528, %v2722
  %v2831 = vadd.f32 %v2530, %v2724
  %v2832 = vadd.f32 %v2533, %v2727
  %v2833 = vadd.f32 %v2535, %v2729
  %v2834 = vadd.f32 %v2538, %v2732
  %v2835 = vadd.f32 %v2540, %v2734
  %v2836 = vadd.f32 %v2543, %v2737
  %v2837 = vadd.f32 %v2545, %v2739
  %v2838 = vadd.f32 %v2548, %v2742
  %v2839 = vadd.f32 %v2550, %v2744
  %v2840 = vadd.f32 %v2553, %v2747
  %v2841 = vadd.f32 %v2555, %v2749
  %v2842 = vadd.f32 %v2558, %v2752
  %v2843 = vadd.f32 %v2560, %v2754
  %v2844 = vadd.f32 %v2563, %v2757
  %v2845 = vadd.f32 %v2565, %v2759
  %v2846 = vadd.f32 %v2568, %v2762
  %v2847 = vadd.f32 %v2570, %v2764
  %v2848 = vadd.f32 %v2573, %v2767
  %v2849 = vadd.f32 %v2575, %v2769
  %v2850 = vadd.f32 %v2578, %v2772
  %v2851 = vadd.f32 %v2580, %v2774
  %v2852 = vadd.f32 %v2583, %v2777
  %v2853 = vadd.f32 %v2585, %v2779
  %v2854 = vadd.f32 %v2588, %v2782
  %v2855 = vadd.f32 %v2590, %v2784
  %v2856 = vadd.f32 %v2593, %v2787
  %v2857 = vadd.f32 %v2595, %v2789
  %v2858 = vadd.f32 %v2598, %v2792
  %v2859 = vadd.f32 %v2600, %v2794
  %v2860 = vld [vmem:[#allocation2] sm:$0xf]
  %v2861 = vld [vmem:[#allocation2 + $0x4] sm:$0xf]
  %v2862 = vld [vmem:[#allocation2 + $0x8] sm:$0x1]
  %v2863 = vld [vmem:[#allocation2 + $0xc] sm:$0xf]
  %v2864 = vld [vmem:[#allocation2 + $0x10] sm:$0xf]
  %v2865 = vld [vmem:[#allocation2 + $0x14] sm:$0x1]
  %v2866 = vld [vmem:[#allocation2 + $0x18] sm:$0xf]
  %v2867 = vld [vmem:[#allocation2 + $0x1c] sm:$0xf]
  %v2868 = vld [vmem:[#allocation2 + $0x20] sm:$0x1]
  %v2869 = vld [vmem:[#allocation2 + $0x24] sm:$0xf]
  %v2870 = vld [vmem:[#allocation2 + $0x28] sm:$0xf]
  %v2871 = vld [vmem:[#allocation2 + $0x2c] sm:$0x1]
  %v2872 = vld [vmem:[#allocation2 + $0x30] sm:$0xf]
  %v2873 = vld [vmem:[#allocation2 + $0x34] sm:$0xf]
  %v2874 = vld [vmem:[#allocation2 + $0x38] sm:$0x1]
  %v2875 = vld [vmem:[#allocation2 + $0x3c] sm:$0xf]
  %v2876 = vld [vmem:[#allocation2 + $0x40] sm:$0xf]
  %v2877 = vld [vmem:[#allocation2 + $0x44] sm:$0x1]
  %v2878 = vld [vmem:[#allocation2 + $0x48] sm:$0xf]
  %v2879 = vld [vmem:[#allocation2 + $0x4c] sm:$0xf]
  %v2880 = vld [vmem:[#allocation2 + $0x50] sm:$0x1]
  %v2881 = vld [vmem:[#allocation2 + $0x54] sm:$0xf]
  %v2882 = vld [vmem:[#allocation2 + $0x58] sm:$0xf]
  %v2883 = vld [vmem:[#allocation2 + $0x5c] sm:$0x1]
  %v2884 = vld [vmem:[#allocation2 + $0x60] sm:$0xf]
  %v2885 = vld [vmem:[#allocation2 + $0x64] sm:$0xf]
  %v2886 = vld [vmem:[#allocation2 + $0x68] sm:$0x1]
  %v2887 = vld [vmem:[#allocation2 + $0x6c] sm:$0xf]
  %v2888 = vld [vmem:[#allocation2 + $0x70] sm:$0xf]
  %v2889 = vld [vmem:[#allocation2 + $0x74] sm:$0x1]
  %v2890 = vld [vmem:[#allocation2 + $0x78] sm:$0xf]
  %v2891 = vld [vmem:[#allocation2 + $0x7c] sm:$0xf]
  %v2892 = vld [vmem:[#allocation2 + $0x80] sm:$0x1]
  %v2893 = vld [vmem:[#allocation2 + $0x84] sm:$0xf]
  %v2894 = vld [vmem:[#allocation2 + $0x88] sm:$0xf]
  %v2895 = vld [vmem:[#allocation2 + $0x8c] sm:$0x1]
  %v2896 = vld [vmem:[#allocation2 + $0x90] sm:$0xf]
  %v2897 = vld [vmem:[#allocation2 + $0x94] sm:$0xf]
  %v2898 = vld [vmem:[#allocation2 + $0x98] sm:$0x1]
  %v2899 = vld [vmem:[#allocation2 + $0x9c] sm:$0xf]
  %v2900 = vld [vmem:[#allocation2 + $0xa0] sm:$0xf]
  %v2901 = vld [vmem:[#allocation2 + $0xa4] sm:$0x1]
  %v2902 = vld [vmem:[#allocation2 + $0xa8] sm:$0xf]
  %v2903 = vld [vmem:[#allocation2 + $0xac] sm:$0xf]
  %v2904 = vld [vmem:[#allocation2 + $0xb0] sm:$0x1]
  %v2905 = vld [vmem:[#allocation2 + $0xb4] sm:$0xf]
  %v2906 = vld [vmem:[#allocation2 + $0xb8] sm:$0xf]
  %v2907 = vld [vmem:[#allocation2 + $0xbc] sm:$0x1]
  %v2908 = vld [vmem:[#allocation2 + $0xc0] sm:$0xf]
  %v2909 = vld [vmem:[#allocation2 + $0xc4] sm:$0xf]
  %v2910 = vld [vmem:[#allocation2 + $0xc8] sm:$0x1]
  %v2911 = vld [vmem:[#allocation2 + $0xcc] sm:$0xf]
  %v2912 = vld [vmem:[#allocation2 + $0xd0] sm:$0xf]
  %v2913 = vld [vmem:[#allocation2 + $0xd4] sm:$0x1]
  %v2914 = vld [vmem:[#allocation2 + $0xd8] sm:$0xf]
  %v2915 = vld [vmem:[#allocation2 + $0xdc] sm:$0xf]
  %v2916 = vld [vmem:[#allocation2 + $0xe0] sm:$0x1]
  %v2917 = vld [vmem:[#allocation2 + $0xe4] sm:$0xf]
  %v2918 = vld [vmem:[#allocation2 + $0xe8] sm:$0xf]
  %v2919 = vld [vmem:[#allocation2 + $0xec] sm:$0x1]
  %v2920 = vld [vmem:[#allocation2 + $0xf0] sm:$0xf]
  %v2921 = vld [vmem:[#allocation2 + $0xf4] sm:$0xf]
  %v2922 = vld [vmem:[#allocation2 + $0xf8] sm:$0x1]
  %v2923 = vld [vmem:[#allocation2 + $0xfc] sm:$0xf]
  %v2924 = vld [vmem:[#allocation2 + $0x100] sm:$0xf]
  %v2925 = vld [vmem:[#allocation2 + $0x104] sm:$0x1]
  %v2926 = vld [vmem:[#allocation2 + $0x108] sm:$0xf]
  %v2927 = vld [vmem:[#allocation2 + $0x10c] sm:$0xf]
  %v2928 = vld [vmem:[#allocation2 + $0x110] sm:$0x1]
  %v2929 = vld [vmem:[#allocation2 + $0x114] sm:$0xf]
  %v2930 = vld [vmem:[#allocation2 + $0x118] sm:$0xf]
  %v2931 = vld [vmem:[#allocation2 + $0x11c] sm:$0x1]
  %v2932 = vld [vmem:[#allocation2 + $0x120] sm:$0xf]
  %v2933 = vld [vmem:[#allocation2 + $0x124] sm:$0xf]
  %v2934 = vld [vmem:[#allocation2 + $0x128] sm:$0x1]
  %v2935 = vld [vmem:[#allocation2 + $0x12c] sm:$0xf]
  %v2936 = vld [vmem:[#allocation2 + $0x130] sm:$0xf]
  %v2937 = vld [vmem:[#allocation2 + $0x134] sm:$0x1]
  %v2938 = vld [vmem:[#allocation2 + $0x138] sm:$0xf]
  %v2939 = vld [vmem:[#allocation2 + $0x13c] sm:$0xf]
  %v2940 = vld [vmem:[#allocation2 + $0x140] sm:$0x1]
  %v2941 = vld [vmem:[#allocation2 + $0x144] sm:$0xf]
  %v2942 = vld [vmem:[#allocation2 + $0x148] sm:$0xf]
  %v2943 = vld [vmem:[#allocation2 + $0x14c] sm:$0x1]
  %v2944 = vld [vmem:[#allocation2 + $0x150] sm:$0xf]
  %v2945 = vld [vmem:[#allocation2 + $0x154] sm:$0xf]
  %v2946 = vld [vmem:[#allocation2 + $0x158] sm:$0x1]
  %v2947 = vld [vmem:[#allocation2 + $0x15c] sm:$0xf]
  %v2948 = vld [vmem:[#allocation2 + $0x160] sm:$0xf]
  %v2949 = vld [vmem:[#allocation2 + $0x164] sm:$0x1]
  %v2950 = vld [vmem:[#allocation2 + $0x168] sm:$0xf]
  %v2951 = vld [vmem:[#allocation2 + $0x16c] sm:$0xf]
  %v2952 = vld [vmem:[#allocation2 + $0x170] sm:$0x1]
  %v2953 = vld [vmem:[#allocation2 + $0x174] sm:$0xf]
  %v2954 = vld [vmem:[#allocation2 + $0x178] sm:$0xf]
  %v2955 = vld [vmem:[#allocation2 + $0x17c] sm:$0x1]
  %v2956 = vld [vmem:[#allocation2 + $0x180] sm:$0xf]
  %v2957 = vld [vmem:[#allocation2 + $0x184] sm:$0xf]
  %v2958 = vld [vmem:[#allocation2 + $0x188] sm:$0x1]
  %v2959 = vld [vmem:[#allocation2 + $0x18c] sm:$0xf]
  %v2960 = vld [vmem:[#allocation2 + $0x190] sm:$0xf]
  %v2961 = vld [vmem:[#allocation2 + $0x194] sm:$0x1]
  %v2962 = vld [vmem:[#allocation2 + $0x198] sm:$0xf]
  %v2963 = vld [vmem:[#allocation2 + $0x19c] sm:$0xf]
  %v2964 = vld [vmem:[#allocation2 + $0x1a0] sm:$0x1]
  %v2965 = vld [vmem:[#allocation2 + $0x1a4] sm:$0xf]
  %v2966 = vld [vmem:[#allocation2 + $0x1a8] sm:$0xf]
  %v2967 = vld [vmem:[#allocation2 + $0x1ac] sm:$0x1]
  %vm2968 = vsmask.f32 3328
  %vm2969 = vsmask.f32 7440
  %vm2970 = vmor %vm2968, %vm2969
  %v2972 = vshrl.u32 %v2860, 16
  %v2974 = vrot.slane %v2972, 4
  %v2975 = vshll.u32 %v2860, 16
  %v2977 = vrot.slane %v2975, 5
  %v2978 = vor.u32 %v2974, %v2977
  %v2979 = vrot.slane %v2978, 4
  %v2981 = vshll.u32 %v2861, 16
  %v2983 = vrot.slane %v2981, 5
  %v2984 = vsel %vm2970, %v2979, %v2983
  %v2985 = vshrl.u32 %v2861, 16
  %v2987 = vrot.slane %v2985, 4
  %v2988 = vor.u32 %v2987, %v2983
  %v2989 = vrot.slane %v2988, 4
  %v2991 = vshll.u32 %v2862, 16
  %v2993 = vrot.slane %v2991, 5
  %v2994 = vsel %vm2970, %v2989, %v2993
  %v2996 = vshrl.u32 %v2863, 16
  %v2998 = vrot.slane %v2996, 4
  %v2999 = vshll.u32 %v2863, 16
  %v3001 = vrot.slane %v2999, 5
  %v3002 = vor.u32 %v2998, %v3001
  %v3003 = vrot.slane %v3002, 4
  %v3005 = vshll.u32 %v2864, 16
  %v3007 = vrot.slane %v3005, 5
  %v3008 = vsel %vm2970, %v3003, %v3007
  %v3009 = vshrl.u32 %v2864, 16
  %v3011 = vrot.slane %v3009, 4
  %v3012 = vor.u32 %v3011, %v3007
  %v3013 = vrot.slane %v3012, 4
  %v3015 = vshll.u32 %v2865, 16
  %v3017 = vrot.slane %v3015, 5
  %v3018 = vsel %vm2970, %v3013, %v3017
  %v3020 = vshrl.u32 %v2866, 16
  %v3022 = vrot.slane %v3020, 4
  %v3023 = vshll.u32 %v2866, 16
  %v3025 = vrot.slane %v3023, 5
  %v3026 = vor.u32 %v3022, %v3025
  %v3027 = vrot.slane %v3026, 4
  %v3029 = vshll.u32 %v2867, 16
  %v3031 = vrot.slane %v3029, 5
  %v3032 = vsel %vm2970, %v3027, %v3031
  %v3033 = vshrl.u32 %v2867, 16
  %v3035 = vrot.slane %v3033, 4
  %v3036 = vor.u32 %v3035, %v3031
  %v3037 = vrot.slane %v3036, 4
  %v3039 = vshll.u32 %v2868, 16
  %v3041 = vrot.slane %v3039, 5
  %v3042 = vsel %vm2970, %v3037, %v3041
  %v3044 = vshrl.u32 %v2869, 16
  %v3046 = vrot.slane %v3044, 4
  %v3047 = vshll.u32 %v2869, 16
  %v3049 = vrot.slane %v3047, 5
  %v3050 = vor.u32 %v3046, %v3049
  %v3051 = vrot.slane %v3050, 4
  %v3053 = vshll.u32 %v2870, 16
  %v3055 = vrot.slane %v3053, 5
  %v3056 = vsel %vm2970, %v3051, %v3055
  %v3057 = vshrl.u32 %v2870, 16
  %v3059 = vrot.slane %v3057, 4
  %v3060 = vor.u32 %v3059, %v3055
  %v3061 = vrot.slane %v3060, 4
  %v3063 = vshll.u32 %v2871, 16
  %v3065 = vrot.slane %v3063, 5
  %v3066 = vsel %vm2970, %v3061, %v3065
  %v3068 = vshrl.u32 %v2872, 16
  %v3070 = vrot.slane %v3068, 4
  %v3071 = vshll.u32 %v2872, 16
  %v3073 = vrot.slane %v3071, 5
  %v3074 = vor.u32 %v3070, %v3073
  %v3075 = vrot.slane %v3074, 4
  %v3077 = vshll.u32 %v2873, 16
  %v3079 = vrot.slane %v3077, 5
  %v3080 = vsel %vm2970, %v3075, %v3079
  %v3081 = vshrl.u32 %v2873, 16
  %v3083 = vrot.slane %v3081, 4
  %v3084 = vor.u32 %v3083, %v3079
  %v3085 = vrot.slane %v3084, 4
  %v3087 = vshll.u32 %v2874, 16
  %v3089 = vrot.slane %v3087, 5
  %v3090 = vsel %vm2970, %v3085, %v3089
  %v3092 = vshrl.u32 %v2875, 16
  %v3094 = vrot.slane %v3092, 4
  %v3095 = vshll.u32 %v2875, 16
  %v3097 = vrot.slane %v3095, 5
  %v3098 = vor.u32 %v3094, %v3097
  %v3099 = vrot.slane %v3098, 4
  %v3101 = vshll.u32 %v2876, 16
  %v3103 = vrot.slane %v3101, 5
  %v3104 = vsel %vm2970, %v3099, %v3103
  %v3105 = vshrl.u32 %v2876, 16
  %v3107 = vrot.slane %v3105, 4
  %v3108 = vor.u32 %v3107, %v3103
  %v3109 = vrot.slane %v3108, 4
  %v3111 = vshll.u32 %v2877, 16
  %v3113 = vrot.slane %v3111, 5
  %v3114 = vsel %vm2970, %v3109, %v3113
  %v3116 = vshrl.u32 %v2878, 16
  %v3118 = vrot.slane %v3116, 4
  %v3119 = vshll.u32 %v2878, 16
  %v3121 = vrot.slane %v3119, 5
  %v3122 = vor.u32 %v3118, %v3121
  %v3123 = vrot.slane %v3122, 4
  %v3125 = vshll.u32 %v2879, 16
  %v3127 = vrot.slane %v3125, 5
  %v3128 = vsel %vm2970, %v3123, %v3127
  %v3129 = vshrl.u32 %v2879, 16
  %v3131 = vrot.slane %v3129, 4
  %v3132 = vor.u32 %v3131, %v3127
  %v3133 = vrot.slane %v3132, 4
  %v3135 = vshll.u32 %v2880, 16
  %v3137 = vrot.slane %v3135, 5
  %v3138 = vsel %vm2970, %v3133, %v3137
  %v3140 = vshrl.u32 %v2881, 16
  %v3142 = vrot.slane %v3140, 4
  %v3143 = vshll.u32 %v2881, 16
  %v3145 = vrot.slane %v3143, 5
  %v3146 = vor.u32 %v3142, %v3145
  %v3147 = vrot.slane %v3146, 4
  %v3149 = vshll.u32 %v2882, 16
  %v3151 = vrot.slane %v3149, 5
  %v3152 = vsel %vm2970, %v3147, %v3151
  %v3153 = vshrl.u32 %v2882, 16
  %v3155 = vrot.slane %v3153, 4
  %v3156 = vor.u32 %v3155, %v3151
  %v3157 = vrot.slane %v3156, 4
  %v3159 = vshll.u32 %v2883, 16
  %v3161 = vrot.slane %v3159, 5
  %v3162 = vsel %vm2970, %v3157, %v3161
  %v3164 = vshrl.u32 %v2884, 16
  %v3166 = vrot.slane %v3164, 4
  %v3167 = vshll.u32 %v2884, 16
  %v3169 = vrot.slane %v3167, 5
  %v3170 = vor.u32 %v3166, %v3169
  %v3171 = vrot.slane %v3170, 4
  %v3173 = vshll.u32 %v2885, 16
  %v3175 = vrot.slane %v3173, 5
  %v3176 = vsel %vm2970, %v3171, %v3175
  %v3177 = vshrl.u32 %v2885, 16
  %v3179 = vrot.slane %v3177, 4
  %v3180 = vor.u32 %v3179, %v3175
  %v3181 = vrot.slane %v3180, 4
  %v3183 = vshll.u32 %v2886, 16
  %v3185 = vrot.slane %v3183, 5
  %v3186 = vsel %vm2970, %v3181, %v3185
  %v3188 = vshrl.u32 %v2887, 16
  %v3190 = vrot.slane %v3188, 4
  %v3191 = vshll.u32 %v2887, 16
  %v3193 = vrot.slane %v3191, 5
  %v3194 = vor.u32 %v3190, %v3193
  %v3195 = vrot.slane %v3194, 4
  %v3197 = vshll.u32 %v2888, 16
  %v3199 = vrot.slane %v3197, 5
  %v3200 = vsel %vm2970, %v3195, %v3199
  %v3201 = vshrl.u32 %v2888, 16
  %v3203 = vrot.slane %v3201, 4
  %v3204 = vor.u32 %v3203, %v3199
  %v3205 = vrot.slane %v3204, 4
  %v3207 = vshll.u32 %v2889, 16
  %v3209 = vrot.slane %v3207, 5
  %v3210 = vsel %vm2970, %v3205, %v3209
  %v3212 = vshrl.u32 %v2890, 16
  %v3214 = vrot.slane %v3212, 4
  %v3215 = vshll.u32 %v2890, 16
  %v3217 = vrot.slane %v3215, 5
  %v3218 = vor.u32 %v3214, %v3217
  %v3219 = vrot.slane %v3218, 4
  %v3221 = vshll.u32 %v2891, 16
  %v3223 = vrot.slane %v3221, 5
  %v3224 = vsel %vm2970, %v3219, %v3223
  %v3225 = vshrl.u32 %v2891, 16
  %v3227 = vrot.slane %v3225, 4
  %v3228 = vor.u32 %v3227, %v3223
  %v3229 = vrot.slane %v3228, 4
  %v3231 = vshll.u32 %v2892, 16
  %v3233 = vrot.slane %v3231, 5
  %v3234 = vsel %vm2970, %v3229, %v3233
  %v3236 = vshrl.u32 %v2893, 16
  %v3238 = vrot.slane %v3236, 4
  %v3239 = vshll.u32 %v2893, 16
  %v3241 = vrot.slane %v3239, 5
  %v3242 = vor.u32 %v3238, %v3241
  %v3243 = vrot.slane %v3242, 4
  %v3245 = vshll.u32 %v2894, 16
  %v3247 = vrot.slane %v3245, 5
  %v3248 = vsel %vm2970, %v3243, %v3247
  %v3249 = vshrl.u32 %v2894, 16
  %v3251 = vrot.slane %v3249, 4
  %v3252 = vor.u32 %v3251, %v3247
  %v3253 = vrot.slane %v3252, 4
  %v3255 = vshll.u32 %v2895, 16
  %v3257 = vrot.slane %v3255, 5
  %v3258 = vsel %vm2970, %v3253, %v3257
  %v3260 = vshrl.u32 %v2896, 16
  %v3262 = vrot.slane %v3260, 4
  %v3263 = vshll.u32 %v2896, 16
  %v3265 = vrot.slane %v3263, 5
  %v3266 = vor.u32 %v3262, %v3265
  %v3267 = vrot.slane %v3266, 4
  %v3269 = vshll.u32 %v2897, 16
  %v3271 = vrot.slane %v3269, 5
  %v3272 = vsel %vm2970, %v3267, %v3271
  %v3273 = vshrl.u32 %v2897, 16
  %v3275 = vrot.slane %v3273, 4
  %v3276 = vor.u32 %v3275, %v3271
  %v3277 = vrot.slane %v3276, 4
  %v3279 = vshll.u32 %v2898, 16
  %v3281 = vrot.slane %v3279, 5
  %v3282 = vsel %vm2970, %v3277, %v3281
  %v3284 = vshrl.u32 %v2899, 16
  %v3286 = vrot.slane %v3284, 4
  %v3287 = vshll.u32 %v2899, 16
  %v3289 = vrot.slane %v3287, 5
  %v3290 = vor.u32 %v3286, %v3289
  %v3291 = vrot.slane %v3290, 4
  %v3293 = vshll.u32 %v2900, 16
  %v3295 = vrot.slane %v3293, 5
  %v3296 = vsel %vm2970, %v3291, %v3295
  %v3297 = vshrl.u32 %v2900, 16
  %v3299 = vrot.slane %v3297, 4
  %v3300 = vor.u32 %v3299, %v3295
  %v3301 = vrot.slane %v3300, 4
  %v3303 = vshll.u32 %v2901, 16
  %v3305 = vrot.slane %v3303, 5
  %v3306 = vsel %vm2970, %v3301, %v3305
  %v3308 = vshrl.u32 %v2902, 16
  %v3310 = vrot.slane %v3308, 4
  %v3311 = vshll.u32 %v2902, 16
  %v3313 = vrot.slane %v3311, 5
  %v3314 = vor.u32 %v3310, %v3313
  %v3315 = vrot.slane %v3314, 4
  %v3317 = vshll.u32 %v2903, 16
  %v3319 = vrot.slane %v3317, 5
  %v3320 = vsel %vm2970, %v3315, %v3319
  %v3321 = vshrl.u32 %v2903, 16
  %v3323 = vrot.slane %v3321, 4
  %v3324 = vor.u32 %v3323, %v3319
  %v3325 = vrot.slane %v3324, 4
  %v3327 = vshll.u32 %v2904, 16
  %v3329 = vrot.slane %v3327, 5
  %v3330 = vsel %vm2970, %v3325, %v3329
  %v3332 = vshrl.u32 %v2905, 16
  %v3334 = vrot.slane %v3332, 4
  %v3335 = vshll.u32 %v2905, 16
  %v3337 = vrot.slane %v3335, 5
  %v3338 = vor.u32 %v3334, %v3337
  %v3339 = vrot.slane %v3338, 4
  %v3341 = vshll.u32 %v2906, 16
  %v3343 = vrot.slane %v3341, 5
  %v3344 = vsel %vm2970, %v3339, %v3343
  %v3345 = vshrl.u32 %v2906, 16
  %v3347 = vrot.slane %v3345, 4
  %v3348 = vor.u32 %v3347, %v3343
  %v3349 = vrot.slane %v3348, 4
  %v3351 = vshll.u32 %v2907, 16
  %v3353 = vrot.slane %v3351, 5
  %v3354 = vsel %vm2970, %v3349, %v3353
  %v3356 = vshrl.u32 %v2914, 16
  %v3358 = vrot.slane %v3356, 4
  %v3359 = vshll.u32 %v2914, 16
  %v3361 = vrot.slane %v3359, 5
  %v3362 = vor.u32 %v3358, %v3361
  %v3363 = vrot.slane %v3362, 4
  %v3365 = vshll.u32 %v2915, 16
  %v3367 = vrot.slane %v3365, 5
  %v3368 = vsel %vm2970, %v3363, %v3367
  %v3369 = vshrl.u32 %v2915, 16
  %v3371 = vrot.slane %v3369, 4
  %v3372 = vor.u32 %v3371, %v3367
  %v3373 = vrot.slane %v3372, 4
  %v3375 = vshll.u32 %v2916, 16
  %v3377 = vrot.slane %v3375, 5
  %v3378 = vsel %vm2970, %v3373, %v3377
  %v3380 = vshrl.u32 %v2917, 16
  %v3382 = vrot.slane %v3380, 4
  %v3383 = vshll.u32 %v2917, 16
  %v3385 = vrot.slane %v3383, 5
  %v3386 = vor.u32 %v3382, %v3385
  %v3387 = vrot.slane %v3386, 4
  %v3389 = vshll.u32 %v2918, 16
  %v3391 = vrot.slane %v3389, 5
  %v3392 = vsel %vm2970, %v3387, %v3391
  %v3393 = vshrl.u32 %v2918, 16
  %v3395 = vrot.slane %v3393, 4
  %v3396 = vor.u32 %v3395, %v3391
  %v3397 = vrot.slane %v3396, 4
  %v3399 = vshll.u32 %v2919, 16
  %v3401 = vrot.slane %v3399, 5
  %v3402 = vsel %vm2970, %v3397, %v3401
  %v3404 = vshrl.u32 %v2920, 16
  %v3406 = vrot.slane %v3404, 4
  %v3407 = vshll.u32 %v2920, 16
  %v3409 = vrot.slane %v3407, 5
  %v3410 = vor.u32 %v3406, %v3409
  %v3411 = vrot.slane %v3410, 4
  %v3413 = vshll.u32 %v2921, 16
  %v3415 = vrot.slane %v3413, 5
  %v3416 = vsel %vm2970, %v3411, %v3415
  %v3417 = vshrl.u32 %v2921, 16
  %v3419 = vrot.slane %v3417, 4
  %v3420 = vor.u32 %v3419, %v3415
  %v3421 = vrot.slane %v3420, 4
  %v3423 = vshll.u32 %v2922, 16
  %v3425 = vrot.slane %v3423, 5
  %v3426 = vsel %vm2970, %v3421, %v3425
  %v3428 = vshrl.u32 %v2923, 16
  %v3430 = vrot.slane %v3428, 4
  %v3431 = vshll.u32 %v2923, 16
  %v3433 = vrot.slane %v3431, 5
  %v3434 = vor.u32 %v3430, %v3433
  %v3435 = vrot.slane %v3434, 4
  %v3437 = vshll.u32 %v2924, 16
  %v3439 = vrot.slane %v3437, 5
  %v3440 = vsel %vm2970, %v3435, %v3439
  %v3441 = vshrl.u32 %v2924, 16
  %v3443 = vrot.slane %v3441, 4
  %v3444 = vor.u32 %v3443, %v3439
  %v3445 = vrot.slane %v3444, 4
  %v3447 = vshll.u32 %v2925, 16
  %v3449 = vrot.slane %v3447, 5
  %v3450 = vsel %vm2970, %v3445, %v3449
  %v3452 = vshrl.u32 %v2926, 16
  %v3454 = vrot.slane %v3452, 4
  %v3455 = vshll.u32 %v2926, 16
  %v3457 = vrot.slane %v3455, 5
  %v3458 = vor.u32 %v3454, %v3457
  %v3459 = vrot.slane %v3458, 4
  %v3461 = vshll.u32 %v2927, 16
  %v3463 = vrot.slane %v3461, 5
  %v3464 = vsel %vm2970, %v3459, %v3463
  %v3465 = vshrl.u32 %v2927, 16
  %v3467 = vrot.slane %v3465, 4
  %v3468 = vor.u32 %v3467, %v3463
  %v3469 = vrot.slane %v3468, 4
  %v3471 = vshll.u32 %v2928, 16
  %v3473 = vrot.slane %v3471, 5
  %v3474 = vsel %vm2970, %v3469, %v3473
  %v3476 = vshrl.u32 %v2929, 16
  %v3478 = vrot.slane %v3476, 4
  %v3479 = vshll.u32 %v2929, 16
  %v3481 = vrot.slane %v3479, 5
  %v3482 = vor.u32 %v3478, %v3481
  %v3483 = vrot.slane %v3482, 4
  %v3485 = vshll.u32 %v2930, 16
  %v3487 = vrot.slane %v3485, 5
  %v3488 = vsel %vm2970, %v3483, %v3487
  %v3489 = vshrl.u32 %v2930, 16
  %v3491 = vrot.slane %v3489, 4
  %v3492 = vor.u32 %v3491, %v3487
  %v3493 = vrot.slane %v3492, 4
  %v3495 = vshll.u32 %v2931, 16
  %v3497 = vrot.slane %v3495, 5
  %v3498 = vsel %vm2970, %v3493, %v3497
  %v3500 = vshrl.u32 %v2932, 16
  %v3502 = vrot.slane %v3500, 4
  %v3503 = vshll.u32 %v2932, 16
  %v3505 = vrot.slane %v3503, 5
  %v3506 = vor.u32 %v3502, %v3505
  %v3507 = vrot.slane %v3506, 4
  %v3509 = vshll.u32 %v2933, 16
  %v3511 = vrot.slane %v3509, 5
  %v3512 = vsel %vm2970, %v3507, %v3511
  %v3513 = vshrl.u32 %v2933, 16
  %v3515 = vrot.slane %v3513, 4
  %v3516 = vor.u32 %v3515, %v3511
  %v3517 = vrot.slane %v3516, 4
  %v3519 = vshll.u32 %v2934, 16
  %v3521 = vrot.slane %v3519, 5
  %v3522 = vsel %vm2970, %v3517, %v3521
  %v3524 = vshrl.u32 %v2935, 16
  %v3526 = vrot.slane %v3524, 4
  %v3527 = vshll.u32 %v2935, 16
  %v3529 = vrot.slane %v3527, 5
  %v3530 = vor.u32 %v3526, %v3529
  %v3531 = vrot.slane %v3530, 4
  %v3533 = vshll.u32 %v2936, 16
  %v3535 = vrot.slane %v3533, 5
  %v3536 = vsel %vm2970, %v3531, %v3535
  %v3537 = vshrl.u32 %v2936, 16
  %v3539 = vrot.slane %v3537, 4
  %v3540 = vor.u32 %v3539, %v3535
  %v3541 = vrot.slane %v3540, 4
  %v3543 = vshll.u32 %v2937, 16
  %v3545 = vrot.slane %v3543, 5
  %v3546 = vsel %vm2970, %v3541, %v3545
  %v3548 = vshrl.u32 %v2938, 16
  %v3550 = vrot.slane %v3548, 4
  %v3551 = vshll.u32 %v2938, 16
  %v3553 = vrot.slane %v3551, 5
  %v3554 = vor.u32 %v3550, %v3553
  %v3555 = vrot.slane %v3554, 4
  %v3557 = vshll.u32 %v2939, 16
  %v3559 = vrot.slane %v3557, 5
  %v3560 = vsel %vm2970, %v3555, %v3559
  %v3561 = vshrl.u32 %v2939, 16
  %v3563 = vrot.slane %v3561, 4
  %v3564 = vor.u32 %v3563, %v3559
  %v3565 = vrot.slane %v3564, 4
  %v3567 = vshll.u32 %v2940, 16
  %v3569 = vrot.slane %v3567, 5
  %v3570 = vsel %vm2970, %v3565, %v3569
  %v3572 = vshrl.u32 %v2941, 16
  %v3574 = vrot.slane %v3572, 4
  %v3575 = vshll.u32 %v2941, 16
  %v3577 = vrot.slane %v3575, 5
  %v3578 = vor.u32 %v3574, %v3577
  %v3579 = vrot.slane %v3578, 4
  %v3581 = vshll.u32 %v2942, 16
  %v3583 = vrot.slane %v3581, 5
  %v3584 = vsel %vm2970, %v3579, %v3583
  %v3585 = vshrl.u32 %v2942, 16
  %v3587 = vrot.slane %v3585, 4
  %v3588 = vor.u32 %v3587, %v3583
  %v3589 = vrot.slane %v3588, 4
  %v3591 = vshll.u32 %v2943, 16
  %v3593 = vrot.slane %v3591, 5
  %v3594 = vsel %vm2970, %v3589, %v3593
  %v3596 = vshrl.u32 %v2944, 16
  %v3598 = vrot.slane %v3596, 4
  %v3599 = vshll.u32 %v2944, 16
  %v3601 = vrot.slane %v3599, 5
  %v3602 = vor.u32 %v3598, %v3601
  %v3603 = vrot.slane %v3602, 4
  %v3605 = vshll.u32 %v2945, 16
  %v3607 = vrot.slane %v3605, 5
  %v3608 = vsel %vm2970, %v3603, %v3607
  %v3609 = vshrl.u32 %v2945, 16
  %v3611 = vrot.slane %v3609, 4
  %v3612 = vor.u32 %v3611, %v3607
  %v3613 = vrot.slane %v3612, 4
  %v3615 = vshll.u32 %v2946, 16
  %v3617 = vrot.slane %v3615, 5
  %v3618 = vsel %vm2970, %v3613, %v3617
  %v3620 = vshrl.u32 %v2947, 16
  %v3622 = vrot.slane %v3620, 4
  %v3623 = vshll.u32 %v2947, 16
  %v3625 = vrot.slane %v3623, 5
  %v3626 = vor.u32 %v3622, %v3625
  %v3627 = vrot.slane %v3626, 4
  %v3629 = vshll.u32 %v2948, 16
  %v3631 = vrot.slane %v3629, 5
  %v3632 = vsel %vm2970, %v3627, %v3631
  %v3633 = vshrl.u32 %v2948, 16
  %v3635 = vrot.slane %v3633, 4
  %v3636 = vor.u32 %v3635, %v3631
  %v3637 = vrot.slane %v3636, 4
  %v3639 = vshll.u32 %v2949, 16
  %v3641 = vrot.slane %v3639, 5
  %v3642 = vsel %vm2970, %v3637, %v3641
  %v3644 = vshrl.u32 %v2950, 16
  %v3646 = vrot.slane %v3644, 4
  %v3647 = vshll.u32 %v2950, 16
  %v3649 = vrot.slane %v3647, 5
  %v3650 = vor.u32 %v3646, %v3649
  %v3651 = vrot.slane %v3650, 4
  %v3653 = vshll.u32 %v2951, 16
  %v3655 = vrot.slane %v3653, 5
  %v3656 = vsel %vm2970, %v3651, %v3655
  %v3657 = vshrl.u32 %v2951, 16
  %v3659 = vrot.slane %v3657, 4
  %v3660 = vor.u32 %v3659, %v3655
  %v3661 = vrot.slane %v3660, 4
  %v3663 = vshll.u32 %v2952, 16
  %v3665 = vrot.slane %v3663, 5
  %v3666 = vsel %vm2970, %v3661, %v3665
  %v3668 = vshrl.u32 %v2953, 16
  %v3670 = vrot.slane %v3668, 4
  %v3671 = vshll.u32 %v2953, 16
  %v3673 = vrot.slane %v3671, 5
  %v3674 = vor.u32 %v3670, %v3673
  %v3675 = vrot.slane %v3674, 4
  %v3677 = vshll.u32 %v2954, 16
  %v3679 = vrot.slane %v3677, 5
  %v3680 = vsel %vm2970, %v3675, %v3679
  %v3681 = vshrl.u32 %v2954, 16
  %v3683 = vrot.slane %v3681, 4
  %v3684 = vor.u32 %v3683, %v3679
  %v3685 = vrot.slane %v3684, 4
  %v3687 = vshll.u32 %v2955, 16
  %v3689 = vrot.slane %v3687, 5
  %v3690 = vsel %vm2970, %v3685, %v3689
  %v3692 = vshrl.u32 %v2956, 16
  %v3694 = vrot.slane %v3692, 4
  %v3695 = vshll.u32 %v2956, 16
  %v3697 = vrot.slane %v3695, 5
  %v3698 = vor.u32 %v3694, %v3697
  %v3699 = vrot.slane %v3698, 4
  %v3701 = vshll.u32 %v2957, 16
  %v3703 = vrot.slane %v3701, 5
  %v3704 = vsel %vm2970, %v3699, %v3703
  %v3705 = vshrl.u32 %v2957, 16
  %v3707 = vrot.slane %v3705, 4
  %v3708 = vor.u32 %v3707, %v3703
  %v3709 = vrot.slane %v3708, 4
  %v3711 = vshll.u32 %v2958, 16
  %v3713 = vrot.slane %v3711, 5
  %v3714 = vsel %vm2970, %v3709, %v3713
  %v3716 = vshrl.u32 %v2959, 16
  %v3718 = vrot.slane %v3716, 4
  %v3719 = vshll.u32 %v2959, 16
  %v3721 = vrot.slane %v3719, 5
  %v3722 = vor.u32 %v3718, %v3721
  %v3723 = vrot.slane %v3722, 4
  %v3725 = vshll.u32 %v2960, 16
  %v3727 = vrot.slane %v3725, 5
  %v3728 = vsel %vm2970, %v3723, %v3727
  %v3729 = vshrl.u32 %v2960, 16
  %v3731 = vrot.slane %v3729, 4
  %v3732 = vor.u32 %v3731, %v3727
  %v3733 = vrot.slane %v3732, 4
  %v3735 = vshll.u32 %v2961, 16
  %v3737 = vrot.slane %v3735, 5
  %v3738 = vsel %vm2970, %v3733, %v3737
  %s3739 = scalar_lea.vmem %s4, 8
  %v3740 = vld [vmem:[%s3739] sm:$0xf]
  %v3741 = vld [vmem:[%s3739 + $0x4] sm:$0xf]
  %v3742 = vunpack.c.l.b16 %v2984
  %v3743 = vunpack.c.l.b16 %v2994
  %v3744 = vunpack.c.l.b16 %v3008
  %v3745 = vunpack.c.l.b16 %v3018
  %v3746 = vunpack.c.l.b16 %v3032
  %v3747 = vunpack.c.l.b16 %v3042
  %v3748 = vunpack.c.l.b16 %v3056
  %v3749 = vunpack.c.l.b16 %v3066
  %v3750 = vunpack.c.l.b16 %v3080
  %v3751 = vunpack.c.l.b16 %v3090
  %v3752 = vunpack.c.l.b16 %v3104
  %v3753 = vunpack.c.l.b16 %v3114
  %v3754 = vunpack.c.l.b16 %v3128
  %v3755 = vunpack.c.l.b16 %v3138
  %v3756 = vunpack.c.l.b16 %v3152
  %v3757 = vunpack.c.l.b16 %v3162
  %v3758 = vunpack.c.l.b16 %v3176
  %v3759 = vunpack.c.l.b16 %v3186
  %v3760 = vunpack.c.l.b16 %v3200
  %v3761 = vunpack.c.l.b16 %v3210
  %v3762 = vunpack.c.l.b16 %v3224
  %v3763 = vunpack.c.l.b16 %v3234
  %v3764 = vunpack.c.l.b16 %v3248
  %v3765 = vunpack.c.l.b16 %v3258
  %v3766 = vunpack.c.l.b16 %v3272
  %v3767 = vunpack.c.l.b16 %v3282
  %v3768 = vunpack.c.l.b16 %v3296
  %v3769 = vunpack.c.l.b16 %v3306
  %v3770 = vunpack.c.l.b16 %v3320
  %v3771 = vunpack.c.l.b16 %v3330
  %v3772 = vunpack.c.l.b16 %v3344
  %v3773 = vunpack.c.l.b16 %v3354
  %v3774 = vunpack.c.l.b16 %v3368
  %v3775 = vunpack.c.l.b16 %v3378
  %v3776 = vunpack.c.l.b16 %v3392
  %v3777 = vunpack.c.l.b16 %v3402
  %v3778 = vunpack.c.l.b16 %v3416
  %v3779 = vunpack.c.l.b16 %v3426
  %v3780 = vunpack.c.l.b16 %v3440
  %v3781 = vunpack.c.l.b16 %v3450
  %v3782 = vunpack.c.l.b16 %v3464
  %v3783 = vunpack.c.l.b16 %v3474
  %v3784 = vunpack.c.l.b16 %v3488
  %v3785 = vunpack.c.l.b16 %v3498
  %v3786 = vunpack.c.l.b16 %v3512
  %v3787 = vunpack.c.l.b16 %v3522
  %v3788 = vunpack.c.l.b16 %v3536
  %v3789 = vunpack.c.l.b16 %v3546
  %v3790 = vunpack.c.l.b16 %v3560
  %v3791 = vunpack.c.l.b16 %v3570
  %v3792 = vunpack.c.l.b16 %v3584
  %v3793 = vunpack.c.l.b16 %v3594
  %v3794 = vunpack.c.l.b16 %v3608
  %v3795 = vunpack.c.l.b16 %v3618
  %v3796 = vunpack.c.l.b16 %v3632
  %v3797 = vunpack.c.l.b16 %v3642
  %v3798 = vunpack.c.l.b16 %v3656
  %v3799 = vunpack.c.l.b16 %v3666
  %v3800 = vunpack.c.l.b16 %v3680
  %v3801 = vunpack.c.l.b16 %v3690
  %v3802 = vunpack.c.l.b16 %v3704
  %v3803 = vunpack.c.l.b16 %v3714
  %v3804 = vunpack.c.l.b16 %v3728
  %v3805 = vunpack.c.l.b16 %v3738
  %v3806 = vpack.c.b16 %v3743, %v3742
  %v3807 = vpack.c.b16 %v3745, %v3744
  %v3808 = vpack.c.b16 %v3747, %v3746
  %v3809 = vpack.c.b16 %v3749, %v3748
  %v3810 = vpack.c.b16 %v3751, %v3750
  %v3811 = vpack.c.b16 %v3753, %v3752
  %v3812 = vpack.c.b16 %v3755, %v3754
  %v3813 = vpack.c.b16 %v3757, %v3756
  %v3814 = vpack.c.b16 %v3759, %v3758
  %v3815 = vpack.c.b16 %v3761, %v3760
  %v3816 = vpack.c.b16 %v3763, %v3762
  %v3817 = vpack.c.b16 %v3765, %v3764
  %v3818 = vpack.c.b16 %v3767, %v3766
  %v3819 = vpack.c.b16 %v3769, %v3768
  %v3820 = vpack.c.b16 %v3771, %v3770
  %v3821 = vpack.c.b16 %v3773, %v3772
  %v3822 = vpack.c.b16 %v3775, %v3774
  %v3823 = vpack.c.b16 %v3777, %v3776
  %v3824 = vpack.c.b16 %v3779, %v3778
  %v3825 = vpack.c.b16 %v3781, %v3780
  %v3826 = vpack.c.b16 %v3783, %v3782
  %v3827 = vpack.c.b16 %v3785, %v3784
  %v3828 = vpack.c.b16 %v3787, %v3786
  %v3829 = vpack.c.b16 %v3789, %v3788
  %v3830 = vpack.c.b16 %v3791, %v3790
  %v3831 = vpack.c.b16 %v3793, %v3792
  %v3832 = vpack.c.b16 %v3795, %v3794
  %v3833 = vpack.c.b16 %v3797, %v3796
  %v3834 = vpack.c.b16 %v3799, %v3798
  %v3835 = vpack.c.b16 %v3801, %v3800
  %v3836 = vpack.c.b16 %v3803, %v3802
  %v3837 = vpack.c.b16 %v3805, %v3804
  %v3840 = vunpack.c.l.b16 %v3740
  %v3841 = vunpack.c.l.b16 %v3741
  %v3842 = vpack.c.b16 %v3841, %v3840
  %v3845 = vsel %vm2145, %v3806, 0
  %v3848 = vsel %vm2145, %v3807, 0
  %v3851 = vsel %vm2145, %v3808, 0
  %v3854 = vsel %vm2145, %v3809, 0
  %v3857 = vsel %vm2145, %v3810, 0
  %v3860 = vsel %vm2145, %v3811, 0
  %v3863 = vsel %vm2145, %v3812, 0
  %v3866 = vsel %vm2145, %v3813, 0
  %v3869 = vsel %vm2145, %v3814, 0
  %v3872 = vsel %vm2145, %v3815, 0
  %v3875 = vsel %vm2145, %v3816, 0
  %v3878 = vsel %vm2145, %v3817, 0
  %v3881 = vsel %vm2145, %v3818, 0
  %v3884 = vsel %vm2145, %v3819, 0
  %v3887 = vsel %vm2145, %v3820, 0
  %v3890 = vsel %vm2145, %v3821, 0
  %v3893 = vsel %vm2145, %v3822, 0
  %v3896 = vsel %vm2145, %v3823, 0
  %v3899 = vsel %vm2145, %v3824, 0
  %v3902 = vsel %vm2145, %v3825, 0
  %v3905 = vsel %vm2145, %v3826, 0
  %v3908 = vsel %vm2145, %v3827, 0
  %v3911 = vsel %vm2145, %v3828, 0
  %v3914 = vsel %vm2145, %v3829, 0
  %v3917 = vsel %vm2145, %v3830, 0
  %v3920 = vsel %vm2145, %v3831, 0
  %v3923 = vsel %vm2145, %v3832, 0
  %v3926 = vsel %vm2145, %v3833, 0
  %v3929 = vsel %vm2145, %v3834, 0
  %v3932 = vsel %vm2145, %v3835, 0
  %v3935 = vsel %vm2145, %v3836, 0
  %v3938 = vsel %vm2145, %v3837, 0
  %3940 = vmatpush.bf16.msra.mxu0 0
  %3941 = vmatpush.bf16.msra.mxu0 0
  %3942 = vmatpush.bf16.msra.mxu0 0
  %3943 = vmatpush.bf16.msra.mxu0 0
  %3944 = vmatpush.bf16.msra.mxu0 0
  %3945 = vmatpush.bf16.msra.mxu0 0
  %3946 = vmatpush.bf16.msra.mxu0 0
  %3947 = vmatpush.bf16.msra.mxu0 %v3842
  %3948 = vmatmul.bf16.gmra.mxu0 %v3845
  %v3949 = vpop.f32.mrf.mxu0
  %v3950 = vadd.f32 0.0, %v3949
  %v3951 = vpop.f32.mrf.mxu0
  %v3952 = vadd.f32 0.0, %v3951
  %3953 = vmatmul.bf16.gmra.mxu0 %v3848
  %v3954 = vpop.f32.mrf.mxu0
  %v3955 = vadd.f32 0.0, %v3954
  %v3956 = vpop.f32.mrf.mxu0
  %v3957 = vadd.f32 0.0, %v3956
  %3958 = vmatmul.bf16.gmra.mxu0 %v3851
  %v3959 = vpop.f32.mrf.mxu0
  %v3960 = vadd.f32 0.0, %v3959
  %v3961 = vpop.f32.mrf.mxu0
  %v3962 = vadd.f32 0.0, %v3961
  %3963 = vmatmul.bf16.gmra.mxu0 %v3854
  %v3964 = vpop.f32.mrf.mxu0
  %v3965 = vadd.f32 0.0, %v3964
  %v3966 = vpop.f32.mrf.mxu0
  %v3967 = vadd.f32 0.0, %v3966
  %3968 = vmatmul.bf16.gmra.mxu0 %v3857
  %v3969 = vpop.f32.mrf.mxu0
  %v3970 = vadd.f32 0.0, %v3969
  %v3971 = vpop.f32.mrf.mxu0
  %v3972 = vadd.f32 0.0, %v3971
  %3973 = vmatmul.bf16.gmra.mxu0 %v3860
  %v3974 = vpop.f32.mrf.mxu0
  %v3975 = vadd.f32 0.0, %v3974
  %v3976 = vpop.f32.mrf.mxu0
  %v3977 = vadd.f32 0.0, %v3976
  %3978 = vmatmul.bf16.gmra.mxu0 %v3863
  %v3979 = vpop.f32.mrf.mxu0
  %v3980 = vadd.f32 0.0, %v3979
  %v3981 = vpop.f32.mrf.mxu0
  %v3982 = vadd.f32 0.0, %v3981
  %3983 = vmatmul.bf16.gmra.mxu0 %v3866
  %v3984 = vpop.f32.mrf.mxu0
  %v3985 = vadd.f32 0.0, %v3984
  %v3986 = vpop.f32.mrf.mxu0
  %v3987 = vadd.f32 0.0, %v3986
  %3988 = vmatmul.bf16.gmra.mxu0 %v3869
  %v3989 = vpop.f32.mrf.mxu0
  %v3990 = vadd.f32 0.0, %v3989
  %v3991 = vpop.f32.mrf.mxu0
  %v3992 = vadd.f32 0.0, %v3991
  %3993 = vmatmul.bf16.gmra.mxu0 %v3872
  %v3994 = vpop.f32.mrf.mxu0
  %v3995 = vadd.f32 0.0, %v3994
  %v3996 = vpop.f32.mrf.mxu0
  %v3997 = vadd.f32 0.0, %v3996
  %3998 = vmatmul.bf16.gmra.mxu0 %v3875
  %v3999 = vpop.f32.mrf.mxu0
  %v4000 = vadd.f32 0.0, %v3999
  %v4001 = vpop.f32.mrf.mxu0
  %v4002 = vadd.f32 0.0, %v4001
  %4003 = vmatmul.bf16.gmra.mxu0 %v3878
  %v4004 = vpop.f32.mrf.mxu0
  %v4005 = vadd.f32 0.0, %v4004
  %v4006 = vpop.f32.mrf.mxu0
  %v4007 = vadd.f32 0.0, %v4006
  %4008 = vmatmul.bf16.gmra.mxu0 %v3881
  %v4009 = vpop.f32.mrf.mxu0
  %v4010 = vadd.f32 0.0, %v4009
  %v4011 = vpop.f32.mrf.mxu0
  %v4012 = vadd.f32 0.0, %v4011
  %4013 = vmatmul.bf16.gmra.mxu0 %v3884
  %v4014 = vpop.f32.mrf.mxu0
  %v4015 = vadd.f32 0.0, %v4014
  %v4016 = vpop.f32.mrf.mxu0
  %v4017 = vadd.f32 0.0, %v4016
  %4018 = vmatmul.bf16.gmra.mxu0 %v3887
  %v4019 = vpop.f32.mrf.mxu0
  %v4020 = vadd.f32 0.0, %v4019
  %v4021 = vpop.f32.mrf.mxu0
  %v4022 = vadd.f32 0.0, %v4021
  %4023 = vmatmul.bf16.gmra.mxu0 %v3890
  %v4024 = vpop.f32.mrf.mxu0
  %v4025 = vadd.f32 0.0, %v4024
  %v4026 = vpop.f32.mrf.mxu0
  %v4027 = vadd.f32 0.0, %v4026
  %4028 = vmatmul.bf16.gmra.mxu0 %v3893
  %v4029 = vpop.f32.mrf.mxu0
  %v4030 = vadd.f32 0.0, %v4029
  %v4031 = vpop.f32.mrf.mxu0
  %v4032 = vadd.f32 0.0, %v4031
  %4033 = vmatmul.bf16.gmra.mxu0 %v3896
  %v4034 = vpop.f32.mrf.mxu0
  %v4035 = vadd.f32 0.0, %v4034
  %v4036 = vpop.f32.mrf.mxu0
  %v4037 = vadd.f32 0.0, %v4036
  %4038 = vmatmul.bf16.gmra.mxu0 %v3899
  %v4039 = vpop.f32.mrf.mxu0
  %v4040 = vadd.f32 0.0, %v4039
  %v4041 = vpop.f32.mrf.mxu0
  %v4042 = vadd.f32 0.0, %v4041
  %4043 = vmatmul.bf16.gmra.mxu0 %v3902
  %v4044 = vpop.f32.mrf.mxu0
  %v4045 = vadd.f32 0.0, %v4044
  %v4046 = vpop.f32.mrf.mxu0
  %v4047 = vadd.f32 0.0, %v4046
  %4048 = vmatmul.bf16.gmra.mxu0 %v3905
  %v4049 = vpop.f32.mrf.mxu0
  %v4050 = vadd.f32 0.0, %v4049
  %v4051 = vpop.f32.mrf.mxu0
  %v4052 = vadd.f32 0.0, %v4051
  %4053 = vmatmul.bf16.gmra.mxu0 %v3908
  %v4054 = vpop.f32.mrf.mxu0
  %v4055 = vadd.f32 0.0, %v4054
  %v4056 = vpop.f32.mrf.mxu0
  %v4057 = vadd.f32 0.0, %v4056
  %4058 = vmatmul.bf16.gmra.mxu0 %v3911
  %v4059 = vpop.f32.mrf.mxu0
  %v4060 = vadd.f32 0.0, %v4059
  %v4061 = vpop.f32.mrf.mxu0
  %v4062 = vadd.f32 0.0, %v4061
  %4063 = vmatmul.bf16.gmra.mxu0 %v3914
  %v4064 = vpop.f32.mrf.mxu0
  %v4065 = vadd.f32 0.0, %v4064
  %v4066 = vpop.f32.mrf.mxu0
  %v4067 = vadd.f32 0.0, %v4066
  %4068 = vmatmul.bf16.gmra.mxu0 %v3917
  %v4069 = vpop.f32.mrf.mxu0
  %v4070 = vadd.f32 0.0, %v4069
  %v4071 = vpop.f32.mrf.mxu0
  %v4072 = vadd.f32 0.0, %v4071
  %4073 = vmatmul.bf16.gmra.mxu0 %v3920
  %v4074 = vpop.f32.mrf.mxu0
  %v4075 = vadd.f32 0.0, %v4074
  %v4076 = vpop.f32.mrf.mxu0
  %v4077 = vadd.f32 0.0, %v4076
  %4078 = vmatmul.bf16.gmra.mxu0 %v3923
  %v4079 = vpop.f32.mrf.mxu0
  %v4080 = vadd.f32 0.0, %v4079
  %v4081 = vpop.f32.mrf.mxu0
  %v4082 = vadd.f32 0.0, %v4081
  %4083 = vmatmul.bf16.gmra.mxu0 %v3926
  %v4084 = vpop.f32.mrf.mxu0
  %v4085 = vadd.f32 0.0, %v4084
  %v4086 = vpop.f32.mrf.mxu0
  %v4087 = vadd.f32 0.0, %v4086
  %4088 = vmatmul.bf16.gmra.mxu0 %v3929
  %v4089 = vpop.f32.mrf.mxu0
  %v4090 = vadd.f32 0.0, %v4089
  %v4091 = vpop.f32.mrf.mxu0
  %v4092 = vadd.f32 0.0, %v4091
  %4093 = vmatmul.bf16.gmra.mxu0 %v3932
  %v4094 = vpop.f32.mrf.mxu0
  %v4095 = vadd.f32 0.0, %v4094
  %v4096 = vpop.f32.mrf.mxu0
  %v4097 = vadd.f32 0.0, %v4096
  %4098 = vmatmul.bf16.gmra.mxu0 %v3935
  %v4099 = vpop.f32.mrf.mxu0
  %v4100 = vadd.f32 0.0, %v4099
  %v4101 = vpop.f32.mrf.mxu0
  %v4102 = vadd.f32 0.0, %v4101
  %4103 = vmatmul.bf16.gmra.mxu0 %v3938
  %v4104 = vpop.f32.mrf.mxu0
  %v4105 = vadd.f32 0.0, %v4104
  %v4106 = vpop.f32.mrf.mxu0
  %v4107 = vadd.f32 0.0, %v4106
  %4108 = vdwg.mxu0
  %v4109 = vadd.f32 %v2796, %v3950
  %v4110 = vadd.f32 %v2797, %v3952
  %v4111 = vadd.f32 %v2798, %v3955
  %v4112 = vadd.f32 %v2799, %v3957
  %v4113 = vadd.f32 %v2800, %v3960
  %v4114 = vadd.f32 %v2801, %v3962
  %v4115 = vadd.f32 %v2802, %v3965
  %v4116 = vadd.f32 %v2803, %v3967
  %v4117 = vadd.f32 %v2804, %v3970
  %v4118 = vadd.f32 %v2805, %v3972
  %v4119 = vadd.f32 %v2806, %v3975
  %v4120 = vadd.f32 %v2807, %v3977
  %v4121 = vadd.f32 %v2808, %v3980
  %v4122 = vadd.f32 %v2809, %v3982
  %v4123 = vadd.f32 %v2810, %v3985
  %v4124 = vadd.f32 %v2811, %v3987
  %v4125 = vadd.f32 %v2812, %v3990
  %v4126 = vadd.f32 %v2813, %v3992
  %v4127 = vadd.f32 %v2814, %v3995
  %v4128 = vadd.f32 %v2815, %v3997
  %v4129 = vadd.f32 %v2816, %v4000
  %v4130 = vadd.f32 %v2817, %v4002
  %v4131 = vadd.f32 %v2818, %v4005
  %v4132 = vadd.f32 %v2819, %v4007
  %v4133 = vadd.f32 %v2820, %v4010
  %v4134 = vadd.f32 %v2821, %v4012
  %v4135 = vadd.f32 %v2822, %v4015
  %v4136 = vadd.f32 %v2823, %v4017
  %v4137 = vadd.f32 %v2824, %v4020
  %v4138 = vadd.f32 %v2825, %v4022
  %v4139 = vadd.f32 %v2826, %v4025
  %v4140 = vadd.f32 %v2827, %v4027
  %v4141 = vadd.f32 %v2828, %v4030
  %v4142 = vadd.f32 %v2829, %v4032
  %v4143 = vadd.f32 %v2830, %v4035
  %v4144 = vadd.f32 %v2831, %v4037
  %v4145 = vadd.f32 %v2832, %v4040
  %v4146 = vadd.f32 %v2833, %v4042
  %v4147 = vadd.f32 %v2834, %v4045
  %v4148 = vadd.f32 %v2835, %v4047
  %v4149 = vadd.f32 %v2836, %v4050
  %v4150 = vadd.f32 %v2837, %v4052
  %v4151 = vadd.f32 %v2838, %v4055
  %v4152 = vadd.f32 %v2839, %v4057
  %v4153 = vadd.f32 %v2840, %v4060
  %v4154 = vadd.f32 %v2841, %v4062
  %v4155 = vadd.f32 %v2842, %v4065
  %v4156 = vadd.f32 %v2843, %v4067
  %v4157 = vadd.f32 %v2844, %v4070
  %v4158 = vadd.f32 %v2845, %v4072
  %v4159 = vadd.f32 %v2846, %v4075
  %v4160 = vadd.f32 %v2847, %v4077
  %v4161 = vadd.f32 %v2848, %v4080
  %v4162 = vadd.f32 %v2849, %v4082
  %v4163 = vadd.f32 %v2850, %v4085
  %v4164 = vadd.f32 %v2851, %v4087
  %v4165 = vadd.f32 %v2852, %v4090
  %v4166 = vadd.f32 %v2853, %v4092
  %v4167 = vadd.f32 %v2854, %v4095
  %v4168 = vadd.f32 %v2855, %v4097
  %v4169 = vadd.f32 %v2856, %v4100
  %v4170 = vadd.f32 %v2857, %v4102
  %v4171 = vadd.f32 %v2858, %v4105
  %v4172 = vadd.f32 %v2859, %v4107
  %v4174 = vshrl.u32 %v2908, 16
  %v4176 = vrot.slane %v4174, 4
  %v4177 = vshll.u32 %v2908, 16
  %v4179 = vrot.slane %v4177, 5
  %v4180 = vor.u32 %v4176, %v4179
  %v4181 = vrot.slane %v4180, 4
  %v4183 = vshll.u32 %v2909, 16
  %v4185 = vrot.slane %v4183, 5
  %v4186 = vsel %vm2970, %v4181, %v4185
  %v4187 = vshrl.u32 %v2909, 16
  %v4189 = vrot.slane %v4187, 4
  %v4190 = vor.u32 %v4189, %v4185
  %v4191 = vrot.slane %v4190, 4
  %v4193 = vshll.u32 %v2910, 16
  %v4195 = vrot.slane %v4193, 5
  %v4196 = vsel %vm2970, %v4191, %v4195
  %v4198 = vshrl.u32 %v2962, 16
  %v4200 = vrot.slane %v4198, 4
  %v4201 = vshll.u32 %v2962, 16
  %v4203 = vrot.slane %v4201, 5
  %v4204 = vor.u32 %v4200, %v4203
  %v4205 = vrot.slane %v4204, 4
  %v4207 = vshll.u32 %v2963, 16
  %v4209 = vrot.slane %v4207, 5
  %v4210 = vsel %vm2970, %v4205, %v4209
  %v4211 = vshrl.u32 %v2963, 16
  %v4213 = vrot.slane %v4211, 4
  %v4214 = vor.u32 %v4213, %v4209
  %v4215 = vrot.slane %v4214, 4
  %v4217 = vshll.u32 %v2964, 16
  %v4219 = vrot.slane %v4217, 5
  %v4220 = vsel %vm2970, %v4215, %v4219
  %s4221 = scalar_lea.vmem %s4, 32
  %v4222 = vld [vmem:[%s4221] sm:$0xf]
  %v4223 = vld [vmem:[%s4221 + $0x4] sm:$0xf]
  %v4224 = vunpack.c.l.b16 %v4186
  %v4225 = vunpack.c.l.b16 %v4196
  %v4226 = vunpack.c.l.b16 %v4210
  %v4227 = vunpack.c.l.b16 %v4220
  %v4228 = vpack.c.b16 %v4225, %v4224
  %v4229 = vpack.c.b16 %v4227, %v4226
  %v4232 = vunpack.c.l.b16 %v4222
  %v4233 = vunpack.c.l.b16 %v4223
  %v4234 = vpack.c.b16 %v4233, %v4232
  %v4237 = vsel %vm2145, %v4228, 0
  %v4240 = vsel %vm2145, %v4229, 0
  %4242 = vmatpush.bf16.msra.mxu0 0
  %4243 = vmatpush.bf16.msra.mxu0 0
  %4244 = vmatpush.bf16.msra.mxu0 0
  %4245 = vmatpush.bf16.msra.mxu0 0
  %4246 = vmatpush.bf16.msra.mxu0 0
  %4247 = vmatpush.bf16.msra.mxu0 0
  %4248 = vmatpush.bf16.msra.mxu0 0
  %4249 = vmatpush.bf16.msra.mxu0 %v4234
  %4250 = vmatmul.bf16.gmra.mxu0 %v3848
  %v4251 = vpop.f32.mrf.mxu0
  %v4252 = vadd.f32 0.0, %v4251
  %v4253 = vpop.f32.mrf.mxu0
  %v4254 = vadd.f32 0.0, %v4253
  %4255 = vmatmul.bf16.gmra.mxu0 %v3851
  %v4256 = vpop.f32.mrf.mxu0
  %v4257 = vadd.f32 0.0, %v4256
  %v4258 = vpop.f32.mrf.mxu0
  %v4259 = vadd.f32 0.0, %v4258
  %4260 = vmatmul.bf16.gmra.mxu0 %v3854
  %v4261 = vpop.f32.mrf.mxu0
  %v4262 = vadd.f32 0.0, %v4261
  %v4263 = vpop.f32.mrf.mxu0
  %v4264 = vadd.f32 0.0, %v4263
  %4265 = vmatmul.bf16.gmra.mxu0 %v3857
  %v4266 = vpop.f32.mrf.mxu0
  %v4267 = vadd.f32 0.0, %v4266
  %v4268 = vpop.f32.mrf.mxu0
  %v4269 = vadd.f32 0.0, %v4268
  %4270 = vmatmul.bf16.gmra.mxu0 %v3860
  %v4271 = vpop.f32.mrf.mxu0
  %v4272 = vadd.f32 0.0, %v4271
  %v4273 = vpop.f32.mrf.mxu0
  %v4274 = vadd.f32 0.0, %v4273
  %4275 = vmatmul.bf16.gmra.mxu0 %v3863
  %v4276 = vpop.f32.mrf.mxu0
  %v4277 = vadd.f32 0.0, %v4276
  %v4278 = vpop.f32.mrf.mxu0
  %v4279 = vadd.f32 0.0, %v4278
  %4280 = vmatmul.bf16.gmra.mxu0 %v3866
  %v4281 = vpop.f32.mrf.mxu0
  %v4282 = vadd.f32 0.0, %v4281
  %v4283 = vpop.f32.mrf.mxu0
  %v4284 = vadd.f32 0.0, %v4283
  %4285 = vmatmul.bf16.gmra.mxu0 %v3869
  %v4286 = vpop.f32.mrf.mxu0
  %v4287 = vadd.f32 0.0, %v4286
  %v4288 = vpop.f32.mrf.mxu0
  %v4289 = vadd.f32 0.0, %v4288
  %4290 = vmatmul.bf16.gmra.mxu0 %v3872
  %v4291 = vpop.f32.mrf.mxu0
  %v4292 = vadd.f32 0.0, %v4291
  %v4293 = vpop.f32.mrf.mxu0
  %v4294 = vadd.f32 0.0, %v4293
  %4295 = vmatmul.bf16.gmra.mxu0 %v3875
  %v4296 = vpop.f32.mrf.mxu0
  %v4297 = vadd.f32 0.0, %v4296
  %v4298 = vpop.f32.mrf.mxu0
  %v4299 = vadd.f32 0.0, %v4298
  %4300 = vmatmul.bf16.gmra.mxu0 %v3878
  %v4301 = vpop.f32.mrf.mxu0
  %v4302 = vadd.f32 0.0, %v4301
  %v4303 = vpop.f32.mrf.mxu0
  %v4304 = vadd.f32 0.0, %v4303
  %4305 = vmatmul.bf16.gmra.mxu0 %v3881
  %v4306 = vpop.f32.mrf.mxu0
  %v4307 = vadd.f32 0.0, %v4306
  %v4308 = vpop.f32.mrf.mxu0
  %v4309 = vadd.f32 0.0, %v4308
  %4310 = vmatmul.bf16.gmra.mxu0 %v3884
  %v4311 = vpop.f32.mrf.mxu0
  %v4312 = vadd.f32 0.0, %v4311
  %v4313 = vpop.f32.mrf.mxu0
  %v4314 = vadd.f32 0.0, %v4313
  %4315 = vmatmul.bf16.gmra.mxu0 %v3887
  %v4316 = vpop.f32.mrf.mxu0
  %v4317 = vadd.f32 0.0, %v4316
  %v4318 = vpop.f32.mrf.mxu0
  %v4319 = vadd.f32 0.0, %v4318
  %4320 = vmatmul.bf16.gmra.mxu0 %v3890
  %v4321 = vpop.f32.mrf.mxu0
  %v4322 = vadd.f32 0.0, %v4321
  %v4323 = vpop.f32.mrf.mxu0
  %v4324 = vadd.f32 0.0, %v4323
  %4325 = vmatmul.bf16.gmra.mxu0 %v4237
  %v4326 = vpop.f32.mrf.mxu0
  %v4327 = vadd.f32 0.0, %v4326
  %v4328 = vpop.f32.mrf.mxu0
  %v4329 = vadd.f32 0.0, %v4328
  %4330 = vmatmul.bf16.gmra.mxu0 %v3896
  %v4331 = vpop.f32.mrf.mxu0
  %v4332 = vadd.f32 0.0, %v4331
  %v4333 = vpop.f32.mrf.mxu0
  %v4334 = vadd.f32 0.0, %v4333
  %4335 = vmatmul.bf16.gmra.mxu0 %v3899
  %v4336 = vpop.f32.mrf.mxu0
  %v4337 = vadd.f32 0.0, %v4336
  %v4338 = vpop.f32.mrf.mxu0
  %v4339 = vadd.f32 0.0, %v4338
  %4340 = vmatmul.bf16.gmra.mxu0 %v3902
  %v4341 = vpop.f32.mrf.mxu0
  %v4342 = vadd.f32 0.0, %v4341
  %v4343 = vpop.f32.mrf.mxu0
  %v4344 = vadd.f32 0.0, %v4343
  %4345 = vmatmul.bf16.gmra.mxu0 %v3905
  %v4346 = vpop.f32.mrf.mxu0
  %v4347 = vadd.f32 0.0, %v4346
  %v4348 = vpop.f32.mrf.mxu0
  %v4349 = vadd.f32 0.0, %v4348
  %4350 = vmatmul.bf16.gmra.mxu0 %v3908
  %v4351 = vpop.f32.mrf.mxu0
  %v4352 = vadd.f32 0.0, %v4351
  %v4353 = vpop.f32.mrf.mxu0
  %v4354 = vadd.f32 0.0, %v4353
  %4355 = vmatmul.bf16.gmra.mxu0 %v3911
  %v4356 = vpop.f32.mrf.mxu0
  %v4357 = vadd.f32 0.0, %v4356
  %v4358 = vpop.f32.mrf.mxu0
  %v4359 = vadd.f32 0.0, %v4358
  %4360 = vmatmul.bf16.gmra.mxu0 %v3914
  %v4361 = vpop.f32.mrf.mxu0
  %v4362 = vadd.f32 0.0, %v4361
  %v4363 = vpop.f32.mrf.mxu0
  %v4364 = vadd.f32 0.0, %v4363
  %4365 = vmatmul.bf16.gmra.mxu0 %v3917
  %v4366 = vpop.f32.mrf.mxu0
  %v4367 = vadd.f32 0.0, %v4366
  %v4368 = vpop.f32.mrf.mxu0
  %v4369 = vadd.f32 0.0, %v4368
  %4370 = vmatmul.bf16.gmra.mxu0 %v3920
  %v4371 = vpop.f32.mrf.mxu0
  %v4372 = vadd.f32 0.0, %v4371
  %v4373 = vpop.f32.mrf.mxu0
  %v4374 = vadd.f32 0.0, %v4373
  %4375 = vmatmul.bf16.gmra.mxu0 %v3923
  %v4376 = vpop.f32.mrf.mxu0
  %v4377 = vadd.f32 0.0, %v4376
  %v4378 = vpop.f32.mrf.mxu0
  %v4379 = vadd.f32 0.0, %v4378
  %4380 = vmatmul.bf16.gmra.mxu0 %v3926
  %v4381 = vpop.f32.mrf.mxu0
  %v4382 = vadd.f32 0.0, %v4381
  %v4383 = vpop.f32.mrf.mxu0
  %v4384 = vadd.f32 0.0, %v4383
  %4385 = vmatmul.bf16.gmra.mxu0 %v3929
  %v4386 = vpop.f32.mrf.mxu0
  %v4387 = vadd.f32 0.0, %v4386
  %v4388 = vpop.f32.mrf.mxu0
  %v4389 = vadd.f32 0.0, %v4388
  %4390 = vmatmul.bf16.gmra.mxu0 %v3932
  %v4391 = vpop.f32.mrf.mxu0
  %v4392 = vadd.f32 0.0, %v4391
  %v4393 = vpop.f32.mrf.mxu0
  %v4394 = vadd.f32 0.0, %v4393
  %4395 = vmatmul.bf16.gmra.mxu0 %v3935
  %v4396 = vpop.f32.mrf.mxu0
  %v4397 = vadd.f32 0.0, %v4396
  %v4398 = vpop.f32.mrf.mxu0
  %v4399 = vadd.f32 0.0, %v4398
  %4400 = vmatmul.bf16.gmra.mxu0 %v3938
  %v4401 = vpop.f32.mrf.mxu0
  %v4402 = vadd.f32 0.0, %v4401
  %v4403 = vpop.f32.mrf.mxu0
  %v4404 = vadd.f32 0.0, %v4403
  %4405 = vmatmul.bf16.gmra.mxu0 %v4240
  %v4406 = vpop.f32.mrf.mxu0
  %v4407 = vadd.f32 0.0, %v4406
  %v4408 = vpop.f32.mrf.mxu0
  %v4409 = vadd.f32 0.0, %v4408
  %4410 = vdwg.mxu0
  %v4411 = vadd.f32 %v4109, %v4252
  %v4412 = vadd.f32 %v4110, %v4254
  %v4413 = vadd.f32 %v4111, %v4257
  %v4414 = vadd.f32 %v4112, %v4259
  %v4415 = vadd.f32 %v4113, %v4262
  %v4416 = vadd.f32 %v4114, %v4264
  %v4417 = vadd.f32 %v4115, %v4267
  %v4418 = vadd.f32 %v4116, %v4269
  %v4419 = vadd.f32 %v4117, %v4272
  %v4420 = vadd.f32 %v4118, %v4274
  %v4421 = vadd.f32 %v4119, %v4277
  %v4422 = vadd.f32 %v4120, %v4279
  %v4423 = vadd.f32 %v4121, %v4282
  %v4424 = vadd.f32 %v4122, %v4284
  %v4425 = vadd.f32 %v4123, %v4287
  %v4426 = vadd.f32 %v4124, %v4289
  %v4427 = vadd.f32 %v4125, %v4292
  %v4428 = vadd.f32 %v4126, %v4294
  %v4429 = vadd.f32 %v4127, %v4297
  %v4430 = vadd.f32 %v4128, %v4299
  %v4431 = vadd.f32 %v4129, %v4302
  %v4432 = vadd.f32 %v4130, %v4304
  %v4433 = vadd.f32 %v4131, %v4307
  %v4434 = vadd.f32 %v4132, %v4309
  %v4435 = vadd.f32 %v4133, %v4312
  %v4436 = vadd.f32 %v4134, %v4314
  %v4437 = vadd.f32 %v4135, %v4317
  %v4438 = vadd.f32 %v4136, %v4319
  %v4439 = vadd.f32 %v4137, %v4322
  %v4440 = vadd.f32 %v4138, %v4324
  %v4441 = vadd.f32 %v4139, %v4327
  %v4442 = vadd.f32 %v4140, %v4329
  %v4443 = vadd.f32 %v4141, %v4332
  %v4444 = vadd.f32 %v4142, %v4334
  %v4445 = vadd.f32 %v4143, %v4337
  %v4446 = vadd.f32 %v4144, %v4339
  %v4447 = vadd.f32 %v4145, %v4342
  %v4448 = vadd.f32 %v4146, %v4344
  %v4449 = vadd.f32 %v4147, %v4347
  %v4450 = vadd.f32 %v4148, %v4349
  %v4451 = vadd.f32 %v4149, %v4352
  %v4452 = vadd.f32 %v4150, %v4354
  %v4453 = vadd.f32 %v4151, %v4357
  %v4454 = vadd.f32 %v4152, %v4359
  %v4455 = vadd.f32 %v4153, %v4362
  %v4456 = vadd.f32 %v4154, %v4364
  %v4457 = vadd.f32 %v4155, %v4367
  %v4458 = vadd.f32 %v4156, %v4369
  %v4459 = vadd.f32 %v4157, %v4372
  %v4460 = vadd.f32 %v4158, %v4374
  %v4461 = vadd.f32 %v4159, %v4377
  %v4462 = vadd.f32 %v4160, %v4379
  %v4463 = vadd.f32 %v4161, %v4382
  %v4464 = vadd.f32 %v4162, %v4384
  %v4465 = vadd.f32 %v4163, %v4387
  %v4466 = vadd.f32 %v4164, %v4389
  %v4467 = vadd.f32 %v4165, %v4392
  %v4468 = vadd.f32 %v4166, %v4394
  %v4469 = vadd.f32 %v4167, %v4397
  %v4470 = vadd.f32 %v4168, %v4399
  %v4471 = vadd.f32 %v4169, %v4402
  %v4472 = vadd.f32 %v4170, %v4404
  %v4473 = vadd.f32 %v4171, %v4407
  %v4474 = vadd.f32 %v4172, %v4409
  %v4476 = vshrl.u32 %v2911, 16
  %v4478 = vrot.slane %v4476, 4
  %v4479 = vshll.u32 %v2911, 16
  %v4481 = vrot.slane %v4479, 5
  %v4482 = vor.u32 %v4478, %v4481
  %v4483 = vrot.slane %v4482, 4
  %v4485 = vshll.u32 %v2912, 16
  %v4487 = vrot.slane %v4485, 5
  %v4488 = vsel %vm2970, %v4483, %v4487
  %v4489 = vshrl.u32 %v2912, 16
  %v4491 = vrot.slane %v4489, 4
  %v4492 = vor.u32 %v4491, %v4487
  %v4493 = vrot.slane %v4492, 4
  %v4495 = vshll.u32 %v2913, 16
  %v4497 = vrot.slane %v4495, 5
  %v4498 = vsel %vm2970, %v4493, %v4497
  %v4500 = vshrl.u32 %v2965, 16
  %v4502 = vrot.slane %v4500, 4
  %v4503 = vshll.u32 %v2965, 16
  %v4505 = vrot.slane %v4503, 5
  %v4506 = vor.u32 %v4502, %v4505
  %v4507 = vrot.slane %v4506, 4
  %v4509 = vshll.u32 %v2966, 16
  %v4511 = vrot.slane %v4509, 5
  %v4512 = vsel %vm2970, %v4507, %v4511
  %v4513 = vshrl.u32 %v2966, 16
  %v4515 = vrot.slane %v4513, 4
  %v4516 = vor.u32 %v4515, %v4511
  %v4517 = vrot.slane %v4516, 4
  %v4519 = vshll.u32 %v2967, 16
  %v4521 = vrot.slane %v4519, 5
  %v4522 = vsel %vm2970, %v4517, %v4521
  %s4523 = scalar_lea.vmem %s4, 56
  %v4524 = vld [vmem:[%s4523] sm:$0xf]
  %v4525 = vld [vmem:[%s4523 + $0x4] sm:$0xf]
  %v4526 = vunpack.c.l.b16 %v4488
  %v4527 = vunpack.c.l.b16 %v4498
  %v4528 = vunpack.c.l.b16 %v4512
  %v4529 = vunpack.c.l.b16 %v4522
  %v4530 = vpack.c.b16 %v4527, %v4526
  %v4531 = vpack.c.b16 %v4529, %v4528
  %v4534 = vunpack.c.l.b16 %v4524
  %v4535 = vunpack.c.l.b16 %v4525
  %v4536 = vpack.c.b16 %v4535, %v4534
  %v4539 = vsel %vm2145, %v4530, 0
  %v4542 = vsel %vm2145, %v4531, 0
  %4544 = vmatpush.bf16.msra.mxu0 0
  %4545 = vmatpush.bf16.msra.mxu0 0
  %4546 = vmatpush.bf16.msra.mxu0 0
  %4547 = vmatpush.bf16.msra.mxu0 0
  %4548 = vmatpush.bf16.msra.mxu0 0
  %4549 = vmatpush.bf16.msra.mxu0 0
  %4550 = vmatpush.bf16.msra.mxu0 0
  %4551 = vmatpush.bf16.msra.mxu0 %v4536
  %4552 = vmatmul.bf16.gmra.mxu0 %v3851
  %v4553 = vpop.f32.mrf.mxu0
  %v4554 = vadd.f32 0.0, %v4553
  %v4555 = vpop.f32.mrf.mxu0
  %v4556 = vadd.f32 0.0, %v4555
  %4557 = vmatmul.bf16.gmra.mxu0 %v3854
  %v4558 = vpop.f32.mrf.mxu0
  %v4559 = vadd.f32 0.0, %v4558
  %v4560 = vpop.f32.mrf.mxu0
  %v4561 = vadd.f32 0.0, %v4560
  %4562 = vmatmul.bf16.gmra.mxu0 %v3857
  %v4563 = vpop.f32.mrf.mxu0
  %v4564 = vadd.f32 0.0, %v4563
  %v4565 = vpop.f32.mrf.mxu0
  %v4566 = vadd.f32 0.0, %v4565
  %4567 = vmatmul.bf16.gmra.mxu0 %v3860
  %v4568 = vpop.f32.mrf.mxu0
  %v4569 = vadd.f32 0.0, %v4568
  %v4570 = vpop.f32.mrf.mxu0
  %v4571 = vadd.f32 0.0, %v4570
  %4572 = vmatmul.bf16.gmra.mxu0 %v3863
  %v4573 = vpop.f32.mrf.mxu0
  %v4574 = vadd.f32 0.0, %v4573
  %v4575 = vpop.f32.mrf.mxu0
  %v4576 = vadd.f32 0.0, %v4575
  %4577 = vmatmul.bf16.gmra.mxu0 %v3866
  %v4578 = vpop.f32.mrf.mxu0
  %v4579 = vadd.f32 0.0, %v4578
  %v4580 = vpop.f32.mrf.mxu0
  %v4581 = vadd.f32 0.0, %v4580
  %4582 = vmatmul.bf16.gmra.mxu0 %v3869
  %v4583 = vpop.f32.mrf.mxu0
  %v4584 = vadd.f32 0.0, %v4583
  %v4585 = vpop.f32.mrf.mxu0
  %v4586 = vadd.f32 0.0, %v4585
  %4587 = vmatmul.bf16.gmra.mxu0 %v3872
  %v4588 = vpop.f32.mrf.mxu0
  %v4589 = vadd.f32 0.0, %v4588
  %v4590 = vpop.f32.mrf.mxu0
  %v4591 = vadd.f32 0.0, %v4590
  %4592 = vmatmul.bf16.gmra.mxu0 %v3875
  %v4593 = vpop.f32.mrf.mxu0
  %v4594 = vadd.f32 0.0, %v4593
  %v4595 = vpop.f32.mrf.mxu0
  %v4596 = vadd.f32 0.0, %v4595
  %4597 = vmatmul.bf16.gmra.mxu0 %v3878
  %v4598 = vpop.f32.mrf.mxu0
  %v4599 = vadd.f32 0.0, %v4598
  %v4600 = vpop.f32.mrf.mxu0
  %v4601 = vadd.f32 0.0, %v4600
  %4602 = vmatmul.bf16.gmra.mxu0 %v3881
  %v4603 = vpop.f32.mrf.mxu0
  %v4604 = vadd.f32 0.0, %v4603
  %v4605 = vpop.f32.mrf.mxu0
  %v4606 = vadd.f32 0.0, %v4605
  %4607 = vmatmul.bf16.gmra.mxu0 %v3884
  %v4608 = vpop.f32.mrf.mxu0
  %v4609 = vadd.f32 0.0, %v4608
  %v4610 = vpop.f32.mrf.mxu0
  %v4611 = vadd.f32 0.0, %v4610
  %4612 = vmatmul.bf16.gmra.mxu0 %v3887
  %v4613 = vpop.f32.mrf.mxu0
  %v4614 = vadd.f32 0.0, %v4613
  %v4615 = vpop.f32.mrf.mxu0
  %v4616 = vadd.f32 0.0, %v4615
  %4617 = vmatmul.bf16.gmra.mxu0 %v3890
  %v4618 = vpop.f32.mrf.mxu0
  %v4619 = vadd.f32 0.0, %v4618
  %v4620 = vpop.f32.mrf.mxu0
  %v4621 = vadd.f32 0.0, %v4620
  %4622 = vmatmul.bf16.gmra.mxu0 %v4237
  %v4623 = vpop.f32.mrf.mxu0
  %v4624 = vadd.f32 0.0, %v4623
  %v4625 = vpop.f32.mrf.mxu0
  %v4626 = vadd.f32 0.0, %v4625
  %4627 = vmatmul.bf16.gmra.mxu0 %v4539
  %v4628 = vpop.f32.mrf.mxu0
  %v4629 = vadd.f32 0.0, %v4628
  %v4630 = vpop.f32.mrf.mxu0
  %v4631 = vadd.f32 0.0, %v4630
  %4632 = vmatmul.bf16.gmra.mxu0 %v3899
  %v4633 = vpop.f32.mrf.mxu0
  %v4634 = vadd.f32 0.0, %v4633
  %v4635 = vpop.f32.mrf.mxu0
  %v4636 = vadd.f32 0.0, %v4635
  %4637 = vmatmul.bf16.gmra.mxu0 %v3902
  %v4638 = vpop.f32.mrf.mxu0
  %v4639 = vadd.f32 0.0, %v4638
  %v4640 = vpop.f32.mrf.mxu0
  %v4641 = vadd.f32 0.0, %v4640
  %4642 = vmatmul.bf16.gmra.mxu0 %v3905
  %v4643 = vpop.f32.mrf.mxu0
  %v4644 = vadd.f32 0.0, %v4643
  %v4645 = vpop.f32.mrf.mxu0
  %v4646 = vadd.f32 0.0, %v4645
  %4647 = vmatmul.bf16.gmra.mxu0 %v3908
  %v4648 = vpop.f32.mrf.mxu0
  %v4649 = vadd.f32 0.0, %v4648
  %v4650 = vpop.f32.mrf.mxu0
  %v4651 = vadd.f32 0.0, %v4650
  %4652 = vmatmul.bf16.gmra.mxu0 %v3911
  %v4653 = vpop.f32.mrf.mxu0
  %v4654 = vadd.f32 0.0, %v4653
  %v4655 = vpop.f32.mrf.mxu0
  %v4656 = vadd.f32 0.0, %v4655
  %4657 = vmatmul.bf16.gmra.mxu0 %v3914
  %v4658 = vpop.f32.mrf.mxu0
  %v4659 = vadd.f32 0.0, %v4658
  %v4660 = vpop.f32.mrf.mxu0
  %v4661 = vadd.f32 0.0, %v4660
  %4662 = vmatmul.bf16.gmra.mxu0 %v3917
  %v4663 = vpop.f32.mrf.mxu0
  %v4664 = vadd.f32 0.0, %v4663
  %v4665 = vpop.f32.mrf.mxu0
  %v4666 = vadd.f32 0.0, %v4665
  %4667 = vmatmul.bf16.gmra.mxu0 %v3920
  %v4668 = vpop.f32.mrf.mxu0
  %v4669 = vadd.f32 0.0, %v4668
  %v4670 = vpop.f32.mrf.mxu0
  %v4671 = vadd.f32 0.0, %v4670
  %4672 = vmatmul.bf16.gmra.mxu0 %v3923
  %v4673 = vpop.f32.mrf.mxu0
  %v4674 = vadd.f32 0.0, %v4673
  %v4675 = vpop.f32.mrf.mxu0
  %v4676 = vadd.f32 0.0, %v4675
  %4677 = vmatmul.bf16.gmra.mxu0 %v3926
  %v4678 = vpop.f32.mrf.mxu0
  %v4679 = vadd.f32 0.0, %v4678
  %v4680 = vpop.f32.mrf.mxu0
  %v4681 = vadd.f32 0.0, %v4680
  %4682 = vmatmul.bf16.gmra.mxu0 %v3929
  %v4683 = vpop.f32.mrf.mxu0
  %v4684 = vadd.f32 0.0, %v4683
  %v4685 = vpop.f32.mrf.mxu0
  %v4686 = vadd.f32 0.0, %v4685
  %4687 = vmatmul.bf16.gmra.mxu0 %v3932
  %v4688 = vpop.f32.mrf.mxu0
  %v4689 = vadd.f32 0.0, %v4688
  %v4690 = vpop.f32.mrf.mxu0
  %v4691 = vadd.f32 0.0, %v4690
  %4692 = vmatmul.bf16.gmra.mxu0 %v3935
  %v4693 = vpop.f32.mrf.mxu0
  %v4694 = vadd.f32 0.0, %v4693
  %v4695 = vpop.f32.mrf.mxu0
  %v4696 = vadd.f32 0.0, %v4695
  %4697 = vmatmul.bf16.gmra.mxu0 %v3938
  %v4698 = vpop.f32.mrf.mxu0
  %v4699 = vadd.f32 0.0, %v4698
  %v4700 = vpop.f32.mrf.mxu0
  %v4701 = vadd.f32 0.0, %v4700
  %4702 = vmatmul.bf16.gmra.mxu0 %v4240
  %v4703 = vpop.f32.mrf.mxu0
  %v4704 = vadd.f32 0.0, %v4703
  %v4705 = vpop.f32.mrf.mxu0
  %v4706 = vadd.f32 0.0, %v4705
  %4707 = vmatmul.bf16.gmra.mxu0 %v4542
  %v4708 = vpop.f32.mrf.mxu0
  %v4709 = vadd.f32 0.0, %v4708
  %v4710 = vpop.f32.mrf.mxu0
  %v4711 = vadd.f32 0.0, %v4710
  %4712 = vdwg.mxu0
  %v4713 = vadd.f32 %v4411, %v4554
  %v4714 = vadd.f32 %v4412, %v4556
  %v4715 = vadd.f32 %v4413, %v4559
  %v4716 = vadd.f32 %v4414, %v4561
  %v4717 = vadd.f32 %v4415, %v4564
  %v4718 = vadd.f32 %v4416, %v4566
  %v4719 = vadd.f32 %v4417, %v4569
  %v4720 = vadd.f32 %v4418, %v4571
  %v4721 = vadd.f32 %v4419, %v4574
  %v4722 = vadd.f32 %v4420, %v4576
  %v4723 = vadd.f32 %v4421, %v4579
  %v4724 = vadd.f32 %v4422, %v4581
  %v4725 = vadd.f32 %v4423, %v4584
  %v4726 = vadd.f32 %v4424, %v4586
  %v4727 = vadd.f32 %v4425, %v4589
  %v4728 = vadd.f32 %v4426, %v4591
  %v4729 = vadd.f32 %v4427, %v4594
  %v4730 = vadd.f32 %v4428, %v4596
  %v4731 = vadd.f32 %v4429, %v4599
  %v4732 = vadd.f32 %v4430, %v4601
  %v4733 = vadd.f32 %v4431, %v4604
  %v4734 = vadd.f32 %v4432, %v4606
  %v4735 = vadd.f32 %v4433, %v4609
  %v4736 = vadd.f32 %v4434, %v4611
  %v4737 = vadd.f32 %v4435, %v4614
  %v4738 = vadd.f32 %v4436, %v4616
  %v4739 = vadd.f32 %v4437, %v4619
  %v4740 = vadd.f32 %v4438, %v4621
  %v4741 = vadd.f32 %v4439, %v4624
  %v4742 = vadd.f32 %v4440, %v4626
  %v4743 = vadd.f32 %v4441, %v4629
  %v4744 = vadd.f32 %v4442, %v4631
  %v4745 = vadd.f32 %v4443, %v4634
  %v4746 = vadd.f32 %v4444, %v4636
  %v4747 = vadd.f32 %v4445, %v4639
  %v4748 = vadd.f32 %v4446, %v4641
  %v4749 = vadd.f32 %v4447, %v4644
  %v4750 = vadd.f32 %v4448, %v4646
  %v4751 = vadd.f32 %v4449, %v4649
  %v4752 = vadd.f32 %v4450, %v4651
  %v4753 = vadd.f32 %v4451, %v4654
  %v4754 = vadd.f32 %v4452, %v4656
  %v4755 = vadd.f32 %v4453, %v4659
  %v4756 = vadd.f32 %v4454, %v4661
  %v4757 = vadd.f32 %v4455, %v4664
  %v4758 = vadd.f32 %v4456, %v4666
  %v4759 = vadd.f32 %v4457, %v4669
  %v4760 = vadd.f32 %v4458, %v4671
  %v4761 = vadd.f32 %v4459, %v4674
  %v4762 = vadd.f32 %v4460, %v4676
  %v4763 = vadd.f32 %v4461, %v4679
  %v4764 = vadd.f32 %v4462, %v4681
  %v4765 = vadd.f32 %v4463, %v4684
  %v4766 = vadd.f32 %v4464, %v4686
  %v4767 = vadd.f32 %v4465, %v4689
  %v4768 = vadd.f32 %v4466, %v4691
  %v4769 = vadd.f32 %v4467, %v4694
  %v4770 = vadd.f32 %v4468, %v4696
  %v4771 = vadd.f32 %v4469, %v4699
  %v4772 = vadd.f32 %v4470, %v4701
  %v4773 = vadd.f32 %v4471, %v4704
  %v4774 = vadd.f32 %v4472, %v4706
  %v4775 = vadd.f32 %v4473, %v4709
  %v4776 = vadd.f32 %v4474, %v4711
  %v4777 = vld [vmem:[#allocation2] sm:$0xe]
  %v4778 = vld [vmem:[#allocation2 + $0xc] sm:$0xe]
  %v4779 = vld [vmem:[#allocation2 + $0x18] sm:$0xe]
  %v4780 = vld [vmem:[#allocation2 + $0x24] sm:$0xe]
  %v4781 = vld [vmem:[#allocation2 + $0x30] sm:$0xe]
  %v4782 = vld [vmem:[#allocation2 + $0x3c] sm:$0xe]
  %v4783 = vld [vmem:[#allocation2 + $0x48] sm:$0xe]
  %v4784 = vld [vmem:[#allocation2 + $0x54] sm:$0xe]
  %v4785 = vld [vmem:[#allocation2 + $0x60] sm:$0xe]
  %v4786 = vld [vmem:[#allocation2 + $0x6c] sm:$0xe]
  %v4787 = vld [vmem:[#allocation2 + $0x78] sm:$0xe]
  %v4788 = vld [vmem:[#allocation2 + $0x84] sm:$0xe]
  %v4789 = vld [vmem:[#allocation2 + $0x90] sm:$0xe]
  %v4790 = vld [vmem:[#allocation2 + $0x9c] sm:$0xe]
  %v4791 = vld [vmem:[#allocation2 + $0xa8] sm:$0xe]
  %v4792 = vld [vmem:[#allocation2 + $0xb4] sm:$0xe]
  %v4793 = vld [vmem:[#allocation2 + $0xc0] sm:$0xe]
  %v4794 = vld [vmem:[#allocation2 + $0xcc] sm:$0xe]
  %v4795 = vld [vmem:[#allocation2 + $0xd8] sm:$0xe]
  %v4796 = vld [vmem:[#allocation2 + $0xe4] sm:$0xe]
  %v4797 = vld [vmem:[#allocation2 + $0xf0] sm:$0xe]
  %v4798 = vld [vmem:[#allocation2 + $0xfc] sm:$0xe]
  %v4799 = vld [vmem:[#allocation2 + $0x108] sm:$0xe]
  %v4800 = vld [vmem:[#allocation2 + $0x114] sm:$0xe]
  %v4801 = vld [vmem:[#allocation2 + $0x120] sm:$0xe]
  %v4802 = vld [vmem:[#allocation2 + $0x12c] sm:$0xe]
  %v4803 = vld [vmem:[#allocation2 + $0x138] sm:$0xe]
  %v4804 = vld [vmem:[#allocation2 + $0x144] sm:$0xe]
  %v4805 = vld [vmem:[#allocation2 + $0x150] sm:$0xe]
  %v4806 = vld [vmem:[#allocation2 + $0x15c] sm:$0xe]
  %v4807 = vld [vmem:[#allocation2 + $0x168] sm:$0xe]
  %v4808 = vld [vmem:[#allocation2 + $0x174] sm:$0xe]
  %v4809 = vld [vmem:[#allocation2 + $0x180] sm:$0xe]
  %v4810 = vld [vmem:[#allocation2 + $0x18c] sm:$0xe]
  %v4811 = vld [vmem:[#allocation2 + $0x198] sm:$0xe]
  %v4812 = vld [vmem:[#allocation2 + $0x1a4] sm:$0xe]
  %vm4909 = vcmask 1042432
  %vm4910 = vcmask 1046532
  %vm4911 = vmor %vm4909, %vm4910
  %v4912 = vrot.slane %v4777, 5
  %v4913 = vrot.slane %v4912, 4
  %v4914 = vrot.slane %v2861, 5
  %v4915 = vsel %vm4911, %v4913, %v4914
  %v4916 = vrot.slane %v4914, 4
  %v4917 = vrot.slane %v2862, 5
  %v4918 = vsel %vm4911, %v4916, %v4917
  %v4919 = vrot.slane %v4778, 5
  %v4920 = vrot.slane %v4919, 4
  %v4921 = vrot.slane %v2864, 5
  %v4922 = vsel %vm4911, %v4920, %v4921
  %v4923 = vrot.slane %v4921, 4
  %v4924 = vrot.slane %v2865, 5
  %v4925 = vsel %vm4911, %v4923, %v4924
  %v4926 = vrot.slane %v4779, 5
  %v4927 = vrot.slane %v4926, 4
  %v4928 = vrot.slane %v2867, 5
  %v4929 = vsel %vm4911, %v4927, %v4928
  %v4930 = vrot.slane %v4928, 4
  %v4931 = vrot.slane %v2868, 5
  %v4932 = vsel %vm4911, %v4930, %v4931
  %v4933 = vrot.slane %v4780, 5
  %v4934 = vrot.slane %v4933, 4
  %v4935 = vrot.slane %v2870, 5
  %v4936 = vsel %vm4911, %v4934, %v4935
  %v4937 = vrot.slane %v4935, 4
  %v4938 = vrot.slane %v2871, 5
  %v4939 = vsel %vm4911, %v4937, %v4938
  %v4940 = vrot.slane %v4781, 5
  %v4941 = vrot.slane %v4940, 4
  %v4942 = vrot.slane %v2873, 5
  %v4943 = vsel %vm4911, %v4941, %v4942
  %v4944 = vrot.slane %v4942, 4
  %v4945 = vrot.slane %v2874, 5
  %v4946 = vsel %vm4911, %v4944, %v4945
  %v4947 = vrot.slane %v4782, 5
  %v4948 = vrot.slane %v4947, 4
  %v4949 = vrot.slane %v2876, 5
  %v4950 = vsel %vm4911, %v4948, %v4949
  %v4951 = vrot.slane %v4949, 4
  %v4952 = vrot.slane %v2877, 5
  %v4953 = vsel %vm4911, %v4951, %v4952
  %v4954 = vrot.slane %v4783, 5
  %v4955 = vrot.slane %v4954, 4
  %v4956 = vrot.slane %v2879, 5
  %v4957 = vsel %vm4911, %v4955, %v4956
  %v4958 = vrot.slane %v4956, 4
  %v4959 = vrot.slane %v2880, 5
  %v4960 = vsel %vm4911, %v4958, %v4959
  %v4961 = vrot.slane %v4784, 5
  %v4962 = vrot.slane %v4961, 4
  %v4963 = vrot.slane %v2882, 5
  %v4964 = vsel %vm4911, %v4962, %v4963
  %v4965 = vrot.slane %v4963, 4
  %v4966 = vrot.slane %v2883, 5
  %v4967 = vsel %vm4911, %v4965, %v4966
  %v4968 = vrot.slane %v4785, 5
  %v4969 = vrot.slane %v4968, 4
  %v4970 = vrot.slane %v2885, 5
  %v4971 = vsel %vm4911, %v4969, %v4970
  %v4972 = vrot.slane %v4970, 4
  %v4973 = vrot.slane %v2886, 5
  %v4974 = vsel %vm4911, %v4972, %v4973
  %v4975 = vrot.slane %v4786, 5
  %v4976 = vrot.slane %v4975, 4
  %v4977 = vrot.slane %v2888, 5
  %v4978 = vsel %vm4911, %v4976, %v4977
  %v4979 = vrot.slane %v4977, 4
  %v4980 = vrot.slane %v2889, 5
  %v4981 = vsel %vm4911, %v4979, %v4980
  %v4982 = vrot.slane %v4787, 5
  %v4983 = vrot.slane %v4982, 4
  %v4984 = vrot.slane %v2891, 5
  %v4985 = vsel %vm4911, %v4983, %v4984
  %v4986 = vrot.slane %v4984, 4
  %v4987 = vrot.slane %v2892, 5
  %v4988 = vsel %vm4911, %v4986, %v4987
  %v4989 = vrot.slane %v4788, 5
  %v4990 = vrot.slane %v4989, 4
  %v4991 = vrot.slane %v2894, 5
  %v4992 = vsel %vm4911, %v4990, %v4991
  %v4993 = vrot.slane %v4991, 4
  %v4994 = vrot.slane %v2895, 5
  %v4995 = vsel %vm4911, %v4993, %v4994
  %v4996 = vrot.slane %v4789, 5
  %v4997 = vrot.slane %v4996, 4
  %v4998 = vrot.slane %v2897, 5
  %v4999 = vsel %vm4911, %v4997, %v4998
  %v5000 = vrot.slane %v4998, 4
  %v5001 = vrot.slane %v2898, 5
  %v5002 = vsel %vm4911, %v5000, %v5001
  %v5003 = vrot.slane %v4790, 5
  %v5004 = vrot.slane %v5003, 4
  %v5005 = vrot.slane %v2900, 5
  %v5006 = vsel %vm4911, %v5004, %v5005
  %v5007 = vrot.slane %v5005, 4
  %v5008 = vrot.slane %v2901, 5
  %v5009 = vsel %vm4911, %v5007, %v5008
  %v5010 = vrot.slane %v4791, 5
  %v5011 = vrot.slane %v5010, 4
  %v5012 = vrot.slane %v2903, 5
  %v5013 = vsel %vm4911, %v5011, %v5012
  %v5014 = vrot.slane %v5012, 4
  %v5015 = vrot.slane %v2904, 5
  %v5016 = vsel %vm4911, %v5014, %v5015
  %v5017 = vrot.slane %v4792, 5
  %v5018 = vrot.slane %v5017, 4
  %v5019 = vrot.slane %v2906, 5
  %v5020 = vsel %vm4911, %v5018, %v5019
  %v5021 = vrot.slane %v5019, 4
  %v5022 = vrot.slane %v2907, 5
  %v5023 = vsel %vm4911, %v5021, %v5022
  %v5024 = vrot.slane %v4795, 5
  %v5025 = vrot.slane %v5024, 4
  %v5026 = vrot.slane %v2915, 5
  %v5027 = vsel %vm4911, %v5025, %v5026
  %v5028 = vrot.slane %v5026, 4
  %v5029 = vrot.slane %v2916, 5
  %v5030 = vsel %vm4911, %v5028, %v5029
  %v5031 = vrot.slane %v4796, 5
  %v5032 = vrot.slane %v5031, 4
  %v5033 = vrot.slane %v2918, 5
  %v5034 = vsel %vm4911, %v5032, %v5033
  %v5035 = vrot.slane %v5033, 4
  %v5036 = vrot.slane %v2919, 5
  %v5037 = vsel %vm4911, %v5035, %v5036
  %v5038 = vrot.slane %v4797, 5
  %v5039 = vrot.slane %v5038, 4
  %v5040 = vrot.slane %v2921, 5
  %v5041 = vsel %vm4911, %v5039, %v5040
  %v5042 = vrot.slane %v5040, 4
  %v5043 = vrot.slane %v2922, 5
  %v5044 = vsel %vm4911, %v5042, %v5043
  %v5045 = vrot.slane %v4798, 5
  %v5046 = vrot.slane %v5045, 4
  %v5047 = vrot.slane %v2924, 5
  %v5048 = vsel %vm4911, %v5046, %v5047
  %v5049 = vrot.slane %v5047, 4
  %v5050 = vrot.slane %v2925, 5
  %v5051 = vsel %vm4911, %v5049, %v5050
  %v5052 = vrot.slane %v4799, 5
  %v5053 = vrot.slane %v5052, 4
  %v5054 = vrot.slane %v2927, 5
  %v5055 = vsel %vm4911, %v5053, %v5054
  %v5056 = vrot.slane %v5054, 4
  %v5057 = vrot.slane %v2928, 5
  %v5058 = vsel %vm4911, %v5056, %v5057
  %v5059 = vrot.slane %v4800, 5
  %v5060 = vrot.slane %v5059, 4
  %v5061 = vrot.slane %v2930, 5
  %v5062 = vsel %vm4911, %v5060, %v5061
  %v5063 = vrot.slane %v5061, 4
  %v5064 = vrot.slane %v2931, 5
  %v5065 = vsel %vm4911, %v5063, %v5064
  %v5066 = vrot.slane %v4801, 5
  %v5067 = vrot.slane %v5066, 4
  %v5068 = vrot.slane %v2933, 5
  %v5069 = vsel %vm4911, %v5067, %v5068
  %v5070 = vrot.slane %v5068, 4
  %v5071 = vrot.slane %v2934, 5
  %v5072 = vsel %vm4911, %v5070, %v5071
  %v5073 = vrot.slane %v4802, 5
  %v5074 = vrot.slane %v5073, 4
  %v5075 = vrot.slane %v2936, 5
  %v5076 = vsel %vm4911, %v5074, %v5075
  %v5077 = vrot.slane %v5075, 4
  %v5078 = vrot.slane %v2937, 5
  %v5079 = vsel %vm4911, %v5077, %v5078
  %v5080 = vrot.slane %v4803, 5
  %v5081 = vrot.slane %v5080, 4
  %v5082 = vrot.slane %v2939, 5
  %v5083 = vsel %vm4911, %v5081, %v5082
  %v5084 = vrot.slane %v5082, 4
  %v5085 = vrot.slane %v2940, 5
  %v5086 = vsel %vm4911, %v5084, %v5085
  %v5087 = vrot.slane %v4804, 5
  %v5088 = vrot.slane %v5087, 4
  %v5089 = vrot.slane %v2942, 5
  %v5090 = vsel %vm4911, %v5088, %v5089
  %v5091 = vrot.slane %v5089, 4
  %v5092 = vrot.slane %v2943, 5
  %v5093 = vsel %vm4911, %v5091, %v5092
  %v5094 = vrot.slane %v4805, 5
  %v5095 = vrot.slane %v5094, 4
  %v5096 = vrot.slane %v2945, 5
  %v5097 = vsel %vm4911, %v5095, %v5096
  %v5098 = vrot.slane %v5096, 4
  %v5099 = vrot.slane %v2946, 5
  %v5100 = vsel %vm4911, %v5098, %v5099
  %v5101 = vrot.slane %v4806, 5
  %v5102 = vrot.slane %v5101, 4
  %v5103 = vrot.slane %v2948, 5
  %v5104 = vsel %vm4911, %v5102, %v5103
  %v5105 = vrot.slane %v5103, 4
  %v5106 = vrot.slane %v2949, 5
  %v5107 = vsel %vm4911, %v5105, %v5106
  %v5108 = vrot.slane %v4807, 5
  %v5109 = vrot.slane %v5108, 4
  %v5110 = vrot.slane %v2951, 5
  %v5111 = vsel %vm4911, %v5109, %v5110
  %v5112 = vrot.slane %v5110, 4
  %v5113 = vrot.slane %v2952, 5
  %v5114 = vsel %vm4911, %v5112, %v5113
  %v5115 = vrot.slane %v4808, 5
  %v5116 = vrot.slane %v5115, 4
  %v5117 = vrot.slane %v2954, 5
  %v5118 = vsel %vm4911, %v5116, %v5117
  %v5119 = vrot.slane %v5117, 4
  %v5120 = vrot.slane %v2955, 5
  %v5121 = vsel %vm4911, %v5119, %v5120
  %v5122 = vrot.slane %v4809, 5
  %v5123 = vrot.slane %v5122, 4
  %v5124 = vrot.slane %v2957, 5
  %v5125 = vsel %vm4911, %v5123, %v5124
  %v5126 = vrot.slane %v5124, 4
  %v5127 = vrot.slane %v2958, 5
  %v5128 = vsel %vm4911, %v5126, %v5127
  %v5129 = vrot.slane %v4810, 5
  %v5130 = vrot.slane %v5129, 4
  %v5131 = vrot.slane %v2960, 5
  %v5132 = vsel %vm4911, %v5130, %v5131
  %v5133 = vrot.slane %v5131, 4
  %v5134 = vrot.slane %v2961, 5
  %v5135 = vsel %vm4911, %v5133, %v5134
  %s5136 = scalar_lea.vmem %s4, 16
  %v5137 = vld [vmem:[%s5136] sm:$0xf]
  %v5138 = vld [vmem:[%s5136 + $0x4] sm:$0xf]
  %v5139 = vunpack.c.l.b16 %v4915
  %v5140 = vunpack.c.l.b16 %v4918
  %v5141 = vunpack.c.l.b16 %v4922
  %v5142 = vunpack.c.l.b16 %v4925
  %v5143 = vunpack.c.l.b16 %v4929
  %v5144 = vunpack.c.l.b16 %v4932
  %v5145 = vunpack.c.l.b16 %v4936
  %v5146 = vunpack.c.l.b16 %v4939
  %v5147 = vunpack.c.l.b16 %v4943
  %v5148 = vunpack.c.l.b16 %v4946
  %v5149 = vunpack.c.l.b16 %v4950
  %v5150 = vunpack.c.l.b16 %v4953
  %v5151 = vunpack.c.l.b16 %v4957
  %v5152 = vunpack.c.l.b16 %v4960
  %v5153 = vunpack.c.l.b16 %v4964
  %v5154 = vunpack.c.l.b16 %v4967
  %v5155 = vunpack.c.l.b16 %v4971
  %v5156 = vunpack.c.l.b16 %v4974
  %v5157 = vunpack.c.l.b16 %v4978
  %v5158 = vunpack.c.l.b16 %v4981
  %v5159 = vunpack.c.l.b16 %v4985
  %v5160 = vunpack.c.l.b16 %v4988
  %v5161 = vunpack.c.l.b16 %v4992
  %v5162 = vunpack.c.l.b16 %v4995
  %v5163 = vunpack.c.l.b16 %v4999
  %v5164 = vunpack.c.l.b16 %v5002
  %v5165 = vunpack.c.l.b16 %v5006
  %v5166 = vunpack.c.l.b16 %v5009
  %v5167 = vunpack.c.l.b16 %v5013
  %v5168 = vunpack.c.l.b16 %v5016
  %v5169 = vunpack.c.l.b16 %v5020
  %v5170 = vunpack.c.l.b16 %v5023
  %v5171 = vunpack.c.l.b16 %v5027
  %v5172 = vunpack.c.l.b16 %v5030
  %v5173 = vunpack.c.l.b16 %v5034
  %v5174 = vunpack.c.l.b16 %v5037
  %v5175 = vunpack.c.l.b16 %v5041
  %v5176 = vunpack.c.l.b16 %v5044
  %v5177 = vunpack.c.l.b16 %v5048
  %v5178 = vunpack.c.l.b16 %v5051
  %v5179 = vunpack.c.l.b16 %v5055
  %v5180 = vunpack.c.l.b16 %v5058
  %v5181 = vunpack.c.l.b16 %v5062
  %v5182 = vunpack.c.l.b16 %v5065
  %v5183 = vunpack.c.l.b16 %v5069
  %v5184 = vunpack.c.l.b16 %v5072
  %v5185 = vunpack.c.l.b16 %v5076
  %v5186 = vunpack.c.l.b16 %v5079
  %v5187 = vunpack.c.l.b16 %v5083
  %v5188 = vunpack.c.l.b16 %v5086
  %v5189 = vunpack.c.l.b16 %v5090
  %v5190 = vunpack.c.l.b16 %v5093
  %v5191 = vunpack.c.l.b16 %v5097
  %v5192 = vunpack.c.l.b16 %v5100
  %v5193 = vunpack.c.l.b16 %v5104
  %v5194 = vunpack.c.l.b16 %v5107
  %v5195 = vunpack.c.l.b16 %v5111
  %v5196 = vunpack.c.l.b16 %v5114
  %v5197 = vunpack.c.l.b16 %v5118
  %v5198 = vunpack.c.l.b16 %v5121
  %v5199 = vunpack.c.l.b16 %v5125
  %v5200 = vunpack.c.l.b16 %v5128
  %v5201 = vunpack.c.l.b16 %v5132
  %v5202 = vunpack.c.l.b16 %v5135
  %v5203 = vpack.c.b16 %v5140, %v5139
  %v5204 = vpack.c.b16 %v5142, %v5141
  %v5205 = vpack.c.b16 %v5144, %v5143
  %v5206 = vpack.c.b16 %v5146, %v5145
  %v5207 = vpack.c.b16 %v5148, %v5147
  %v5208 = vpack.c.b16 %v5150, %v5149
  %v5209 = vpack.c.b16 %v5152, %v5151
  %v5210 = vpack.c.b16 %v5154, %v5153
  %v5211 = vpack.c.b16 %v5156, %v5155
  %v5212 = vpack.c.b16 %v5158, %v5157
  %v5213 = vpack.c.b16 %v5160, %v5159
  %v5214 = vpack.c.b16 %v5162, %v5161
  %v5215 = vpack.c.b16 %v5164, %v5163
  %v5216 = vpack.c.b16 %v5166, %v5165
  %v5217 = vpack.c.b16 %v5168, %v5167
  %v5218 = vpack.c.b16 %v5170, %v5169
  %v5219 = vpack.c.b16 %v5172, %v5171
  %v5220 = vpack.c.b16 %v5174, %v5173
  %v5221 = vpack.c.b16 %v5176, %v5175
  %v5222 = vpack.c.b16 %v5178, %v5177
  %v5223 = vpack.c.b16 %v5180, %v5179
  %v5224 = vpack.c.b16 %v5182, %v5181
  %v5225 = vpack.c.b16 %v5184, %v5183
  %v5226 = vpack.c.b16 %v5186, %v5185
  %v5227 = vpack.c.b16 %v5188, %v5187
  %v5228 = vpack.c.b16 %v5190, %v5189
  %v5229 = vpack.c.b16 %v5192, %v5191
  %v5230 = vpack.c.b16 %v5194, %v5193
  %v5231 = vpack.c.b16 %v5196, %v5195
  %v5232 = vpack.c.b16 %v5198, %v5197
  %v5233 = vpack.c.b16 %v5200, %v5199
  %v5234 = vpack.c.b16 %v5202, %v5201
  %v5237 = vunpack.c.l.b16 %v5137
  %v5238 = vunpack.c.l.b16 %v5138
  %v5239 = vpack.c.b16 %v5238, %v5237
  %v5242 = vsel %vm2145, %v5203, 0
  %v5245 = vsel %vm2145, %v5204, 0
  %v5248 = vsel %vm2145, %v5205, 0
  %v5251 = vsel %vm2145, %v5206, 0
  %v5254 = vsel %vm2145, %v5207, 0
  %v5257 = vsel %vm2145, %v5208, 0
  %v5260 = vsel %vm2145, %v5209, 0
  %v5263 = vsel %vm2145, %v5210, 0
  %v5266 = vsel %vm2145, %v5211, 0
  %v5269 = vsel %vm2145, %v5212, 0
  %v5272 = vsel %vm2145, %v5213, 0
  %v5275 = vsel %vm2145, %v5214, 0
  %v5278 = vsel %vm2145, %v5215, 0
  %v5281 = vsel %vm2145, %v5216, 0
  %v5284 = vsel %vm2145, %v5217, 0
  %v5287 = vsel %vm2145, %v5218, 0
  %v5290 = vsel %vm2145, %v5219, 0
  %v5293 = vsel %vm2145, %v5220, 0
  %v5296 = vsel %vm2145, %v5221, 0
  %v5299 = vsel %vm2145, %v5222, 0
  %v5302 = vsel %vm2145, %v5223, 0
  %v5305 = vsel %vm2145, %v5224, 0
  %v5308 = vsel %vm2145, %v5225, 0
  %v5311 = vsel %vm2145, %v5226, 0
  %v5314 = vsel %vm2145, %v5227, 0
  %v5317 = vsel %vm2145, %v5228, 0
  %v5320 = vsel %vm2145, %v5229, 0
  %v5323 = vsel %vm2145, %v5230, 0
  %v5326 = vsel %vm2145, %v5231, 0
  %v5329 = vsel %vm2145, %v5232, 0
  %v5332 = vsel %vm2145, %v5233, 0
  %v5335 = vsel %vm2145, %v5234, 0
  %5337 = vmatpush.bf16.msra.mxu0 0
  %5338 = vmatpush.bf16.msra.mxu0 0
  %5339 = vmatpush.bf16.msra.mxu0 0
  %5340 = vmatpush.bf16.msra.mxu0 0
  %5341 = vmatpush.bf16.msra.mxu0 0
  %5342 = vmatpush.bf16.msra.mxu0 0
  %5343 = vmatpush.bf16.msra.mxu0 0
  %5344 = vmatpush.bf16.msra.mxu0 %v5239
  %5345 = vmatmul.bf16.gmra.mxu0 %v5242
  %v5346 = vpop.f32.mrf.mxu0
  %v5347 = vadd.f32 0.0, %v5346
  %v5348 = vpop.f32.mrf.mxu0
  %v5349 = vadd.f32 0.0, %v5348
  %5350 = vmatmul.bf16.gmra.mxu0 %v5245
  %v5351 = vpop.f32.mrf.mxu0
  %v5352 = vadd.f32 0.0, %v5351
  %v5353 = vpop.f32.mrf.mxu0
  %v5354 = vadd.f32 0.0, %v5353
  %5355 = vmatmul.bf16.gmra.mxu0 %v5248
  %v5356 = vpop.f32.mrf.mxu0
  %v5357 = vadd.f32 0.0, %v5356
  %v5358 = vpop.f32.mrf.mxu0
  %v5359 = vadd.f32 0.0, %v5358
  %5360 = vmatmul.bf16.gmra.mxu0 %v5251
  %v5361 = vpop.f32.mrf.mxu0
  %v5362 = vadd.f32 0.0, %v5361
  %v5363 = vpop.f32.mrf.mxu0
  %v5364 = vadd.f32 0.0, %v5363
  %5365 = vmatmul.bf16.gmra.mxu0 %v5254
  %v5366 = vpop.f32.mrf.mxu0
  %v5367 = vadd.f32 0.0, %v5366
  %v5368 = vpop.f32.mrf.mxu0
  %v5369 = vadd.f32 0.0, %v5368
  %5370 = vmatmul.bf16.gmra.mxu0 %v5257
  %v5371 = vpop.f32.mrf.mxu0
  %v5372 = vadd.f32 0.0, %v5371
  %v5373 = vpop.f32.mrf.mxu0
  %v5374 = vadd.f32 0.0, %v5373
  %5375 = vmatmul.bf16.gmra.mxu0 %v5260
  %v5376 = vpop.f32.mrf.mxu0
  %v5377 = vadd.f32 0.0, %v5376
  %v5378 = vpop.f32.mrf.mxu0
  %v5379 = vadd.f32 0.0, %v5378
  %5380 = vmatmul.bf16.gmra.mxu0 %v5263
  %v5381 = vpop.f32.mrf.mxu0
  %v5382 = vadd.f32 0.0, %v5381
  %v5383 = vpop.f32.mrf.mxu0
  %v5384 = vadd.f32 0.0, %v5383
  %5385 = vmatmul.bf16.gmra.mxu0 %v5266
  %v5386 = vpop.f32.mrf.mxu0
  %v5387 = vadd.f32 0.0, %v5386
  %v5388 = vpop.f32.mrf.mxu0
  %v5389 = vadd.f32 0.0, %v5388
  %5390 = vmatmul.bf16.gmra.mxu0 %v5269
  %v5391 = vpop.f32.mrf.mxu0
  %v5392 = vadd.f32 0.0, %v5391
  %v5393 = vpop.f32.mrf.mxu0
  %v5394 = vadd.f32 0.0, %v5393
  %5395 = vmatmul.bf16.gmra.mxu0 %v5272
  %v5396 = vpop.f32.mrf.mxu0
  %v5397 = vadd.f32 0.0, %v5396
  %v5398 = vpop.f32.mrf.mxu0
  %v5399 = vadd.f32 0.0, %v5398
  %5400 = vmatmul.bf16.gmra.mxu0 %v5275
  %v5401 = vpop.f32.mrf.mxu0
  %v5402 = vadd.f32 0.0, %v5401
  %v5403 = vpop.f32.mrf.mxu0
  %v5404 = vadd.f32 0.0, %v5403
  %5405 = vmatmul.bf16.gmra.mxu0 %v5278
  %v5406 = vpop.f32.mrf.mxu0
  %v5407 = vadd.f32 0.0, %v5406
  %v5408 = vpop.f32.mrf.mxu0
  %v5409 = vadd.f32 0.0, %v5408
  %5410 = vmatmul.bf16.gmra.mxu0 %v5281
  %v5411 = vpop.f32.mrf.mxu0
  %v5412 = vadd.f32 0.0, %v5411
  %v5413 = vpop.f32.mrf.mxu0
  %v5414 = vadd.f32 0.0, %v5413
  %5415 = vmatmul.bf16.gmra.mxu0 %v5284
  %v5416 = vpop.f32.mrf.mxu0
  %v5417 = vadd.f32 0.0, %v5416
  %v5418 = vpop.f32.mrf.mxu0
  %v5419 = vadd.f32 0.0, %v5418
  %5420 = vmatmul.bf16.gmra.mxu0 %v5287
  %v5421 = vpop.f32.mrf.mxu0
  %v5422 = vadd.f32 0.0, %v5421
  %v5423 = vpop.f32.mrf.mxu0
  %v5424 = vadd.f32 0.0, %v5423
  %5425 = vmatmul.bf16.gmra.mxu0 %v5290
  %v5426 = vpop.f32.mrf.mxu0
  %v5427 = vadd.f32 0.0, %v5426
  %v5428 = vpop.f32.mrf.mxu0
  %v5429 = vadd.f32 0.0, %v5428
  %5430 = vmatmul.bf16.gmra.mxu0 %v5293
  %v5431 = vpop.f32.mrf.mxu0
  %v5432 = vadd.f32 0.0, %v5431
  %v5433 = vpop.f32.mrf.mxu0
  %v5434 = vadd.f32 0.0, %v5433
  %5435 = vmatmul.bf16.gmra.mxu0 %v5296
  %v5436 = vpop.f32.mrf.mxu0
  %v5437 = vadd.f32 0.0, %v5436
  %v5438 = vpop.f32.mrf.mxu0
  %v5439 = vadd.f32 0.0, %v5438
  %5440 = vmatmul.bf16.gmra.mxu0 %v5299
  %v5441 = vpop.f32.mrf.mxu0
  %v5442 = vadd.f32 0.0, %v5441
  %v5443 = vpop.f32.mrf.mxu0
  %v5444 = vadd.f32 0.0, %v5443
  %5445 = vmatmul.bf16.gmra.mxu0 %v5302
  %v5446 = vpop.f32.mrf.mxu0
  %v5447 = vadd.f32 0.0, %v5446
  %v5448 = vpop.f32.mrf.mxu0
  %v5449 = vadd.f32 0.0, %v5448
  %5450 = vmatmul.bf16.gmra.mxu0 %v5305
  %v5451 = vpop.f32.mrf.mxu0
  %v5452 = vadd.f32 0.0, %v5451
  %v5453 = vpop.f32.mrf.mxu0
  %v5454 = vadd.f32 0.0, %v5453
  %5455 = vmatmul.bf16.gmra.mxu0 %v5308
  %v5456 = vpop.f32.mrf.mxu0
  %v5457 = vadd.f32 0.0, %v5456
  %v5458 = vpop.f32.mrf.mxu0
  %v5459 = vadd.f32 0.0, %v5458
  %5460 = vmatmul.bf16.gmra.mxu0 %v5311
  %v5461 = vpop.f32.mrf.mxu0
  %v5462 = vadd.f32 0.0, %v5461
  %v5463 = vpop.f32.mrf.mxu0
  %v5464 = vadd.f32 0.0, %v5463
  %5465 = vmatmul.bf16.gmra.mxu0 %v5314
  %v5466 = vpop.f32.mrf.mxu0
  %v5467 = vadd.f32 0.0, %v5466
  %v5468 = vpop.f32.mrf.mxu0
  %v5469 = vadd.f32 0.0, %v5468
  %5470 = vmatmul.bf16.gmra.mxu0 %v5317
  %v5471 = vpop.f32.mrf.mxu0
  %v5472 = vadd.f32 0.0, %v5471
  %v5473 = vpop.f32.mrf.mxu0
  %v5474 = vadd.f32 0.0, %v5473
  %5475 = vmatmul.bf16.gmra.mxu0 %v5320
  %v5476 = vpop.f32.mrf.mxu0
  %v5477 = vadd.f32 0.0, %v5476
  %v5478 = vpop.f32.mrf.mxu0
  %v5479 = vadd.f32 0.0, %v5478
  %5480 = vmatmul.bf16.gmra.mxu0 %v5323
  %v5481 = vpop.f32.mrf.mxu0
  %v5482 = vadd.f32 0.0, %v5481
  %v5483 = vpop.f32.mrf.mxu0
  %v5484 = vadd.f32 0.0, %v5483
  %5485 = vmatmul.bf16.gmra.mxu0 %v5326
  %v5486 = vpop.f32.mrf.mxu0
  %v5487 = vadd.f32 0.0, %v5486
  %v5488 = vpop.f32.mrf.mxu0
  %v5489 = vadd.f32 0.0, %v5488
  %5490 = vmatmul.bf16.gmra.mxu0 %v5329
  %v5491 = vpop.f32.mrf.mxu0
  %v5492 = vadd.f32 0.0, %v5491
  %v5493 = vpop.f32.mrf.mxu0
  %v5494 = vadd.f32 0.0, %v5493
  %5495 = vmatmul.bf16.gmra.mxu0 %v5332
  %v5496 = vpop.f32.mrf.mxu0
  %v5497 = vadd.f32 0.0, %v5496
  %v5498 = vpop.f32.mrf.mxu0
  %v5499 = vadd.f32 0.0, %v5498
  %5500 = vmatmul.bf16.gmra.mxu0 %v5335
  %v5501 = vpop.f32.mrf.mxu0
  %v5502 = vadd.f32 0.0, %v5501
  %v5503 = vpop.f32.mrf.mxu0
  %v5504 = vadd.f32 0.0, %v5503
  %5505 = vdwg.mxu0
  %v5506 = vadd.f32 %v4713, %v5347
  %v5507 = vadd.f32 %v4714, %v5349
  %v5508 = vadd.f32 %v4715, %v5352
  %v5509 = vadd.f32 %v4716, %v5354
  %v5510 = vadd.f32 %v4717, %v5357
  %v5511 = vadd.f32 %v4718, %v5359
  %v5512 = vadd.f32 %v4719, %v5362
  %v5513 = vadd.f32 %v4720, %v5364
  %v5514 = vadd.f32 %v4721, %v5367
  %v5515 = vadd.f32 %v4722, %v5369
  %v5516 = vadd.f32 %v4723, %v5372
  %v5517 = vadd.f32 %v4724, %v5374
  %v5518 = vadd.f32 %v4725, %v5377
  %v5519 = vadd.f32 %v4726, %v5379
  %v5520 = vadd.f32 %v4727, %v5382
  %v5521 = vadd.f32 %v4728, %v5384
  %v5522 = vadd.f32 %v4729, %v5387
  %v5523 = vadd.f32 %v4730, %v5389
  %v5524 = vadd.f32 %v4731, %v5392
  %v5525 = vadd.f32 %v4732, %v5394
  %v5526 = vadd.f32 %v4733, %v5397
  %v5527 = vadd.f32 %v4734, %v5399
  %v5528 = vadd.f32 %v4735, %v5402
  %v5529 = vadd.f32 %v4736, %v5404
  %v5530 = vadd.f32 %v4737, %v5407
  %v5531 = vadd.f32 %v4738, %v5409
  %v5532 = vadd.f32 %v4739, %v5412
  %v5533 = vadd.f32 %v4740, %v5414
  %v5534 = vadd.f32 %v4741, %v5417
  %v5535 = vadd.f32 %v4742, %v5419
  %v5536 = vadd.f32 %v4743, %v5422
  %v5537 = vadd.f32 %v4744, %v5424
  %v5538 = vadd.f32 %v4745, %v5427
  %v5539 = vadd.f32 %v4746, %v5429
  %v5540 = vadd.f32 %v4747, %v5432
  %v5541 = vadd.f32 %v4748, %v5434
  %v5542 = vadd.f32 %v4749, %v5437
  %v5543 = vadd.f32 %v4750, %v5439
  %v5544 = vadd.f32 %v4751, %v5442
  %v5545 = vadd.f32 %v4752, %v5444
  %v5546 = vadd.f32 %v4753, %v5447
  %v5547 = vadd.f32 %v4754, %v5449
  %v5548 = vadd.f32 %v4755, %v5452
  %v5549 = vadd.f32 %v4756, %v5454
  %v5550 = vadd.f32 %v4757, %v5457
  %v5551 = vadd.f32 %v4758, %v5459
  %v5552 = vadd.f32 %v4759, %v5462
  %v5553 = vadd.f32 %v4760, %v5464
  %v5554 = vadd.f32 %v4761, %v5467
  %v5555 = vadd.f32 %v4762, %v5469
  %v5556 = vadd.f32 %v4763, %v5472
  %v5557 = vadd.f32 %v4764, %v5474
  %v5558 = vadd.f32 %v4765, %v5477
  %v5559 = vadd.f32 %v4766, %v5479
  %v5560 = vadd.f32 %v4767, %v5482
  %v5561 = vadd.f32 %v4768, %v5484
  %v5562 = vadd.f32 %v4769, %v5487
  %v5563 = vadd.f32 %v4770, %v5489
  %v5564 = vadd.f32 %v4771, %v5492
  %v5565 = vadd.f32 %v4772, %v5494
  %v5566 = vadd.f32 %v4773, %v5497
  %v5567 = vadd.f32 %v4774, %v5499
  %v5568 = vadd.f32 %v4775, %v5502
  %v5569 = vadd.f32 %v4776, %v5504
  %v5576 = vrot.slane %v4793, 5
  %v5577 = vrot.slane %v5576, 4
  %v5578 = vrot.slane %v2909, 5
  %v5579 = vsel %vm4911, %v5577, %v5578
  %v5580 = vrot.slane %v5578, 4
  %v5581 = vrot.slane %v2910, 5
  %v5582 = vsel %vm4911, %v5580, %v5581
  %v5583 = vrot.slane %v4811, 5
  %v5584 = vrot.slane %v5583, 4
  %v5585 = vrot.slane %v2963, 5
  %v5586 = vsel %vm4911, %v5584, %v5585
  %v5587 = vrot.slane %v5585, 4
  %v5588 = vrot.slane %v2964, 5
  %v5589 = vsel %vm4911, %v5587, %v5588
  %s5590 = scalar_lea.vmem %s4, 40
  %v5591 = vld [vmem:[%s5590] sm:$0xf]
  %v5592 = vld [vmem:[%s5590 + $0x4] sm:$0xf]
  %v5593 = vunpack.c.l.b16 %v5579
  %v5594 = vunpack.c.l.b16 %v5582
  %v5595 = vunpack.c.l.b16 %v5586
  %v5596 = vunpack.c.l.b16 %v5589
  %v5597 = vpack.c.b16 %v5594, %v5593
  %v5598 = vpack.c.b16 %v5596, %v5595
  %v5601 = vunpack.c.l.b16 %v5591
  %v5602 = vunpack.c.l.b16 %v5592
  %v5603 = vpack.c.b16 %v5602, %v5601
  %v5606 = vsel %vm2145, %v5597, 0
  %v5609 = vsel %vm2145, %v5598, 0
  %5611 = vmatpush.bf16.msra.mxu0 0
  %5612 = vmatpush.bf16.msra.mxu0 0
  %5613 = vmatpush.bf16.msra.mxu0 0
  %5614 = vmatpush.bf16.msra.mxu0 0
  %5615 = vmatpush.bf16.msra.mxu0 0
  %5616 = vmatpush.bf16.msra.mxu0 0
  %5617 = vmatpush.bf16.msra.mxu0 0
  %5618 = vmatpush.bf16.msra.mxu0 %v5603
  %5619 = vmatmul.bf16.gmra.mxu0 %v5245
  %v5620 = vpop.f32.mrf.mxu0
  %v5621 = vadd.f32 0.0, %v5620
  %v5622 = vpop.f32.mrf.mxu0
  %v5623 = vadd.f32 0.0, %v5622
  %5624 = vmatmul.bf16.gmra.mxu0 %v5248
  %v5625 = vpop.f32.mrf.mxu0
  %v5626 = vadd.f32 0.0, %v5625
  %v5627 = vpop.f32.mrf.mxu0
  %v5628 = vadd.f32 0.0, %v5627
  %5629 = vmatmul.bf16.gmra.mxu0 %v5251
  %v5630 = vpop.f32.mrf.mxu0
  %v5631 = vadd.f32 0.0, %v5630
  %v5632 = vpop.f32.mrf.mxu0
  %v5633 = vadd.f32 0.0, %v5632
  %5634 = vmatmul.bf16.gmra.mxu0 %v5254
  %v5635 = vpop.f32.mrf.mxu0
  %v5636 = vadd.f32 0.0, %v5635
  %v5637 = vpop.f32.mrf.mxu0
  %v5638 = vadd.f32 0.0, %v5637
  %5639 = vmatmul.bf16.gmra.mxu0 %v5257
  %v5640 = vpop.f32.mrf.mxu0
  %v5641 = vadd.f32 0.0, %v5640
  %v5642 = vpop.f32.mrf.mxu0
  %v5643 = vadd.f32 0.0, %v5642
  %5644 = vmatmul.bf16.gmra.mxu0 %v5260
  %v5645 = vpop.f32.mrf.mxu0
  %v5646 = vadd.f32 0.0, %v5645
  %v5647 = vpop.f32.mrf.mxu0
  %v5648 = vadd.f32 0.0, %v5647
  %5649 = vmatmul.bf16.gmra.mxu0 %v5263
  %v5650 = vpop.f32.mrf.mxu0
  %v5651 = vadd.f32 0.0, %v5650
  %v5652 = vpop.f32.mrf.mxu0
  %v5653 = vadd.f32 0.0, %v5652
  %5654 = vmatmul.bf16.gmra.mxu0 %v5266
  %v5655 = vpop.f32.mrf.mxu0
  %v5656 = vadd.f32 0.0, %v5655
  %v5657 = vpop.f32.mrf.mxu0
  %v5658 = vadd.f32 0.0, %v5657
  %5659 = vmatmul.bf16.gmra.mxu0 %v5269
  %v5660 = vpop.f32.mrf.mxu0
  %v5661 = vadd.f32 0.0, %v5660
  %v5662 = vpop.f32.mrf.mxu0
  %v5663 = vadd.f32 0.0, %v5662
  %5664 = vmatmul.bf16.gmra.mxu0 %v5272
  %v5665 = vpop.f32.mrf.mxu0
  %v5666 = vadd.f32 0.0, %v5665
  %v5667 = vpop.f32.mrf.mxu0
  %v5668 = vadd.f32 0.0, %v5667
  %5669 = vmatmul.bf16.gmra.mxu0 %v5275
  %v5670 = vpop.f32.mrf.mxu0
  %v5671 = vadd.f32 0.0, %v5670
  %v5672 = vpop.f32.mrf.mxu0
  %v5673 = vadd.f32 0.0, %v5672
  %5674 = vmatmul.bf16.gmra.mxu0 %v5278
  %v5675 = vpop.f32.mrf.mxu0
  %v5676 = vadd.f32 0.0, %v5675
  %v5677 = vpop.f32.mrf.mxu0
  %v5678 = vadd.f32 0.0, %v5677
  %5679 = vmatmul.bf16.gmra.mxu0 %v5281
  %v5680 = vpop.f32.mrf.mxu0
  %v5681 = vadd.f32 0.0, %v5680
  %v5682 = vpop.f32.mrf.mxu0
  %v5683 = vadd.f32 0.0, %v5682
  %5684 = vmatmul.bf16.gmra.mxu0 %v5284
  %v5685 = vpop.f32.mrf.mxu0
  %v5686 = vadd.f32 0.0, %v5685
  %v5687 = vpop.f32.mrf.mxu0
  %v5688 = vadd.f32 0.0, %v5687
  %5689 = vmatmul.bf16.gmra.mxu0 %v5287
  %v5690 = vpop.f32.mrf.mxu0
  %v5691 = vadd.f32 0.0, %v5690
  %v5692 = vpop.f32.mrf.mxu0
  %v5693 = vadd.f32 0.0, %v5692
  %5694 = vmatmul.bf16.gmra.mxu0 %v5606
  %v5695 = vpop.f32.mrf.mxu0
  %v5696 = vadd.f32 0.0, %v5695
  %v5697 = vpop.f32.mrf.mxu0
  %v5698 = vadd.f32 0.0, %v5697
  %5699 = vmatmul.bf16.gmra.mxu0 %v5293
  %v5700 = vpop.f32.mrf.mxu0
  %v5701 = vadd.f32 0.0, %v5700
  %v5702 = vpop.f32.mrf.mxu0
  %v5703 = vadd.f32 0.0, %v5702
  %5704 = vmatmul.bf16.gmra.mxu0 %v5296
  %v5705 = vpop.f32.mrf.mxu0
  %v5706 = vadd.f32 0.0, %v5705
  %v5707 = vpop.f32.mrf.mxu0
  %v5708 = vadd.f32 0.0, %v5707
  %5709 = vmatmul.bf16.gmra.mxu0 %v5299
  %v5710 = vpop.f32.mrf.mxu0
  %v5711 = vadd.f32 0.0, %v5710
  %v5712 = vpop.f32.mrf.mxu0
  %v5713 = vadd.f32 0.0, %v5712
  %5714 = vmatmul.bf16.gmra.mxu0 %v5302
  %v5715 = vpop.f32.mrf.mxu0
  %v5716 = vadd.f32 0.0, %v5715
  %v5717 = vpop.f32.mrf.mxu0
  %v5718 = vadd.f32 0.0, %v5717
  %5719 = vmatmul.bf16.gmra.mxu0 %v5305
  %v5720 = vpop.f32.mrf.mxu0
  %v5721 = vadd.f32 0.0, %v5720
  %v5722 = vpop.f32.mrf.mxu0
  %v5723 = vadd.f32 0.0, %v5722
  %5724 = vmatmul.bf16.gmra.mxu0 %v5308
  %v5725 = vpop.f32.mrf.mxu0
  %v5726 = vadd.f32 0.0, %v5725
  %v5727 = vpop.f32.mrf.mxu0
  %v5728 = vadd.f32 0.0, %v5727
  %5729 = vmatmul.bf16.gmra.mxu0 %v5311
  %v5730 = vpop.f32.mrf.mxu0
  %v5731 = vadd.f32 0.0, %v5730
  %v5732 = vpop.f32.mrf.mxu0
  %v5733 = vadd.f32 0.0, %v5732
  %5734 = vmatmul.bf16.gmra.mxu0 %v5314
  %v5735 = vpop.f32.mrf.mxu0
  %v5736 = vadd.f32 0.0, %v5735
  %v5737 = vpop.f32.mrf.mxu0
  %v5738 = vadd.f32 0.0, %v5737
  %5739 = vmatmul.bf16.gmra.mxu0 %v5317
  %v5740 = vpop.f32.mrf.mxu0
  %v5741 = vadd.f32 0.0, %v5740
  %v5742 = vpop.f32.mrf.mxu0
  %v5743 = vadd.f32 0.0, %v5742
  %5744 = vmatmul.bf16.gmra.mxu0 %v5320
  %v5745 = vpop.f32.mrf.mxu0
  %v5746 = vadd.f32 0.0, %v5745
  %v5747 = vpop.f32.mrf.mxu0
  %v5748 = vadd.f32 0.0, %v5747
  %5749 = vmatmul.bf16.gmra.mxu0 %v5323
  %v5750 = vpop.f32.mrf.mxu0
  %v5751 = vadd.f32 0.0, %v5750
  %v5752 = vpop.f32.mrf.mxu0
  %v5753 = vadd.f32 0.0, %v5752
  %5754 = vmatmul.bf16.gmra.mxu0 %v5326
  %v5755 = vpop.f32.mrf.mxu0
  %v5756 = vadd.f32 0.0, %v5755
  %v5757 = vpop.f32.mrf.mxu0
  %v5758 = vadd.f32 0.0, %v5757
  %5759 = vmatmul.bf16.gmra.mxu0 %v5329
  %v5760 = vpop.f32.mrf.mxu0
  %v5761 = vadd.f32 0.0, %v5760
  %v5762 = vpop.f32.mrf.mxu0
  %v5763 = vadd.f32 0.0, %v5762
  %5764 = vmatmul.bf16.gmra.mxu0 %v5332
  %v5765 = vpop.f32.mrf.mxu0
  %v5766 = vadd.f32 0.0, %v5765
  %v5767 = vpop.f32.mrf.mxu0
  %v5768 = vadd.f32 0.0, %v5767
  %5769 = vmatmul.bf16.gmra.mxu0 %v5335
  %v5770 = vpop.f32.mrf.mxu0
  %v5771 = vadd.f32 0.0, %v5770
  %v5772 = vpop.f32.mrf.mxu0
  %v5773 = vadd.f32 0.0, %v5772
  %5774 = vmatmul.bf16.gmra.mxu0 %v5609
  %v5775 = vpop.f32.mrf.mxu0
  %v5776 = vadd.f32 0.0, %v5775
  %v5777 = vpop.f32.mrf.mxu0
  %v5778 = vadd.f32 0.0, %v5777
  %5779 = vdwg.mxu0
  %v5780 = vadd.f32 %v5506, %v5621
  %v5781 = vadd.f32 %v5507, %v5623
  %v5782 = vadd.f32 %v5508, %v5626
  %v5783 = vadd.f32 %v5509, %v5628
  %v5784 = vadd.f32 %v5510, %v5631
  %v5785 = vadd.f32 %v5511, %v5633
  %v5786 = vadd.f32 %v5512, %v5636
  %v5787 = vadd.f32 %v5513, %v5638
  %v5788 = vadd.f32 %v5514, %v5641
  %v5789 = vadd.f32 %v5515, %v5643
  %v5790 = vadd.f32 %v5516, %v5646
  %v5791 = vadd.f32 %v5517, %v5648
  %v5792 = vadd.f32 %v5518, %v5651
  %v5793 = vadd.f32 %v5519, %v5653
  %v5794 = vadd.f32 %v5520, %v5656
  %v5795 = vadd.f32 %v5521, %v5658
  %v5796 = vadd.f32 %v5522, %v5661
  %v5797 = vadd.f32 %v5523, %v5663
  %v5798 = vadd.f32 %v5524, %v5666
  %v5799 = vadd.f32 %v5525, %v5668
  %v5800 = vadd.f32 %v5526, %v5671
  %v5801 = vadd.f32 %v5527, %v5673
  %v5802 = vadd.f32 %v5528, %v5676
  %v5803 = vadd.f32 %v5529, %v5678
  %v5804 = vadd.f32 %v5530, %v5681
  %v5805 = vadd.f32 %v5531, %v5683
  %v5806 = vadd.f32 %v5532, %v5686
  %v5807 = vadd.f32 %v5533, %v5688
  %v5808 = vadd.f32 %v5534, %v5691
  %v5809 = vadd.f32 %v5535, %v5693
  %v5810 = vadd.f32 %v5536, %v5696
  %v5811 = vadd.f32 %v5537, %v5698
  %v5812 = vadd.f32 %v5538, %v5701
  %v5813 = vadd.f32 %v5539, %v5703
  %v5814 = vadd.f32 %v5540, %v5706
  %v5815 = vadd.f32 %v5541, %v5708
  %v5816 = vadd.f32 %v5542, %v5711
  %v5817 = vadd.f32 %v5543, %v5713
  %v5818 = vadd.f32 %v5544, %v5716
  %v5819 = vadd.f32 %v5545, %v5718
  %v5820 = vadd.f32 %v5546, %v5721
  %v5821 = vadd.f32 %v5547, %v5723
  %v5822 = vadd.f32 %v5548, %v5726
  %v5823 = vadd.f32 %v5549, %v5728
  %v5824 = vadd.f32 %v5550, %v5731
  %v5825 = vadd.f32 %v5551, %v5733
  %v5826 = vadd.f32 %v5552, %v5736
  %v5827 = vadd.f32 %v5553, %v5738
  %v5828 = vadd.f32 %v5554, %v5741
  %v5829 = vadd.f32 %v5555, %v5743
  %v5830 = vadd.f32 %v5556, %v5746
  %v5831 = vadd.f32 %v5557, %v5748
  %v5832 = vadd.f32 %v5558, %v5751
  %v5833 = vadd.f32 %v5559, %v5753
  %v5834 = vadd.f32 %v5560, %v5756
  %v5835 = vadd.f32 %v5561, %v5758
  %v5836 = vadd.f32 %v5562, %v5761
  %v5837 = vadd.f32 %v5563, %v5763
  %v5838 = vadd.f32 %v5564, %v5766
  %v5839 = vadd.f32 %v5565, %v5768
  %v5840 = vadd.f32 %v5566, %v5771
  %v5841 = vadd.f32 %v5567, %v5773
  %v5842 = vadd.f32 %v5568, %v5776
  %v5843 = vadd.f32 %v5569, %v5778
  %v5850 = vrot.slane %v4794, 5
  %v5851 = vrot.slane %v5850, 4
  %v5852 = vrot.slane %v2912, 5
  %v5853 = vsel %vm4911, %v5851, %v5852
  %v5854 = vrot.slane %v5852, 4
  %v5855 = vrot.slane %v2913, 5
  %v5856 = vsel %vm4911, %v5854, %v5855
  %v5857 = vrot.slane %v4812, 5
  %v5858 = vrot.slane %v5857, 4
  %v5859 = vrot.slane %v2966, 5
  %v5860 = vsel %vm4911, %v5858, %v5859
  %v5861 = vrot.slane %v5859, 4
  %v5862 = vrot.slane %v2967, 5
  %v5863 = vsel %vm4911, %v5861, %v5862
  %s5864 = scalar_lea.vmem %s4, 64
  %v5865 = vld [vmem:[%s5864] sm:$0xf]
  %v5866 = vld [vmem:[%s5864 + $0x4] sm:$0xf]
  %v5867 = vunpack.c.l.b16 %v5853
  %v5868 = vunpack.c.l.b16 %v5856
  %v5869 = vunpack.c.l.b16 %v5860
  %v5870 = vunpack.c.l.b16 %v5863
  %v5871 = vpack.c.b16 %v5868, %v5867
  %v5872 = vpack.c.b16 %v5870, %v5869
  %v5875 = vunpack.c.l.b16 %v5865
  %v5876 = vunpack.c.l.b16 %v5866
  %v5877 = vpack.c.b16 %v5876, %v5875
  %v5880 = vsel %vm2145, %v5871, 0
  %v5883 = vsel %vm2145, %v5872, 0
  %5885 = vmatpush.bf16.msra.mxu0 0
  %5886 = vmatpush.bf16.msra.mxu0 0
  %5887 = vmatpush.bf16.msra.mxu0 0
  %5888 = vmatpush.bf16.msra.mxu0 0
  %5889 = vmatpush.bf16.msra.mxu0 0
  %5890 = vmatpush.bf16.msra.mxu0 0
  %5891 = vmatpush.bf16.msra.mxu0 0
  %5892 = vmatpush.bf16.msra.mxu0 %v5877
  %5893 = vmatmul.bf16.gmra.mxu0 %v5248
  %v5894 = vpop.f32.mrf.mxu0
  %v5895 = vadd.f32 0.0, %v5894
  %v5896 = vpop.f32.mrf.mxu0
  %v5897 = vadd.f32 0.0, %v5896
  %5898 = vmatmul.bf16.gmra.mxu0 %v5251
  %v5899 = vpop.f32.mrf.mxu0
  %v5900 = vadd.f32 0.0, %v5899
  %v5901 = vpop.f32.mrf.mxu0
  %v5902 = vadd.f32 0.0, %v5901
  %5903 = vmatmul.bf16.gmra.mxu0 %v5254
  %v5904 = vpop.f32.mrf.mxu0
  %v5905 = vadd.f32 0.0, %v5904
  %v5906 = vpop.f32.mrf.mxu0
  %v5907 = vadd.f32 0.0, %v5906
  %5908 = vmatmul.bf16.gmra.mxu0 %v5257
  %v5909 = vpop.f32.mrf.mxu0
  %v5910 = vadd.f32 0.0, %v5909
  %v5911 = vpop.f32.mrf.mxu0
  %v5912 = vadd.f32 0.0, %v5911
  %5913 = vmatmul.bf16.gmra.mxu0 %v5260
  %v5914 = vpop.f32.mrf.mxu0
  %v5915 = vadd.f32 0.0, %v5914
  %v5916 = vpop.f32.mrf.mxu0
  %v5917 = vadd.f32 0.0, %v5916
  %5918 = vmatmul.bf16.gmra.mxu0 %v5263
  %v5919 = vpop.f32.mrf.mxu0
  %v5920 = vadd.f32 0.0, %v5919
  %v5921 = vpop.f32.mrf.mxu0
  %v5922 = vadd.f32 0.0, %v5921
  %5923 = vmatmul.bf16.gmra.mxu0 %v5266
  %v5924 = vpop.f32.mrf.mxu0
  %v5925 = vadd.f32 0.0, %v5924
  %v5926 = vpop.f32.mrf.mxu0
  %v5927 = vadd.f32 0.0, %v5926
  %5928 = vmatmul.bf16.gmra.mxu0 %v5269
  %v5929 = vpop.f32.mrf.mxu0
  %v5930 = vadd.f32 0.0, %v5929
  %v5931 = vpop.f32.mrf.mxu0
  %v5932 = vadd.f32 0.0, %v5931
  %5933 = vmatmul.bf16.gmra.mxu0 %v5272
  %v5934 = vpop.f32.mrf.mxu0
  %v5935 = vadd.f32 0.0, %v5934
  %v5936 = vpop.f32.mrf.mxu0
  %v5937 = vadd.f32 0.0, %v5936
  %5938 = vmatmul.bf16.gmra.mxu0 %v5275
  %v5939 = vpop.f32.mrf.mxu0
  %v5940 = vadd.f32 0.0, %v5939
  %v5941 = vpop.f32.mrf.mxu0
  %v5942 = vadd.f32 0.0, %v5941
  %5943 = vmatmul.bf16.gmra.mxu0 %v5278
  %v5944 = vpop.f32.mrf.mxu0
  %v5945 = vadd.f32 0.0, %v5944
  %v5946 = vpop.f32.mrf.mxu0
  %v5947 = vadd.f32 0.0, %v5946
  %5948 = vmatmul.bf16.gmra.mxu0 %v5281
  %v5949 = vpop.f32.mrf.mxu0
  %v5950 = vadd.f32 0.0, %v5949
  %v5951 = vpop.f32.mrf.mxu0
  %v5952 = vadd.f32 0.0, %v5951
  %5953 = vmatmul.bf16.gmra.mxu0 %v5284
  %v5954 = vpop.f32.mrf.mxu0
  %v5955 = vadd.f32 0.0, %v5954
  %v5956 = vpop.f32.mrf.mxu0
  %v5957 = vadd.f32 0.0, %v5956
  %5958 = vmatmul.bf16.gmra.mxu0 %v5287
  %v5959 = vpop.f32.mrf.mxu0
  %v5960 = vadd.f32 0.0, %v5959
  %v5961 = vpop.f32.mrf.mxu0
  %v5962 = vadd.f32 0.0, %v5961
  %5963 = vmatmul.bf16.gmra.mxu0 %v5606
  %v5964 = vpop.f32.mrf.mxu0
  %v5965 = vadd.f32 0.0, %v5964
  %v5966 = vpop.f32.mrf.mxu0
  %v5967 = vadd.f32 0.0, %v5966
  %5968 = vmatmul.bf16.gmra.mxu0 %v5880
  %v5969 = vpop.f32.mrf.mxu0
  %v5970 = vadd.f32 0.0, %v5969
  %v5971 = vpop.f32.mrf.mxu0
  %v5972 = vadd.f32 0.0, %v5971
  %5973 = vmatmul.bf16.gmra.mxu0 %v5296
  %v5974 = vpop.f32.mrf.mxu0
  %v5975 = vadd.f32 0.0, %v5974
  %v5976 = vpop.f32.mrf.mxu0
  %v5977 = vadd.f32 0.0, %v5976
  %5978 = vmatmul.bf16.gmra.mxu0 %v5299
  %v5979 = vpop.f32.mrf.mxu0
  %v5980 = vadd.f32 0.0, %v5979
  %v5981 = vpop.f32.mrf.mxu0
  %v5982 = vadd.f32 0.0, %v5981
  %5983 = vmatmul.bf16.gmra.mxu0 %v5302
  %v5984 = vpop.f32.mrf.mxu0
  %v5985 = vadd.f32 0.0, %v5984
  %v5986 = vpop.f32.mrf.mxu0
  %v5987 = vadd.f32 0.0, %v5986
  %5988 = vmatmul.bf16.gmra.mxu0 %v5305
  %v5989 = vpop.f32.mrf.mxu0
  %v5990 = vadd.f32 0.0, %v5989
  %v5991 = vpop.f32.mrf.mxu0
  %v5992 = vadd.f32 0.0, %v5991
  %5993 = vmatmul.bf16.gmra.mxu0 %v5308
  %v5994 = vpop.f32.mrf.mxu0
  %v5995 = vadd.f32 0.0, %v5994
  %v5996 = vpop.f32.mrf.mxu0
  %v5997 = vadd.f32 0.0, %v5996
  %5998 = vmatmul.bf16.gmra.mxu0 %v5311
  %v5999 = vpop.f32.mrf.mxu0
  %v6000 = vadd.f32 0.0, %v5999
  %v6001 = vpop.f32.mrf.mxu0
  %v6002 = vadd.f32 0.0, %v6001
  %6003 = vmatmul.bf16.gmra.mxu0 %v5314
  %v6004 = vpop.f32.mrf.mxu0
  %v6005 = vadd.f32 0.0, %v6004
  %v6006 = vpop.f32.mrf.mxu0
  %v6007 = vadd.f32 0.0, %v6006
  %6008 = vmatmul.bf16.gmra.mxu0 %v5317
  %v6009 = vpop.f32.mrf.mxu0
  %v6010 = vadd.f32 0.0, %v6009
  %v6011 = vpop.f32.mrf.mxu0
  %v6012 = vadd.f32 0.0, %v6011
  %6013 = vmatmul.bf16.gmra.mxu0 %v5320
  %v6014 = vpop.f32.mrf.mxu0
  %v6015 = vadd.f32 0.0, %v6014
  %v6016 = vpop.f32.mrf.mxu0
  %v6017 = vadd.f32 0.0, %v6016
  %6018 = vmatmul.bf16.gmra.mxu0 %v5323
  %v6019 = vpop.f32.mrf.mxu0
  %v6020 = vadd.f32 0.0, %v6019
  %v6021 = vpop.f32.mrf.mxu0
  %v6022 = vadd.f32 0.0, %v6021
  %6023 = vmatmul.bf16.gmra.mxu0 %v5326
  %v6024 = vpop.f32.mrf.mxu0
  %v6025 = vadd.f32 0.0, %v6024
  %v6026 = vpop.f32.mrf.mxu0
  %v6027 = vadd.f32 0.0, %v6026
  %6028 = vmatmul.bf16.gmra.mxu0 %v5329
  %v6029 = vpop.f32.mrf.mxu0
  %v6030 = vadd.f32 0.0, %v6029
  %v6031 = vpop.f32.mrf.mxu0
  %v6032 = vadd.f32 0.0, %v6031
  %6033 = vmatmul.bf16.gmra.mxu0 %v5332
  %v6034 = vpop.f32.mrf.mxu0
  %v6035 = vadd.f32 0.0, %v6034
  %v6036 = vpop.f32.mrf.mxu0
  %v6037 = vadd.f32 0.0, %v6036
  %6038 = vmatmul.bf16.gmra.mxu0 %v5335
  %v6039 = vpop.f32.mrf.mxu0
  %v6040 = vadd.f32 0.0, %v6039
  %v6041 = vpop.f32.mrf.mxu0
  %v6042 = vadd.f32 0.0, %v6041
  %6043 = vmatmul.bf16.gmra.mxu0 %v5609
  %v6044 = vpop.f32.mrf.mxu0
  %v6045 = vadd.f32 0.0, %v6044
  %v6046 = vpop.f32.mrf.mxu0
  %v6047 = vadd.f32 0.0, %v6046
  %6048 = vmatmul.bf16.gmra.mxu0 %v5883
  %v6049 = vpop.f32.mrf.mxu0
  %v6050 = vadd.f32 0.0, %v6049
  %v6051 = vpop.f32.mrf.mxu0
  %v6052 = vadd.f32 0.0, %v6051
  %6053 = vdwg.mxu0
  %v6054 = vadd.f32 %v5780, %v5895
  %v6055 = vadd.f32 %v5781, %v5897
  %v6056 = vadd.f32 %v5782, %v5900
  %v6057 = vadd.f32 %v5783, %v5902
  %v6058 = vadd.f32 %v5784, %v5905
  %v6059 = vadd.f32 %v5785, %v5907
  %v6060 = vadd.f32 %v5786, %v5910
  %v6061 = vadd.f32 %v5787, %v5912
  %v6062 = vadd.f32 %v5788, %v5915
  %v6063 = vadd.f32 %v5789, %v5917
  %v6064 = vadd.f32 %v5790, %v5920
  %v6065 = vadd.f32 %v5791, %v5922
  %v6066 = vadd.f32 %v5792, %v5925
  %v6067 = vadd.f32 %v5793, %v5927
  %v6068 = vadd.f32 %v5794, %v5930
  %v6069 = vadd.f32 %v5795, %v5932
  %v6070 = vadd.f32 %v5796, %v5935
  %v6071 = vadd.f32 %v5797, %v5937
  %v6072 = vadd.f32 %v5798, %v5940
  %v6073 = vadd.f32 %v5799, %v5942
  %v6074 = vadd.f32 %v5800, %v5945
  %v6075 = vadd.f32 %v5801, %v5947
  %v6076 = vadd.f32 %v5802, %v5950
  %v6077 = vadd.f32 %v5803, %v5952
  %v6078 = vadd.f32 %v5804, %v5955
  %v6079 = vadd.f32 %v5805, %v5957
  %v6080 = vadd.f32 %v5806, %v5960
  %v6081 = vadd.f32 %v5807, %v5962
  %v6082 = vadd.f32 %v5808, %v5965
  %v6083 = vadd.f32 %v5809, %v5967
  %v6084 = vadd.f32 %v5810, %v5970
  %v6085 = vadd.f32 %v5811, %v5972
  %v6086 = vadd.f32 %v5812, %v5975
  %v6087 = vadd.f32 %v5813, %v5977
  %v6088 = vadd.f32 %v5814, %v5980
  %v6089 = vadd.f32 %v5815, %v5982
  %v6090 = vadd.f32 %v5816, %v5985
  %v6091 = vadd.f32 %v5817, %v5987
  %v6092 = vadd.f32 %v5818, %v5990
  %v6093 = vadd.f32 %v5819, %v5992
  %v6094 = vadd.f32 %v5820, %v5995
  %v6095 = vadd.f32 %v5821, %v5997
  %v6096 = vadd.f32 %v5822, %v6000
  %v6097 = vadd.f32 %v5823, %v6002
  %v6098 = vadd.f32 %v5824, %v6005
  %v6099 = vadd.f32 %v5825, %v6007
  %v6100 = vadd.f32 %v5826, %v6010
  %v6101 = vadd.f32 %v5827, %v6012
  %v6102 = vadd.f32 %v5828, %v6015
  %v6103 = vadd.f32 %v5829, %v6017
  %v6104 = vadd.f32 %v5830, %v6020
  %v6105 = vadd.f32 %v5831, %v6022
  %v6106 = vadd.f32 %v5832, %v6025
  %v6107 = vadd.f32 %v5833, %v6027
  %v6108 = vadd.f32 %v5834, %v6030
  %v6109 = vadd.f32 %v5835, %v6032
  %v6110 = vadd.f32 %v5836, %v6035
  %v6111 = vadd.f32 %v5837, %v6037
  %v6112 = vadd.f32 %v5838, %v6040
  %v6113 = vadd.f32 %v5839, %v6042
  %v6114 = vadd.f32 %v5840, %v6045
  %v6115 = vadd.f32 %v5841, %v6047
  %v6116 = vadd.f32 %v5842, %v6050
  %v6117 = vadd.f32 %v5843, %v6052
  %v6118 = vld [vmem:[%s5] sm:$0x1]
  %v6120 = vperm.slane %v6118, 0
  %v6122 = vmul.f32 %v6054, %v6120
  %v6123 = vmul.f32 %v6055, %v6120
  %v6124 = vmul.f32 %v6056, %v6120
  %v6125 = vmul.f32 %v6057, %v6120
  %v6126 = vmul.f32 %v6058, %v6120
  %v6127 = vmul.f32 %v6059, %v6120
  %v6128 = vmul.f32 %v6060, %v6120
  %v6129 = vmul.f32 %v6061, %v6120
  %v6130 = vmul.f32 %v6062, %v6120
  %v6131 = vmul.f32 %v6063, %v6120
  %v6132 = vmul.f32 %v6064, %v6120
  %v6133 = vmul.f32 %v6065, %v6120
  %v6134 = vmul.f32 %v6066, %v6120
  %v6135 = vmul.f32 %v6067, %v6120
  %v6136 = vmul.f32 %v6068, %v6120
  %v6137 = vmul.f32 %v6069, %v6120
  %v6138 = vmul.f32 %v6070, %v6120
  %v6139 = vmul.f32 %v6071, %v6120
  %v6140 = vmul.f32 %v6072, %v6120
  %v6141 = vmul.f32 %v6073, %v6120
  %v6142 = vmul.f32 %v6074, %v6120
  %v6143 = vmul.f32 %v6075, %v6120
  %v6144 = vmul.f32 %v6076, %v6120
  %v6145 = vmul.f32 %v6077, %v6120
  %v6146 = vmul.f32 %v6078, %v6120
  %v6147 = vmul.f32 %v6079, %v6120
  %v6148 = vmul.f32 %v6080, %v6120
  %v6149 = vmul.f32 %v6081, %v6120
  %v6150 = vmul.f32 %v6082, %v6120
  %v6151 = vmul.f32 %v6083, %v6120
  %v6152 = vmul.f32 %v6084, %v6120
  %v6153 = vmul.f32 %v6085, %v6120
  %v6154 = vmul.f32 %v6086, %v6120
  %v6155 = vmul.f32 %v6087, %v6120
  %v6156 = vmul.f32 %v6088, %v6120
  %v6157 = vmul.f32 %v6089, %v6120
  %v6158 = vmul.f32 %v6090, %v6120
  %v6159 = vmul.f32 %v6091, %v6120
  %v6160 = vmul.f32 %v6092, %v6120
  %v6161 = vmul.f32 %v6093, %v6120
  %v6162 = vmul.f32 %v6094, %v6120
  %v6163 = vmul.f32 %v6095, %v6120
  %v6164 = vmul.f32 %v6096, %v6120
  %v6165 = vmul.f32 %v6097, %v6120
  %v6166 = vmul.f32 %v6098, %v6120
  %v6167 = vmul.f32 %v6099, %v6120
  %v6168 = vmul.f32 %v6100, %v6120
  %v6169 = vmul.f32 %v6101, %v6120
  %v6170 = vmul.f32 %v6102, %v6120
  %v6171 = vmul.f32 %v6103, %v6120
  %v6172 = vmul.f32 %v6104, %v6120
  %v6173 = vmul.f32 %v6105, %v6120
  %v6174 = vmul.f32 %v6106, %v6120
  %v6175 = vmul.f32 %v6107, %v6120
  %v6176 = vmul.f32 %v6108, %v6120
  %v6177 = vmul.f32 %v6109, %v6120
  %v6178 = vmul.f32 %v6110, %v6120
  %v6179 = vmul.f32 %v6111, %v6120
  %v6180 = vmul.f32 %v6112, %v6120
  %v6181 = vmul.f32 %v6113, %v6120
  %v6182 = vmul.f32 %v6114, %v6120
  %v6183 = vmul.f32 %v6115, %v6120
  %v6184 = vmul.f32 %v6116, %v6120
  %v6185 = vmul.f32 %v6117, %v6120
  %v6186 = vld [vmem:[%s6] sm:$0x1]
  %v6188 = vperm.slane %v6186, 0
  %v6190 = vadd.f32 %v6122, %v6188
  %v6191 = vadd.f32 %v6123, %v6188
  %v6192 = vadd.f32 %v6124, %v6188
  %v6193 = vadd.f32 %v6125, %v6188
  %v6194 = vadd.f32 %v6126, %v6188
  %v6195 = vadd.f32 %v6127, %v6188
  %v6196 = vadd.f32 %v6128, %v6188
  %v6197 = vadd.f32 %v6129, %v6188
  %v6198 = vadd.f32 %v6130, %v6188
  %v6199 = vadd.f32 %v6131, %v6188
  %v6200 = vadd.f32 %v6132, %v6188
  %v6201 = vadd.f32 %v6133, %v6188
  %v6202 = vadd.f32 %v6134, %v6188
  %v6203 = vadd.f32 %v6135, %v6188
  %v6204 = vadd.f32 %v6136, %v6188
  %v6205 = vadd.f32 %v6137, %v6188
  %v6206 = vadd.f32 %v6138, %v6188
  %v6207 = vadd.f32 %v6139, %v6188
  %v6208 = vadd.f32 %v6140, %v6188
  %v6209 = vadd.f32 %v6141, %v6188
  %v6210 = vadd.f32 %v6142, %v6188
  %v6211 = vadd.f32 %v6143, %v6188
  %v6212 = vadd.f32 %v6144, %v6188
  %v6213 = vadd.f32 %v6145, %v6188
  %v6214 = vadd.f32 %v6146, %v6188
  %v6215 = vadd.f32 %v6147, %v6188
  %v6216 = vadd.f32 %v6148, %v6188
  %v6217 = vadd.f32 %v6149, %v6188
  %v6218 = vadd.f32 %v6150, %v6188
  %v6219 = vadd.f32 %v6151, %v6188
  %v6220 = vadd.f32 %v6152, %v6188
  %v6221 = vadd.f32 %v6153, %v6188
  %v6222 = vadd.f32 %v6154, %v6188
  %v6223 = vadd.f32 %v6155, %v6188
  %v6224 = vadd.f32 %v6156, %v6188
  %v6225 = vadd.f32 %v6157, %v6188
  %v6226 = vadd.f32 %v6158, %v6188
  %v6227 = vadd.f32 %v6159, %v6188
  %v6228 = vadd.f32 %v6160, %v6188
  %v6229 = vadd.f32 %v6161, %v6188
  %v6230 = vadd.f32 %v6162, %v6188
  %v6231 = vadd.f32 %v6163, %v6188
  %v6232 = vadd.f32 %v6164, %v6188
  %v6233 = vadd.f32 %v6165, %v6188
  %v6234 = vadd.f32 %v6166, %v6188
  %v6235 = vadd.f32 %v6167, %v6188
  %v6236 = vadd.f32 %v6168, %v6188
  %v6237 = vadd.f32 %v6169, %v6188
  %v6238 = vadd.f32 %v6170, %v6188
  %v6239 = vadd.f32 %v6171, %v6188
  %v6240 = vadd.f32 %v6172, %v6188
  %v6241 = vadd.f32 %v6173, %v6188
  %v6242 = vadd.f32 %v6174, %v6188
  %v6243 = vadd.f32 %v6175, %v6188
  %v6244 = vadd.f32 %v6176, %v6188
  %v6245 = vadd.f32 %v6177, %v6188
  %v6246 = vadd.f32 %v6178, %v6188
  %v6247 = vadd.f32 %v6179, %v6188
  %v6248 = vadd.f32 %v6180, %v6188
  %v6249 = vadd.f32 %v6181, %v6188
  %v6250 = vadd.f32 %v6182, %v6188
  %v6251 = vadd.f32 %v6183, %v6188
  %v6252 = vadd.f32 %v6184, %v6188
  %v6253 = vadd.f32 %v6185, %v6188
  %vm6254 = vcmp.gt.f32.partialorder %v6190, 0.0
  %vm6255 = vcmp.gt.f32.partialorder %v6191, 0.0
  %vm6256 = vcmp.gt.f32.partialorder %v6192, 0.0
  %vm6257 = vcmp.gt.f32.partialorder %v6193, 0.0
  %vm6258 = vcmp.gt.f32.partialorder %v6194, 0.0
  %vm6259 = vcmp.gt.f32.partialorder %v6195, 0.0
  %vm6260 = vcmp.gt.f32.partialorder %v6196, 0.0
  %vm6261 = vcmp.gt.f32.partialorder %v6197, 0.0
  %vm6262 = vcmp.gt.f32.partialorder %v6198, 0.0
  %vm6263 = vcmp.gt.f32.partialorder %v6199, 0.0
  %vm6264 = vcmp.gt.f32.partialorder %v6200, 0.0
  %vm6265 = vcmp.gt.f32.partialorder %v6201, 0.0
  %vm6266 = vcmp.gt.f32.partialorder %v6202, 0.0
  %vm6267 = vcmp.gt.f32.partialorder %v6203, 0.0
  %vm6268 = vcmp.gt.f32.partialorder %v6204, 0.0
  %vm6269 = vcmp.gt.f32.partialorder %v6205, 0.0
  %vm6270 = vcmp.gt.f32.partialorder %v6206, 0.0
  %vm6271 = vcmp.gt.f32.partialorder %v6207, 0.0
  %vm6272 = vcmp.gt.f32.partialorder %v6208, 0.0
  %vm6273 = vcmp.gt.f32.partialorder %v6209, 0.0
  %vm6274 = vcmp.gt.f32.partialorder %v6210, 0.0
  %vm6275 = vcmp.gt.f32.partialorder %v6211, 0.0
  %vm6276 = vcmp.gt.f32.partialorder %v6212, 0.0
  %vm6277 = vcmp.gt.f32.partialorder %v6213, 0.0
  %vm6278 = vcmp.gt.f32.partialorder %v6214, 0.0
  %vm6279 = vcmp.gt.f32.partialorder %v6215, 0.0
  %vm6280 = vcmp.gt.f32.partialorder %v6216, 0.0
  %vm6281 = vcmp.gt.f32.partialorder %v6217, 0.0
  %vm6282 = vcmp.gt.f32.partialorder %v6218, 0.0
  %vm6283 = vcmp.gt.f32.partialorder %v6219, 0.0
  %vm6284 = vcmp.gt.f32.partialorder %v6220, 0.0
  %vm6285 = vcmp.gt.f32.partialorder %v6221, 0.0
  %vm6286 = vcmp.gt.f32.partialorder %v6222, 0.0
  %vm6287 = vcmp.gt.f32.partialorder %v6223, 0.0
  %vm6288 = vcmp.gt.f32.partialorder %v6224, 0.0
  %vm6289 = vcmp.gt.f32.partialorder %v6225, 0.0
  %vm6290 = vcmp.gt.f32.partialorder %v6226, 0.0
  %vm6291 = vcmp.gt.f32.partialorder %v6227, 0.0
  %vm6292 = vcmp.gt.f32.partialorder %v6228, 0.0
  %vm6293 = vcmp.gt.f32.partialorder %v6229, 0.0
  %vm6294 = vcmp.gt.f32.partialorder %v6230, 0.0
  %vm6295 = vcmp.gt.f32.partialorder %v6231, 0.0
  %vm6296 = vcmp.gt.f32.partialorder %v6232, 0.0
  %vm6297 = vcmp.gt.f32.partialorder %v6233, 0.0
  %vm6298 = vcmp.gt.f32.partialorder %v6234, 0.0
  %vm6299 = vcmp.gt.f32.partialorder %v6235, 0.0
  %vm6300 = vcmp.gt.f32.partialorder %v6236, 0.0
  %vm6301 = vcmp.gt.f32.partialorder %v6237, 0.0
  %vm6302 = vcmp.gt.f32.partialorder %v6238, 0.0
  %vm6303 = vcmp.gt.f32.partialorder %v6239, 0.0
  %vm6304 = vcmp.gt.f32.partialorder %v6240, 0.0
  %vm6305 = vcmp.gt.f32.partialorder %v6241, 0.0
  %vm6306 = vcmp.gt.f32.partialorder %v6242, 0.0
  %vm6307 = vcmp.gt.f32.partialorder %v6243, 0.0
  %vm6308 = vcmp.gt.f32.partialorder %v6244, 0.0
  %vm6309 = vcmp.gt.f32.partialorder %v6245, 0.0
  %vm6310 = vcmp.gt.f32.partialorder %v6246, 0.0
  %vm6311 = vcmp.gt.f32.partialorder %v6247, 0.0
  %vm6312 = vcmp.gt.f32.partialorder %v6248, 0.0
  %vm6313 = vcmp.gt.f32.partialorder %v6249, 0.0
  %vm6314 = vcmp.gt.f32.partialorder %v6250, 0.0
  %vm6315 = vcmp.gt.f32.partialorder %v6251, 0.0
  %vm6316 = vcmp.gt.f32.partialorder %v6252, 0.0
  %vm6317 = vcmp.gt.f32.partialorder %v6253, 0.0
  %v6318 = vmul.f32 %v6190, 0.1
  %v6319 = vmul.f32 %v6191, 0.1
  %v6320 = vmul.f32 %v6192, 0.1
  %v6321 = vmul.f32 %v6193, 0.1
  %v6322 = vmul.f32 %v6194, 0.1
  %v6323 = vmul.f32 %v6195, 0.1
  %v6324 = vmul.f32 %v6196, 0.1
  %v6325 = vmul.f32 %v6197, 0.1
  %v6326 = vmul.f32 %v6198, 0.1
  %v6327 = vmul.f32 %v6199, 0.1
  %v6328 = vmul.f32 %v6200, 0.1
  %v6329 = vmul.f32 %v6201, 0.1
  %v6330 = vmul.f32 %v6202, 0.1
  %v6331 = vmul.f32 %v6203, 0.1
  %v6332 = vmul.f32 %v6204, 0.1
  %v6333 = vmul.f32 %v6205, 0.1
  %v6334 = vmul.f32 %v6206, 0.1
  %v6335 = vmul.f32 %v6207, 0.1
  %v6336 = vmul.f32 %v6208, 0.1
  %v6337 = vmul.f32 %v6209, 0.1
  %v6338 = vmul.f32 %v6210, 0.1
  %v6339 = vmul.f32 %v6211, 0.1
  %v6340 = vmul.f32 %v6212, 0.1
  %v6341 = vmul.f32 %v6213, 0.1
  %v6342 = vmul.f32 %v6214, 0.1
  %v6343 = vmul.f32 %v6215, 0.1
  %v6344 = vmul.f32 %v6216, 0.1
  %v6345 = vmul.f32 %v6217, 0.1
  %v6346 = vmul.f32 %v6218, 0.1
  %v6347 = vmul.f32 %v6219, 0.1
  %v6348 = vmul.f32 %v6220, 0.1
  %v6349 = vmul.f32 %v6221, 0.1
  %v6350 = vmul.f32 %v6222, 0.1
  %v6351 = vmul.f32 %v6223, 0.1
  %v6352 = vmul.f32 %v6224, 0.1
  %v6353 = vmul.f32 %v6225, 0.1
  %v6354 = vmul.f32 %v6226, 0.1
  %v6355 = vmul.f32 %v6227, 0.1
  %v6356 = vmul.f32 %v6228, 0.1
  %v6357 = vmul.f32 %v6229, 0.1
  %v6358 = vmul.f32 %v6230, 0.1
  %v6359 = vmul.f32 %v6231, 0.1
  %v6360 = vmul.f32 %v6232, 0.1
  %v6361 = vmul.f32 %v6233, 0.1
  %v6362 = vmul.f32 %v6234, 0.1
  %v6363 = vmul.f32 %v6235, 0.1
  %v6364 = vmul.f32 %v6236, 0.1
  %v6365 = vmul.f32 %v6237, 0.1
  %v6366 = vmul.f32 %v6238, 0.1
  %v6367 = vmul.f32 %v6239, 0.1
  %v6368 = vmul.f32 %v6240, 0.1
  %v6369 = vmul.f32 %v6241, 0.1
  %v6370 = vmul.f32 %v6242, 0.1
  %v6371 = vmul.f32 %v6243, 0.1
  %v6372 = vmul.f32 %v6244, 0.1
  %v6373 = vmul.f32 %v6245, 0.1
  %v6374 = vmul.f32 %v6246, 0.1
  %v6375 = vmul.f32 %v6247, 0.1
  %v6376 = vmul.f32 %v6248, 0.1
  %v6377 = vmul.f32 %v6249, 0.1
  %v6378 = vmul.f32 %v6250, 0.1
  %v6379 = vmul.f32 %v6251, 0.1
  %v6380 = vmul.f32 %v6252, 0.1
  %v6381 = vmul.f32 %v6253, 0.1
  %v6382 = vsel %vm6254, %v6190, %v6318
  %v6383 = vsel %vm6255, %v6191, %v6319
  %v6384 = vsel %vm6256, %v6192, %v6320
  %v6385 = vsel %vm6257, %v6193, %v6321
  %v6386 = vsel %vm6258, %v6194, %v6322
  %v6387 = vsel %vm6259, %v6195, %v6323
  %v6388 = vsel %vm6260, %v6196, %v6324
  %v6389 = vsel %vm6261, %v6197, %v6325
  %v6390 = vsel %vm6262, %v6198, %v6326
  %v6391 = vsel %vm6263, %v6199, %v6327
  %v6392 = vsel %vm6264, %v6200, %v6328
  %v6393 = vsel %vm6265, %v6201, %v6329
  %v6394 = vsel %vm6266, %v6202, %v6330
  %v6395 = vsel %vm6267, %v6203, %v6331
  %v6396 = vsel %vm6268, %v6204, %v6332
  %v6397 = vsel %vm6269, %v6205, %v6333
  %v6398 = vsel %vm6270, %v6206, %v6334
  %v6399 = vsel %vm6271, %v6207, %v6335
  %v6400 = vsel %vm6272, %v6208, %v6336
  %v6401 = vsel %vm6273, %v6209, %v6337
  %v6402 = vsel %vm6274, %v6210, %v6338
  %v6403 = vsel %vm6275, %v6211, %v6339
  %v6404 = vsel %vm6276, %v6212, %v6340
  %v6405 = vsel %vm6277, %v6213, %v6341
  %v6406 = vsel %vm6278, %v6214, %v6342
  %v6407 = vsel %vm6279, %v6215, %v6343
  %v6408 = vsel %vm6280, %v6216, %v6344
  %v6409 = vsel %vm6281, %v6217, %v6345
  %v6410 = vsel %vm6282, %v6218, %v6346
  %v6411 = vsel %vm6283, %v6219, %v6347
  %v6412 = vsel %vm6284, %v6220, %v6348
  %v6413 = vsel %vm6285, %v6221, %v6349
  %v6414 = vsel %vm6286, %v6222, %v6350
  %v6415 = vsel %vm6287, %v6223, %v6351
  %v6416 = vsel %vm6288, %v6224, %v6352
  %v6417 = vsel %vm6289, %v6225, %v6353
  %v6418 = vsel %vm6290, %v6226, %v6354
  %v6419 = vsel %vm6291, %v6227, %v6355
  %v6420 = vsel %vm6292, %v6228, %v6356
  %v6421 = vsel %vm6293, %v6229, %v6357
  %v6422 = vsel %vm6294, %v6230, %v6358
  %v6423 = vsel %vm6295, %v6231, %v6359
  %v6424 = vsel %vm6296, %v6232, %v6360
  %v6425 = vsel %vm6297, %v6233, %v6361
  %v6426 = vsel %vm6298, %v6234, %v6362
  %v6427 = vsel %vm6299, %v6235, %v6363
  %v6428 = vsel %vm6300, %v6236, %v6364
  %v6429 = vsel %vm6301, %v6237, %v6365
  %v6430 = vsel %vm6302, %v6238, %v6366
  %v6431 = vsel %vm6303, %v6239, %v6367
  %v6432 = vsel %vm6304, %v6240, %v6368
  %v6433 = vsel %vm6305, %v6241, %v6369
  %v6434 = vsel %vm6306, %v6242, %v6370
  %v6435 = vsel %vm6307, %v6243, %v6371
  %v6436 = vsel %vm6308, %v6244, %v6372
  %v6437 = vsel %vm6309, %v6245, %v6373
  %v6438 = vsel %vm6310, %v6246, %v6374
  %v6439 = vsel %vm6311, %v6247, %v6375
  %v6440 = vsel %vm6312, %v6248, %v6376
  %v6441 = vsel %vm6313, %v6249, %v6377
  %v6442 = vsel %vm6314, %v6250, %v6378
  %v6443 = vsel %vm6315, %v6251, %v6379
  %v6444 = vsel %vm6316, %v6252, %v6380
  %v6445 = vsel %vm6317, %v6253, %v6381
  %v6446 = vadd.f32 %v263, %v6382
  %v6447 = vadd.f32 %v264, %v6383
  %v6448 = vadd.f32 %v265, %v6384
  %v6449 = vadd.f32 %v266, %v6385
  %v6450 = vadd.f32 %v267, %v6386
  %v6451 = vadd.f32 %v268, %v6387
  %v6452 = vadd.f32 %v269, %v6388
  %v6453 = vadd.f32 %v270, %v6389
  %v6454 = vadd.f32 %v271, %v6390
  %v6455 = vadd.f32 %v272, %v6391
  %v6456 = vadd.f32 %v273, %v6392
  %v6457 = vadd.f32 %v274, %v6393
  %v6458 = vadd.f32 %v275, %v6394
  %v6459 = vadd.f32 %v276, %v6395
  %v6460 = vadd.f32 %v277, %v6396
  %v6461 = vadd.f32 %v278, %v6397
  %v6462 = vadd.f32 %v279, %v6398
  %v6463 = vadd.f32 %v280, %v6399
  %v6464 = vadd.f32 %v281, %v6400
  %v6465 = vadd.f32 %v282, %v6401
  %v6466 = vadd.f32 %v283, %v6402
  %v6467 = vadd.f32 %v284, %v6403
  %v6468 = vadd.f32 %v285, %v6404
  %v6469 = vadd.f32 %v286, %v6405
  %v6470 = vadd.f32 %v287, %v6406
  %v6471 = vadd.f32 %v288, %v6407
  %v6472 = vadd.f32 %v289, %v6408
  %v6473 = vadd.f32 %v290, %v6409
  %v6474 = vadd.f32 %v291, %v6410
  %v6475 = vadd.f32 %v292, %v6411
  %v6476 = vadd.f32 %v293, %v6412
  %v6477 = vadd.f32 %v294, %v6413
  %v6478 = vadd.f32 %v295, %v6414
  %v6479 = vadd.f32 %v296, %v6415
  %v6480 = vadd.f32 %v297, %v6416
  %v6481 = vadd.f32 %v298, %v6417
  %v6482 = vadd.f32 %v299, %v6418
  %v6483 = vadd.f32 %v300, %v6419
  %v6484 = vadd.f32 %v301, %v6420
  %v6485 = vadd.f32 %v302, %v6421
  %v6486 = vadd.f32 %v303, %v6422
  %v6487 = vadd.f32 %v304, %v6423
  %v6488 = vadd.f32 %v305, %v6424
  %v6489 = vadd.f32 %v306, %v6425
  %v6490 = vadd.f32 %v307, %v6426
  %v6491 = vadd.f32 %v308, %v6427
  %v6492 = vadd.f32 %v309, %v6428
  %v6493 = vadd.f32 %v310, %v6429
  %v6494 = vadd.f32 %v311, %v6430
  %v6495 = vadd.f32 %v312, %v6431
  %v6496 = vadd.f32 %v313, %v6432
  %v6497 = vadd.f32 %v314, %v6433
  %v6498 = vadd.f32 %v315, %v6434
  %v6499 = vadd.f32 %v316, %v6435
  %v6500 = vadd.f32 %v317, %v6436
  %v6501 = vadd.f32 %v318, %v6437
  %v6502 = vadd.f32 %v319, %v6438
  %v6503 = vadd.f32 %v320, %v6439
  %v6504 = vadd.f32 %v321, %v6440
  %v6505 = vadd.f32 %v322, %v6441
  %v6506 = vadd.f32 %v323, %v6442
  %v6507 = vadd.f32 %v324, %v6443
  %v6508 = vadd.f32 %v325, %v6444
  %v6509 = vadd.f32 %v326, %v6445
  %6510 = vst.msk [vmem:[%s7] sm:$0xff] %vm375, %v6446
  %6511 = vst.msk [vmem:[%s7 + $0x8] sm:$0xff] %vm375, %v6447
  %6512 = vst.msk [vmem:[%s7 + $0x10] sm:$0xff] %vm375, %v6448
  %6513 = vst.msk [vmem:[%s7 + $0x18] sm:$0xff] %vm375, %v6449
  %6514 = vst.msk [vmem:[%s7 + $0x20] sm:$0xff] %vm375, %v6450
  %6515 = vst.msk [vmem:[%s7 + $0x28] sm:$0xff] %vm375, %v6451
  %6516 = vst.msk [vmem:[%s7 + $0x30] sm:$0xff] %vm375, %v6452
  %6517 = vst.msk [vmem:[%s7 + $0x38] sm:$0xff] %vm375, %v6453
  %6518 = vst.msk [vmem:[%s7 + $0x40] sm:$0xff] %vm375, %v6454
  %6519 = vst.msk [vmem:[%s7 + $0x48] sm:$0xff] %vm375, %v6455
  %6520 = vst.msk [vmem:[%s7 + $0x50] sm:$0xff] %vm375, %v6456
  %6521 = vst.msk [vmem:[%s7 + $0x58] sm:$0xff] %vm375, %v6457
  %6522 = vst.msk [vmem:[%s7 + $0x60] sm:$0xff] %vm375, %v6458
  %6523 = vst.msk [vmem:[%s7 + $0x68] sm:$0xff] %vm375, %v6459
  %6524 = vst.msk [vmem:[%s7 + $0x70] sm:$0xff] %vm375, %v6460
  %6525 = vst.msk [vmem:[%s7 + $0x78] sm:$0xff] %vm375, %v6461
  %6526 = vst.msk [vmem:[%s7 + $0x80] sm:$0xff] %vm375, %v6462
  %6527 = vst.msk [vmem:[%s7 + $0x88] sm:$0xff] %vm375, %v6463
  %6528 = vst.msk [vmem:[%s7 + $0x90] sm:$0xff] %vm375, %v6464
  %6529 = vst.msk [vmem:[%s7 + $0x98] sm:$0xff] %vm375, %v6465
  %6530 = vst.msk [vmem:[%s7 + $0xa0] sm:$0xff] %vm375, %v6466
  %6531 = vst.msk [vmem:[%s7 + $0xa8] sm:$0xff] %vm375, %v6467
  %6532 = vst.msk [vmem:[%s7 + $0xb0] sm:$0xff] %vm375, %v6468
  %6533 = vst.msk [vmem:[%s7 + $0xb8] sm:$0xff] %vm375, %v6469
  %6534 = vst.msk [vmem:[%s7 + $0xc0] sm:$0xff] %vm375, %v6470
  %6535 = vst.msk [vmem:[%s7 + $0xc8] sm:$0xff] %vm375, %v6471
  %6536 = vst.msk [vmem:[%s7 + $0xd0] sm:$0xff] %vm375, %v6472
  %6537 = vst.msk [vmem:[%s7 + $0xd8] sm:$0xff] %vm375, %v6473
  %6538 = vst.msk [vmem:[%s7 + $0xe0] sm:$0xff] %vm375, %v6474
  %6539 = vst.msk [vmem:[%s7 + $0xe8] sm:$0xff] %vm375, %v6475
  %6540 = vst.msk [vmem:[%s7 + $0xf0] sm:$0xff] %vm375, %v6476
  %6541 = vst.msk [vmem:[%s7 + $0xf8] sm:$0xff] %vm375, %v6477
  %6542 = vst.msk [vmem:[%s7 + $0x100] sm:$0xff] %vm375, %v6478
  %6543 = vst.msk [vmem:[%s7 + $0x108] sm:$0xff] %vm375, %v6479
  %6544 = vst.msk [vmem:[%s7 + $0x110] sm:$0xff] %vm375, %v6480
  %6545 = vst.msk [vmem:[%s7 + $0x118] sm:$0xff] %vm375, %v6481
  %6546 = vst.msk [vmem:[%s7 + $0x120] sm:$0xff] %vm375, %v6482
  %6547 = vst.msk [vmem:[%s7 + $0x128] sm:$0xff] %vm375, %v6483
  %6548 = vst.msk [vmem:[%s7 + $0x130] sm:$0xff] %vm375, %v6484
  %6549 = vst.msk [vmem:[%s7 + $0x138] sm:$0xff] %vm375, %v6485
  %6550 = vst.msk [vmem:[%s7 + $0x140] sm:$0xff] %vm375, %v6486
  %6551 = vst.msk [vmem:[%s7 + $0x148] sm:$0xff] %vm375, %v6487
  %6552 = vst.msk [vmem:[%s7 + $0x150] sm:$0xff] %vm375, %v6488
  %6553 = vst.msk [vmem:[%s7 + $0x158] sm:$0xff] %vm375, %v6489
  %6554 = vst.msk [vmem:[%s7 + $0x160] sm:$0xff] %vm375, %v6490
  %6555 = vst.msk [vmem:[%s7 + $0x168] sm:$0xff] %vm375, %v6491
  %6556 = vst.msk [vmem:[%s7 + $0x170] sm:$0xff] %vm375, %v6492
  %6557 = vst.msk [vmem:[%s7 + $0x178] sm:$0xff] %vm375, %v6493
  %6558 = vst.msk [vmem:[%s7 + $0x180] sm:$0xff] %vm375, %v6494
  %6559 = vst.msk [vmem:[%s7 + $0x188] sm:$0xff] %vm375, %v6495
  %6560 = vst.msk [vmem:[%s7 + $0x190] sm:$0xff] %vm375, %v6496
  %6561 = vst.msk [vmem:[%s7 + $0x198] sm:$0xff] %vm375, %v6497
  %6562 = vst.msk [vmem:[%s7 + $0x1a0] sm:$0xff] %vm375, %v6498
  %6563 = vst.msk [vmem:[%s7 + $0x1a8] sm:$0xff] %vm375, %v6499
  %6564 = vst.msk [vmem:[%s7 + $0x1b0] sm:$0xff] %vm375, %v6500
  %6565 = vst.msk [vmem:[%s7 + $0x1b8] sm:$0xff] %vm375, %v6501
  %6566 = vst.msk [vmem:[%s7 + $0x1c0] sm:$0xff] %vm375, %v6502
  %6567 = vst.msk [vmem:[%s7 + $0x1c8] sm:$0xff] %vm375, %v6503
  %6568 = vst.msk [vmem:[%s7 + $0x1d0] sm:$0xff] %vm375, %v6504
  %6569 = vst.msk [vmem:[%s7 + $0x1d8] sm:$0xff] %vm375, %v6505
  %6570 = vst.msk [vmem:[%s7 + $0x1e0] sm:$0xff] %vm375, %v6506
  %6571 = vst.msk [vmem:[%s7 + $0x1e8] sm:$0xff] %vm375, %v6507
  %6572 = vst.msk [vmem:[%s7 + $0x1f0] sm:$0xff] %vm375, %v6508
  %6573 = vst.msk [vmem:[%s7 + $0x1f8] sm:$0xff] %vm375, %v6509
  // Predicated region
  $region30: #{tpu_custom_call.1} parent=0 // pred_check
    _
  $region31: #{tpu_custom_call.1} parent=0 // pred_check_branch
    %6575 = sbr.rel (0) target = $region33
  $region32: #{tpu_custom_call.1} parent=0 // pred_region
    _
  $region33: #{tpu_custom_call.1} parent=0 // pred_fallthru
    _
  // Predicated region
  $region34: #{tpu_custom_call.1} parent=0 // pred_check
    _
  $region35: #{tpu_custom_call.1} parent=0 // pred_check_branch
    %6577 = sbr.rel (0) target = $region37
  $region36: #{tpu_custom_call.1} parent=0 // pred_region
    _
  $region37: #{tpu_custom_call.1} parent=0 // pred_fallthru
    _

</llo_original>
